<compile_context>
chip_gen: v7x
topology: tpu7x:2x2x1
jax: 0.10.0
libtpu: 0.0.40
codegen_flags: <defaults>
</compile_context>

<pallas_src>
import functools
import math

import jax
import jax.numpy as jnp
from jax import lax
from jax.experimental import pallas as pl
from jax.experimental.pallas import tpu as pltpu

MXU_DTYPE = jnp.bfloat16   # MXU operands; f32 accumulation + f32 epilogue
ACT_DTYPE = jnp.bfloat16   # inter-layer activation storage dtype
M_TILE = 512               # lane-dim tile for the gridded matmul


def _round_up(x, m):
    return ((x + m - 1) // m) * m


# ----------------------------------------------------------------------------
# Pallas kernels
# ----------------------------------------------------------------------------
def _matmul_affine_kernel(w_ref, a_ref, b_ref, *rest, has_affine, pre_relu,
                          relu):
    """o[N, tM] = relu?( (relu?(w @ a + b)) * s + t ); epilogue in f32."""
    if has_affine:
        s_ref, t_ref, o_ref = rest
    else:
        (o_ref,) = rest
    y = jnp.dot(w_ref[...], a_ref[...], preferred_element_type=jnp.float32)
    y = y + b_ref[...]
    if pre_relu:
        y = jnp.maximum(y, 0.0)
    if has_affine:
        y = y * s_ref[...] + t_ref[...]
    if relu:
        y = jnp.maximum(y, 0.0)
    o_ref[...] = y.astype(o_ref.dtype)


def matmul_affine_t(w, a_t, bias, scale=None, shift=None, *, relu=False,
                    pre_relu=False, out_dtype=jnp.float32):
    """Fused transposed matmul: out[N, M] with the long dim M (= B*spatial)
    on lanes.  M is tiled with a real grid marked "parallel" (v7x 2-TC); N/K
    are padded to 16 only (bf16 sublane packing), never to 128.
    w:(N,K), a_t:(K,M), bias/scale/shift:(N,)."""
    N, K = w.shape
    M = a_t.shape[1]
    Np = _round_up(N, 16)
    Kp = _round_up(K, 16)
    if M <= M_TILE:
        tm = _round_up(M, 128)
        Mp = tm
    else:
        tm = M_TILE
        Mp = _round_up(M, tm)

    w_p = jnp.pad(w.astype(MXU_DTYPE), ((0, Np - N), (0, Kp - K)))
    a_p = jnp.pad(a_t.astype(MXU_DTYPE), ((0, Kp - K), (0, Mp - M)))

    def col(v):
        v = v.astype(jnp.float32).reshape(N, 1)
        return jnp.pad(v, ((0, Np - N), (0, 0)))

    has_affine = scale is not None
    args = [w_p, a_p, col(bias)]
    in_specs = [
        pl.BlockSpec((Np, Kp), lambda i: (0, 0)),
        pl.BlockSpec((Kp, tm), lambda i: (0, i)),
        pl.BlockSpec((Np, 1), lambda i: (0, 0)),
    ]
    if has_affine:
        args += [col(scale), col(shift)]
        in_specs += [pl.BlockSpec((Np, 1), lambda i: (0, 0)),
                     pl.BlockSpec((Np, 1), lambda i: (0, 0))]

    out = pl.pallas_call(
        functools.partial(_matmul_affine_kernel, has_affine=has_affine,
                          pre_relu=pre_relu, relu=relu),
        out_shape=jax.ShapeDtypeStruct((Np, Mp), out_dtype),
        grid=(Mp // tm,),
        in_specs=in_specs,
        out_specs=pl.BlockSpec((Np, tm), lambda i: (0, i)),
        compiler_params=pltpu.CompilerParams(
            dimension_semantics=("parallel",)),
    )(*args)
    return out[:N, :M]


def _eca_residual_kernel(x_ref, a_ref, i_ref, *rest, end_bn):
    if end_bn:
        s_ref, t_ref, o_ref = rest
    else:
        (o_ref,) = rest
    gate = jax.nn.sigmoid(a_ref[...])                         # f32
    y = x_ref[...].astype(jnp.float32) * gate + i_ref[...].astype(jnp.float32)
    if end_bn:
        y = jnp.maximum(y * s_ref[...] + t_ref[...], 0.0)
    o_ref[...] = y.astype(o_ref.dtype)


def eca_residual(x, att, identity, scale_row=None, shift_row=None,
                 out_dtype=ACT_DTYPE):
    """out = x * sigmoid(att) + identity, optionally followed by the
    end-block BN+ReLU affine, fused in one elementwise kernel.
    x/identity:(R,L) (bf16 ok); att/scale/shift:(R,1) f32."""
    R, L = x.shape
    end_bn = scale_row is not None
    args = [x, att, identity]
    if end_bn:
        args += [scale_row, shift_row]
    return pl.pallas_call(
        functools.partial(_eca_residual_kernel, end_bn=end_bn),
        out_shape=jax.ShapeDtypeStruct((R, L), out_dtype),
    )(*args)


# ----------------------------------------------------------------------------
# Plain-JAX glue: im2col, BN folding, module structure
# ----------------------------------------------------------------------------
def bn_fold(gamma, beta, eps):
    # Inference-mode BN (running_mean=0, running_var=1) folded to an affine.
    return gamma / jnp.sqrt(1.0 + eps), beta


def conv3d(x, w, b, stride, padding, scale=None, shift=None,
           relu=False, pre_relu=False, out_dtype=ACT_DTYPE):
    """PyTorch-semantics Conv3d on channel-major (Cin, B, D, H, W) input,
    returning (Cout, B, Do, Ho, Wo), via channel-major im2col (no transpose)
    + one fused Pallas matmul.

    Fused epilogue: conv(+bias) -> [ReLU] -> per-channel affine (folded BN)
    -> [ReLU].  When there is no pre-ReLU, the BN scale is folded into the
    weight rows / bias host-side instead of applied in the epilogue.
    """
    Cout, Cin, kd, kh, kw = w.shape
    patches = lax.conv_general_dilated_patches(
        x, (kd, kh, kw), stride,
        [(padding[0], padding[0]), (padding[1], padding[1]),
         (padding[2], padding[2])],
        dimension_numbers=("CNDHW", "OIDHW", "CNDHW"))
    K, B, Do, Ho, Wo = patches.shape
    a_t = patches.reshape(K, B * Do * Ho * Wo)
    wm = w.reshape(Cout, K).astype(jnp.float32)
    bias = jnp.zeros((Cout,), jnp.float32) if b is None else b.astype(jnp.float32)
    if scale is not None and not pre_relu:
        # No ReLU between conv and BN: fold scale into W, shift into bias.
        wm = wm * scale.astype(jnp.float32)[:, None]
        bias = bias * scale.astype(jnp.float32) + shift.astype(jnp.float32)
        scale = shift = None
    y = matmul_affine_t(wm, a_t, bias, scale, shift, relu=relu,
                        pre_relu=pre_relu, out_dtype=out_dtype)
    return y.reshape(Cout, B, Do, Ho, Wo)


def eca_gate_logits(x, w_eca):
    """eca_layer pre-sigmoid logits as (C*B, 1) (channel-major rows).  The
    pool + 3-tap conv are tiny — left in XLA per the perf review."""
    C, B = x.shape[0], x.shape[1]
    pooled = jnp.mean(x.astype(jnp.float32), axis=(2, 3, 4))       # AdaptiveAvgPool3d(1)
    pooled = pooled.T.reshape(B, 1, 1, C)
    att = lax.conv_general_dilated(
        pooled, w_eca, (1, 1), [(1, 1), (1, 1)],
        dimension_numbers=("NCHW", "OIHW", "NCHW"))                # (B, 1, 1, C)
    return att.reshape(B, C).T.reshape(C * B, 1)


def residual_block(X, p, padding, start=False, end=False):
    """X: channel-major (C, B, D, H, W) activation."""
    C, B = X.shape[0], X.shape[1]
    inp = X
    if not start:
        # bn0 + ReLU pre-activation (per-channel affine) stays in XLA where it
        # fuses with the im2col gather of conv1.
        s0, t0 = bn_fold(p["bn0_g"], p["bn0_b"], 1e-5)
        inp = jnp.maximum(
            X.astype(jnp.float32) * s0[:, None, None, None, None]
            + t0[:, None, None, None, None], 0.0)
    # conv1 -> ReLU -> bn1 -> ReLU, fused into one Pallas matmul epilogue.
    s1, t1 = bn_fold(p["bn1_g"], p["bn1_b"], 1e-5)
    out = conv3d(inp, p["w1"], p["b1"], (1, 1, 1), padding,
                 scale=s1, shift=t1, relu=True, pre_relu=True)
    # conv2 (+ bn2 folded into the weights when start_block).
    if start:
        s2, t2 = bn_fold(p["bn2_g"], p["bn2_b"], 1e-5)
        out = conv3d(out, p["w2"], p["b2"], (1, 1, 1), padding,
                     scale=s2, shift=t2)
    else:
        out = conv3d(out, p["w2"], p["b2"], (1, 1, 1), padding)
    # ECA gate + residual add (+ end-block bn2+ReLU) in one fused kernel.
    att = eca_gate_logits(out, p["w_eca"])
    L = out.shape[2] * out.shape[3] * out.shape[4]
    x_rows = out.reshape(C * B, L)
    id_rows = X.reshape(C * B, L)
    if end:
        s2, t2 = bn_fold(p["bn2_g"], p["bn2_b"], 1e-5)
        s_row = jnp.broadcast_to(s2[:, None], (C, B)).reshape(C * B, 1)
        t_row = jnp.broadcast_to(t2[:, None], (C, B)).reshape(C * B, 1)
        y = eca_residual(x_rows, att, id_rows, s_row, t_row)
    else:
        y = eca_residual(x_rows, att, id_rows)
    return y.reshape(out.shape)


def s3kai_resnet_forward(X, params):
    p = params
    PK = p["w_3x3"].shape[0]
    red = p["w_se"].shape[0]

    # External input is PyTorch NCDHW; all internal activations are carried
    # channel-major (C, B, D, H, W) so there are no per-layer layout round
    # trips between the lane-dense matmul outputs and the next im2col.
    Xc = jnp.transpose(X, (1, 0, 2, 3, 4))                         # (1, B, 7, 7, band)

    # Stem: embed the 1x1x7 conv in the 3x3x7 footprint (centre tap) and stack
    # Cout 8 -> 16 so both branches come out of ONE fused matmul (+BN+ReLU).
    w3 = p["w_3x3"]
    w1 = jnp.zeros_like(w3).at[:, :, 1, 1, :].set(p["w_1x1"][:, :, 0, 0, :])
    w_stem = jnp.concatenate([w3, w1], axis=0)                     # (2*PK, 1, 3, 3, 7)
    b_stem = jnp.concatenate([p["b_3x3"], p["b_1x1"]])
    s3, t3 = bn_fold(p["bn3x3_g"], p["bn3x3_b"], 1e-3)
    s1, t1 = bn_fold(p["bn1x1_g"], p["bn1x1_b"], 1e-3)
    y = conv3d(Xc, w_stem, b_stem, (1, 1, 2), (1, 1, 0),
               scale=jnp.concatenate([s3, s1]),
               shift=jnp.concatenate([t3, t1]),
               relu=True, out_dtype=jnp.float32)                   # (2*PK, B, 7, 7, 6)
    x_3x3, x_1x1 = y[:PK], y[PK:]

    # SK attention branch (tiny, XLA).  Both branch logits are conv_ex(Z), so
    # the softmax is exactly 0.5/0.5; kept for faithfulness to the module.
    U = x_3x3 + x_1x1
    S = jnp.mean(U, axis=(2, 3, 4)).T                              # (B, PK)
    Z = jax.nn.relu(S @ p["w_se"].reshape(red, PK).T + p["b_se"])
    EZ = Z @ p["w_ex"].reshape(PK, red).T + p["b_ex"]
    av = jax.nn.softmax(jnp.stack([EZ, EZ], axis=1), axis=1)       # (B, 2, PK)
    a0 = av[:, 0, :].T[:, :, None, None, None]                     # (PK, B, 1, 1, 1)
    a1 = av[:, 1, :].T[:, :, None, None, None]
    V = (x_3x3 * a0 + x_1x1 * a1).astype(ACT_DTYPE)

    x2 = residual_block(V, p["res1"], (0, 0, 3), start=True)
    x2 = residual_block(x2, p["res2"], (0, 0, 3))

    s, t = bn_fold(p["bn2_g"], p["bn2_b"], 1e-3)
    x2 = conv3d(x2, p["w_c2"], p["b_c2"], (1, 1, 1), (0, 0, 0),
                scale=s, shift=t, relu=True)                       # (128, B, 7, 7, 1)
    # The model's permute(0,4,2,3,1): spectral length <-> channel swap.
    x2 = jnp.transpose(x2, (4, 1, 2, 3, 0))                        # (1, B, 7, 7, 128)
    s, t = bn_fold(p["bn3_g"], p["bn3_b"], 1e-3)
    x2 = conv3d(x2, p["w_c3"], p["b_c3"], (1, 1, 1), (0, 0, 0),
                scale=s, shift=t, relu=True)                       # (PK, B, 5, 5, 1)

    x3 = residual_block(x2, p["res3"], (1, 1, 0))
    x3 = residual_block(x3, p["res4"], (1, 1, 0), end=True)

    # AvgPool3d(kernel=(5,5,1)) then flatten.  (Spatial dims here are 5x5x1.)
    C, B, Dh, Dw, Dt = x3.shape
    x4 = x3.astype(jnp.float32).reshape(
        C, B, Dh // 5, 5, Dw // 5, 5, Dt).mean(axis=(3, 5))
    x4 = jnp.transpose(x4.reshape(C, B, -1), (1, 0, 2)).reshape(B, -1)

    # Final Linear: M = batch — plain XLA matmul per perf review.
    return x4 @ p["w_fc"].T + p["b_fc"]


# ----------------------------------------------------------------------------
# Deterministic parameter construction
# ----------------------------------------------------------------------------
def init_params(key, band, classes, reduction, pk, spec_dim=7):
    keys = iter(jax.random.split(key, 128))

    def w(shape, s=0.1):
        return s * jax.random.normal(next(keys), shape, jnp.float32)

    def g(shape):
        return 1.0 + 0.1 * jax.random.normal(next(keys), shape, jnp.float32)

    kernel_3d = math.ceil((band - (spec_dim - 1)) / 2)

    def res_params(k):
        return dict(
            w1=w((pk, pk) + k), b1=w((pk,)),
            w2=w((pk, pk) + k), b2=w((pk,)),
            bn0_g=g((pk,)), bn0_b=w((pk,)),
            bn1_g=g((pk,)), bn1_b=w((pk,)),
            bn2_g=g((pk,)), bn2_b=w((pk,)),
            w_eca=w((1, 1, 3, 3)),
        )

    return dict(
        w_1x1=w((pk, 1, 1, 1, spec_dim)), b_1x1=w((pk,)),
        bn1x1_g=g((pk,)), bn1x1_b=w((pk,)),
        w_3x3=w((pk, 1, 3, 3, spec_dim)), b_3x3=w((pk,)),
        bn3x3_g=g((pk,)), bn3x3_b=w((pk,)),
        w_se=w((band // reduction, pk, 1, 1, 1)), b_se=w((band // reduction,)),
        w_ex=w((pk, band // reduction, 1, 1, 1)), b_ex=w((pk,)),
        res1=res_params((1, 1, spec_dim)),
        res2=res_params((1, 1, spec_dim)),
        res3=res_params((3, 3, 1)),
        res4=res_params((3, 3, 1)),
        w_c2=w((128, pk, 1, 1, kernel_3d)), b_c2=w((128,)),
        bn2_g=g((128,)), bn2_b=w((128,)),
        w_c3=w((pk, 1, 3, 3, 128)), b_c3=w((pk,)),
        bn3_g=g((pk,)), bn3_b=w((pk,)),
        w_fc=w((classes, pk)), b_fc=w((classes,)),
    )


if __name__ == "__main__":
    BAND, CLASSES, REDUCTION, PK = 17, 10, 2, 8   # PARAM_KERNEL_SIZE = 8
    BATCH, H, W = 8, 7, 7                          # batch of 7x7 patches

    key = jax.random.PRNGKey(0)
    pkey, xkey = jax.random.split(key)
    params = init_params(pkey, BAND, CLASSES, REDUCTION, PK)
    X = jax.random.normal(xkey, (BATCH, 1, H, W, BAND), jnp.float32)

    out = jax.jit(s3kai_resnet_forward)(X, params)
    out = jax.block_until_ready(out)
    assert out.shape == (BATCH, CLASSES)
    print("KERNEL_OK")
</pallas_src>

<mosaic_0001>
module attributes {stable_mosaic.version = 11 : i64} {
  func.func @_matmul_affine_kernel(%arg0: i32, %arg1: memref<16x64xbf16, #tpu.memory_space<vmem>>, %arg2: memref<64x512xbf16, #tpu.memory_space<vmem>>, %arg3: memref<16x1xf32, #tpu.memory_space<vmem>>, %arg4: memref<16x512xf32, #tpu.memory_space<vmem>>) attributes {dimension_semantics = [#tpu.dimension_semantics<parallel>], iteration_bounds = array<i64: 5>, scalar_prefetch = 0 : i64, scratch_operands = 0 : i64, tpu.core_type = #tpu.core_type<tc>, window_params = [{pipeline_mode = #tpu.pipeline_mode<synchronous>, transform_indices = @transform_0, window_bounds = array<i64: 16, 64>}, {transform_indices = @transform_1, window_bounds = array<i64: 64, 512>}, {pipeline_mode = #tpu.pipeline_mode<synchronous>, transform_indices = @transform_2, window_bounds = array<i64: 16, 1>}, {transform_indices = @transform_3, window_bounds = array<i64: 16, 512>}]} {
    %c0 = arith.constant 0 : index
    %c0_0 = arith.constant 0 : index
    %0 = vector.load %arg1[%c0, %c0_0] : memref<16x64xbf16, #tpu.memory_space<vmem>>, vector<16x64xbf16>
    %c0_1 = arith.constant 0 : index
    %c0_2 = arith.constant 0 : index
    %1 = vector.load %arg2[%c0_1, %c0_2] : memref<64x512xbf16, #tpu.memory_space<vmem>>, vector<64x512xbf16>
    %cst = arith.constant dense<0.000000e+00> : vector<16x512xf32>
    %2 = tpu.matmul %0, %1, %cst {dimension_numbers = #tpu.dot_dimension_numbers<[1], [0], [0], [1], [0, 0, 1, 1], [], []>} : vector<16x64xbf16>, vector<64x512xbf16>, vector<16x512xf32> -> vector<16x512xf32>
    %c0_3 = arith.constant 0 : index
    %c0_4 = arith.constant 0 : index
    %3 = vector.load %arg3[%c0_3, %c0_4] : memref<16x1xf32, #tpu.memory_space<vmem>>, vector<16x1xf32>
    %4 = vector.broadcast %3 : vector<16x1xf32> to vector<16x512xf32>
    %5 = arith.addf %2, %4 : vector<16x512xf32>
    %cst_5 = arith.constant 0.000000e+00 : f32
    %6 = vector.broadcast %cst_5 : f32 to vector<16x512xf32>
    %7 = arith.maximumf %5, %6 : vector<16x512xf32>
    %c0_6 = arith.constant 0 : index
    %c0_7 = arith.constant 0 : index
    %8 = vector.load %arg4[%c0_6, %c0_7] : memref<16x512xf32, #tpu.memory_space<vmem>>, vector<16x512xf32>
    tpu.vector_store %arg4[%c0_6, %c0_7], %7 {strides = array<i32>} : memref<16x512xf32, #tpu.memory_space<vmem>>, vector<16x512xf32>,
    return
  }
  func.func @transform_0(%arg0: i32) -> (i32, i32) {
    %c0_i32 = arith.constant 0 : i32
    %c0_i32_0 = arith.constant 0 : i32
    %c0_i32_1 = arith.constant 0 : i32
    return %c0_i32, %c0_i32_0 : i32, i32
  }
  func.func @transform_1(%arg0: i32) -> (i32, i32) {
    %c0_i32 = arith.constant 0 : i32
    %c0_i32_0 = arith.constant 0 : i32
    return %c0_i32, %arg0 : i32, i32
  }
  func.func @transform_2(%arg0: i32) -> (i32, i32) {
    %c0_i32 = arith.constant 0 : i32
    %c0_i32_0 = arith.constant 0 : i32
    %c0_i32_1 = arith.constant 0 : i32
    return %c0_i32, %c0_i32_0 : i32, i32
  }
  func.func @transform_3(%arg0: i32) -> (i32, i32) {
    %c0_i32 = arith.constant 0 : i32
    %c0_i32_0 = arith.constant 0 : i32
    return %c0_i32, %arg0 : i32, i32
  }
}

module attributes {stable_mosaic.version = 11 : i64} {
  func.func @_matmul_affine_kernel(%arg0: i32, %arg1: memref<16x64xbf16, #tpu.memory_space<vmem>>, %arg2: memref<64x512xbf16, #tpu.memory_space<vmem>>, %arg3: memref<16x1xf32, #tpu.memory_space<vmem>>, %arg4: memref<16x1xf32, #tpu.memory_space<vmem>>, %arg5: memref<16x1xf32, #tpu.memory_space<vmem>>, %arg6: memref<16x512xbf16, #tpu.memory_space<vmem>>) attributes {dimension_semantics = [#tpu.dimension_semantics<parallel>], iteration_bounds = array<i64: 5>, scalar_prefetch = 0 : i64, scratch_operands = 0 : i64, tpu.core_type = #tpu.core_type<tc>, window_params = [{pipeline_mode = #tpu.pipeline_mode<synchronous>, transform_indices = @transform_0, window_bounds = array<i64: 16, 64>}, {transform_indices = @transform_1, window_bounds = array<i64: 64, 512>}, {pipeline_mode = #tpu.pipeline_mode<synchronous>, transform_indices = @transform_2, window_bounds = array<i64: 16, 1>}, {pipeline_mode = #tpu.pipeline_mode<synchronous>, transform_indices = @transform_3, window_bounds = array<i64: 16, 1>}, {pipeline_mode = #tpu.pipeline_mode<synchronous>, transform_indices = @transform_4, window_bounds = array<i64: 16, 1>}, {transform_indices = @transform_5, window_bounds = array<i64: 16, 512>}]} {
    %c0 = arith.constant 0 : index
    %c0_0 = arith.constant 0 : index
    %0 = vector.load %arg1[%c0, %c0_0] : memref<16x64xbf16, #tpu.memory_space<vmem>>, vector<16x64xbf16>
    %c0_1 = arith.constant 0 : index
    %c0_2 = arith.constant 0 : index
    %1 = vector.load %arg2[%c0_1, %c0_2] : memref<64x512xbf16, #tpu.memory_space<vmem>>, vector<64x512xbf16>
    %cst = arith.constant dense<0.000000e+00> : vector<16x512xf32>
    %2 = tpu.matmul %0, %1, %cst {dimension_numbers = #tpu.dot_dimension_numbers<[1], [0], [0], [1], [0, 0, 1, 1], [], []>} : vector<16x64xbf16>, vector<64x512xbf16>, vector<16x512xf32> -> vector<16x512xf32>
    %c0_3 = arith.constant 0 : index
    %c0_4 = arith.constant 0 : index
    %3 = vector.load %arg3[%c0_3, %c0_4] : memref<16x1xf32, #tpu.memory_space<vmem>>, vector<16x1xf32>
    %4 = vector.broadcast %3 : vector<16x1xf32> to vector<16x512xf32>
    %5 = arith.addf %2, %4 : vector<16x512xf32>
    %cst_5 = arith.constant 0.000000e+00 : f32
    %6 = vector.broadcast %cst_5 : f32 to vector<16x512xf32>
    %7 = arith.maximumf %5, %6 : vector<16x512xf32>
    %c0_6 = arith.constant 0 : index
    %c0_7 = arith.constant 0 : index
    %8 = vector.load %arg4[%c0_6, %c0_7] : memref<16x1xf32, #tpu.memory_space<vmem>>, vector<16x1xf32>
    %9 = vector.broadcast %8 : vector<16x1xf32> to vector<16x512xf32>
    %10 = arith.mulf %7, %9 : vector<16x512xf32>
    %c0_8 = arith.constant 0 : index
    %c0_9 = arith.constant 0 : index
    %11 = vector.load %arg5[%c0_8, %c0_9] : memref<16x1xf32, #tpu.memory_space<vmem>>, vector<16x1xf32>
    %12 = vector.broadcast %11 : vector<16x1xf32> to vector<16x512xf32>
    %13 = arith.addf %10, %12 : vector<16x512xf32>
    %cst_10 = arith.constant 0.000000e+00 : f32
    %14 = vector.broadcast %cst_10 : f32 to vector<16x512xf32>
    %15 = arith.maximumf %13, %14 : vector<16x512xf32>
    %16 = arith.truncf %15 : vector<16x512xf32> to vector<16x512xbf16>
    %c0_11 = arith.constant 0 : index
    %c0_12 = arith.constant 0 : index
    %17 = vector.load %arg6[%c0_11, %c0_12] : memref<16x512xbf16, #tpu.memory_space<vmem>>, vector<16x512xbf16>
    tpu.vector_store %arg6[%c0_11, %c0_12], %16 {strides = array<i32>} : memref<16x512xbf16, #tpu.memory_space<vmem>>, vector<16x512xbf16>,
    return
  }
  func.func @transform_0(%arg0: i32) -> (i32, i32) {
    %c0_i32 = arith.constant 0 : i32
    %c0_i32_0 = arith.constant 0 : i32
    %c0_i32_1 = arith.constant 0 : i32
    return %c0_i32, %c0_i32_0 : i32, i32
  }
  func.func @transform_1(%arg0: i32) -> (i32, i32) {
    %c0_i32 = arith.constant 0 : i32
    %c0_i32_0 = arith.constant 0 : i32
    return %c0_i32, %arg0 : i32, i32
  }
  func.func @transform_2(%arg0: i32) -> (i32, i32) {
    %c0_i32 = arith.constant 0 : i32
    %c0_i32_0 = arith.constant 0 : i32
    %c0_i32_1 = arith.constant 0 : i32
    return %c0_i32, %c0_i32_0 : i32, i32
  }
  func.func @transform_3(%arg0: i32) -> (i32, i32) {
    %c0_i32 = arith.constant 0 : i32
    %c0_i32_0 = arith.constant 0 : i32
    %c0_i32_1 = arith.constant 0 : i32
    return %c0_i32, %c0_i32_0 : i32, i32
  }
  func.func @transform_4(%arg0: i32) -> (i32, i32) {
    %c0_i32 = arith.constant 0 : i32
    %c0_i32_0 = arith.constant 0 : i32
    %c0_i32_1 = arith.constant 0 : i32
    return %c0_i32, %c0_i32_0 : i32, i32
  }
  func.func @transform_5(%arg0: i32) -> (i32, i32) {
    %c0_i32 = arith.constant 0 : i32
    %c0_i32_0 = arith.constant 0 : i32
    return %c0_i32, %arg0 : i32, i32
  }
}

module attributes {stable_mosaic.version = 11 : i64} {
  func.func @_matmul_affine_kernel(%arg0: i32, %arg1: memref<16x64xbf16, #tpu.memory_space<vmem>>, %arg2: memref<64x512xbf16, #tpu.memory_space<vmem>>, %arg3: memref<16x1xf32, #tpu.memory_space<vmem>>, %arg4: memref<16x512xbf16, #tpu.memory_space<vmem>>) attributes {dimension_semantics = [#tpu.dimension_semantics<parallel>], iteration_bounds = array<i64: 5>, scalar_prefetch = 0 : i64, scratch_operands = 0 : i64, tpu.core_type = #tpu.core_type<tc>, window_params = [{pipeline_mode = #tpu.pipeline_mode<synchronous>, transform_indices = @transform_0, window_bounds = array<i64: 16, 64>}, {transform_indices = @transform_1, window_bounds = array<i64: 64, 512>}, {pipeline_mode = #tpu.pipeline_mode<synchronous>, transform_indices = @transform_2, window_bounds = array<i64: 16, 1>}, {transform_indices = @transform_3, window_bounds = array<i64: 16, 512>}]} {
    %c0 = arith.constant 0 : index
    %c0_0 = arith.constant 0 : index
    %0 = vector.load %arg1[%c0, %c0_0] : memref<16x64xbf16, #tpu.memory_space<vmem>>, vector<16x64xbf16>
    %c0_1 = arith.constant 0 : index
    %c0_2 = arith.constant 0 : index
    %1 = vector.load %arg2[%c0_1, %c0_2] : memref<64x512xbf16, #tpu.memory_space<vmem>>, vector<64x512xbf16>
    %cst = arith.constant dense<0.000000e+00> : vector<16x512xf32>
    %2 = tpu.matmul %0, %1, %cst {dimension_numbers = #tpu.dot_dimension_numbers<[1], [0], [0], [1], [0, 0, 1, 1], [], []>} : vector<16x64xbf16>, vector<64x512xbf16>, vector<16x512xf32> -> vector<16x512xf32>
    %c0_3 = arith.constant 0 : index
    %c0_4 = arith.constant 0 : index
    %3 = vector.load %arg3[%c0_3, %c0_4] : memref<16x1xf32, #tpu.memory_space<vmem>>, vector<16x1xf32>
    %4 = vector.broadcast %3 : vector<16x1xf32> to vector<16x512xf32>
    %5 = arith.addf %2, %4 : vector<16x512xf32>
    %6 = arith.truncf %5 : vector<16x512xf32> to vector<16x512xbf16>
    %c0_5 = arith.constant 0 : index
    %c0_6 = arith.constant 0 : index
    %7 = vector.load %arg4[%c0_5, %c0_6] : memref<16x512xbf16, #tpu.memory_space<vmem>>, vector<16x512xbf16>
    tpu.vector_store %arg4[%c0_5, %c0_6], %6 {strides = array<i32>} : memref<16x512xbf16, #tpu.memory_space<vmem>>, vector<16x512xbf16>,
    return
  }
  func.func @transform_0(%arg0: i32) -> (i32, i32) {
    %c0_i32 = arith.constant 0 : i32
    %c0_i32_0 = arith.constant 0 : i32
    %c0_i32_1 = arith.constant 0 : i32
    return %c0_i32, %c0_i32_0 : i32, i32
  }
  func.func @transform_1(%arg0: i32) -> (i32, i32) {
    %c0_i32 = arith.constant 0 : i32
    %c0_i32_0 = arith.constant 0 : i32
    return %c0_i32, %arg0 : i32, i32
  }
  func.func @transform_2(%arg0: i32) -> (i32, i32) {
    %c0_i32 = arith.constant 0 : i32
    %c0_i32_0 = arith.constant 0 : i32
    %c0_i32_1 = arith.constant 0 : i32
    return %c0_i32, %c0_i32_0 : i32, i32
  }
  func.func @transform_3(%arg0: i32) -> (i32, i32) {
    %c0_i32 = arith.constant 0 : i32
    %c0_i32_0 = arith.constant 0 : i32
    return %c0_i32, %arg0 : i32, i32
  }
}

module attributes {stable_mosaic.version = 11 : i64} {
  func.func @_eca_residual_kernel(%arg0: memref<64x294xbf16, #tpu.memory_space<vmem>>, %arg1: memref<64x1xf32, #tpu.memory_space<vmem>>, %arg2: memref<64x294xbf16, #tpu.memory_space<vmem>>, %arg3: memref<64x294xbf16, #tpu.memory_space<vmem>>) attributes {dimension_semantics = [], scalar_prefetch = 0 : i64, scratch_operands = 0 : i64, tpu.core_type = #tpu.core_type<tc>} {
    %c0 = arith.constant 0 : index
    %c0_0 = arith.constant 0 : index
    %0 = vector.load %arg1[%c0, %c0_0] : memref<64x1xf32, #tpu.memory_space<vmem>>, vector<64x1xf32>
    %1 = arith.negf %0 : vector<64x1xf32>
    %2 = math.exp %1 : vector<64x1xf32>
    %cst = arith.constant 1.000000e+00 : f32
    %3 = vector.broadcast %cst : f32 to vector<64x1xf32>
    %4 = arith.addf %3, %2 : vector<64x1xf32>
    %5 = arith.divf %3, %4 : vector<64x1xf32>
    %c0_1 = arith.constant 0 : index
    %c0_2 = arith.constant 0 : index
    %6 = vector.load %arg0[%c0_1, %c0_2] : memref<64x294xbf16, #tpu.memory_space<vmem>>, vector<64x294xbf16>
    %7 = arith.extf %6 : vector<64x294xbf16> to vector<64x294xf32>
    %8 = vector.broadcast %5 : vector<64x1xf32> to vector<64x294xf32>
    %9 = arith.mulf %7, %8 : vector<64x294xf32>
    %c0_3 = arith.constant 0 : index
    %c0_4 = arith.constant 0 : index
    %10 = vector.load %arg2[%c0_3, %c0_4] : memref<64x294xbf16, #tpu.memory_space<vmem>>, vector<64x294xbf16>
    %11 = arith.extf %10 : vector<64x294xbf16> to vector<64x294xf32>
    %12 = arith.addf %9, %11 : vector<64x294xf32>
    %13 = arith.truncf %12 : vector<64x294xf32> to vector<64x294xbf16>
    %c0_5 = arith.constant 0 : index
    %c0_6 = arith.constant 0 : index
    %14 = vector.load %arg3[%c0_5, %c0_6] : memref<64x294xbf16, #tpu.memory_space<vmem>>, vector<64x294xbf16>
    tpu.vector_store %arg3[%c0_5, %c0_6], %13 {strides = array<i32>} : memref<64x294xbf16, #tpu.memory_space<vmem>>, vector<64x294xbf16>,
    return
  }
}

module attributes {stable_mosaic.version = 11 : i64} {
  func.func @_matmul_affine_kernel(%arg0: i32, %arg1: memref<128x48xbf16, #tpu.memory_space<vmem>>, %arg2: memref<48x512xbf16, #tpu.memory_space<vmem>>, %arg3: memref<128x1xf32, #tpu.memory_space<vmem>>, %arg4: memref<128x512xbf16, #tpu.memory_space<vmem>>) attributes {dimension_semantics = [#tpu.dimension_semantics<parallel>], iteration_bounds = array<i64: 1>, scalar_prefetch = 0 : i64, scratch_operands = 0 : i64, tpu.core_type = #tpu.core_type<tc>, window_params = [{pipeline_mode = #tpu.pipeline_mode<synchronous>, transform_indices = @transform_0, window_bounds = array<i64: 128, 48>}, {transform_indices = @transform_1, window_bounds = array<i64: 48, 512>}, {pipeline_mode = #tpu.pipeline_mode<synchronous>, transform_indices = @transform_2, window_bounds = array<i64: 128, 1>}, {transform_indices = @transform_3, window_bounds = array<i64: 128, 512>}]} {
    %c0 = arith.constant 0 : index
    %c0_0 = arith.constant 0 : index
    %0 = vector.load %arg1[%c0, %c0_0] : memref<128x48xbf16, #tpu.memory_space<vmem>>, vector<128x48xbf16>
    %c0_1 = arith.constant 0 : index
    %c0_2 = arith.constant 0 : index
    %1 = vector.load %arg2[%c0_1, %c0_2] : memref<48x512xbf16, #tpu.memory_space<vmem>>, vector<48x512xbf16>
    %cst = arith.constant dense<0.000000e+00> : vector<128x512xf32>
    %2 = tpu.matmul %0, %1, %cst {dimension_numbers = #tpu.dot_dimension_numbers<[1], [0], [0], [1], [0, 0, 1, 1], [], []>} : vector<128x48xbf16>, vector<48x512xbf16>, vector<128x512xf32> -> vector<128x512xf32>
    %c0_3 = arith.constant 0 : index
    %c0_4 = arith.constant 0 : index
    %3 = vector.load %arg3[%c0_3, %c0_4] : memref<128x1xf32, #tpu.memory_space<vmem>>, vector<128x1xf32>
    %4 = vector.broadcast %3 : vector<128x1xf32> to vector<128x512xf32>
    %5 = arith.addf %2, %4 : vector<128x512xf32>
    %cst_5 = arith.constant 0.000000e+00 : f32
    %6 = vector.broadcast %cst_5 : f32 to vector<128x512xf32>
    %7 = arith.maximumf %5, %6 : vector<128x512xf32>
    %8 = arith.truncf %7 : vector<128x512xf32> to vector<128x512xbf16>
    %c0_6 = arith.constant 0 : index
    %c0_7 = arith.constant 0 : index
    %9 = vector.load %arg4[%c0_6, %c0_7] : memref<128x512xbf16, #tpu.memory_space<vmem>>, vector<128x512xbf16>
    tpu.vector_store %arg4[%c0_6, %c0_7], %8 {strides = array<i32>} : memref<128x512xbf16, #tpu.memory_space<vmem>>, vector<128x512xbf16>,
    return
  }
  func.func @transform_0(%arg0: i32) -> (i32, i32) {
    %c0_i32 = arith.constant 0 : i32
    %c0_i32_0 = arith.constant 0 : i32
    %c0_i32_1 = arith.constant 0 : i32
    return %c0_i32, %c0_i32_0 : i32, i32
  }
  func.func @transform_1(%arg0: i32) -> (i32, i32) {
    %c0_i32 = arith.constant 0 : i32
    %c0_i32_0 = arith.constant 0 : i32
    return %c0_i32, %arg0 : i32, i32
  }
  func.func @transform_2(%arg0: i32) -> (i32, i32) {
    %c0_i32 = arith.constant 0 : i32
    %c0_i32_0 = arith.constant 0 : i32
    %c0_i32_1 = arith.constant 0 : i32
    return %c0_i32, %c0_i32_0 : i32, i32
  }
  func.func @transform_3(%arg0: i32) -> (i32, i32) {
    %c0_i32 = arith.constant 0 : i32
    %c0_i32_0 = arith.constant 0 : i32
    return %c0_i32, %arg0 : i32, i32
  }
}

module attributes {stable_mosaic.version = 11 : i64} {
  func.func @_matmul_affine_kernel(%arg0: i32, %arg1: memref<16x1152xbf16, #tpu.memory_space<vmem>>, %arg2: memref<1152x256xbf16, #tpu.memory_space<vmem>>, %arg3: memref<16x1xf32, #tpu.memory_space<vmem>>, %arg4: memref<16x256xbf16, #tpu.memory_space<vmem>>) attributes {dimension_semantics = [#tpu.dimension_semantics<parallel>], iteration_bounds = array<i64: 1>, scalar_prefetch = 0 : i64, scratch_operands = 0 : i64, tpu.core_type = #tpu.core_type<tc>, window_params = [{pipeline_mode = #tpu.pipeline_mode<synchronous>, transform_indices = @transform_0, window_bounds = array<i64: 16, 1152>}, {transform_indices = @transform_1, window_bounds = array<i64: 1152, 256>}, {pipeline_mode = #tpu.pipeline_mode<synchronous>, transform_indices = @transform_2, window_bounds = array<i64: 16, 1>}, {transform_indices = @transform_3, window_bounds = array<i64: 16, 256>}]} {
    %c0 = arith.constant 0 : index
    %c0_0 = arith.constant 0 : index
    %0 = vector.load %arg1[%c0, %c0_0] : memref<16x1152xbf16, #tpu.memory_space<vmem>>, vector<16x1152xbf16>
    %c0_1 = arith.constant 0 : index
    %c0_2 = arith.constant 0 : index
    %1 = vector.load %arg2[%c0_1, %c0_2] : memref<1152x256xbf16, #tpu.memory_space<vmem>>, vector<1152x256xbf16>
    %cst = arith.constant dense<0.000000e+00> : vector<16x256xf32>
    %2 = tpu.matmul %0, %1, %cst {dimension_numbers = #tpu.dot_dimension_numbers<[1], [0], [0], [1], [0, 0, 1, 1], [], []>} : vector<16x1152xbf16>, vector<1152x256xbf16>, vector<16x256xf32> -> vector<16x256xf32>
    %c0_3 = arith.constant 0 : index
    %c0_4 = arith.constant 0 : index
    %3 = vector.load %arg3[%c0_3, %c0_4] : memref<16x1xf32, #tpu.memory_space<vmem>>, vector<16x1xf32>
    %4 = vector.broadcast %3 : vector<16x1xf32> to vector<16x256xf32>
    %5 = arith.addf %2, %4 : vector<16x256xf32>
    %cst_5 = arith.constant 0.000000e+00 : f32
    %6 = vector.broadcast %cst_5 : f32 to vector<16x256xf32>
    %7 = arith.maximumf %5, %6 : vector<16x256xf32>
    %8 = arith.truncf %7 : vector<16x256xf32> to vector<16x256xbf16>
    %c0_6 = arith.constant 0 : index
    %c0_7 = arith.constant 0 : index
    %9 = vector.load %arg4[%c0_6, %c0_7] : memref<16x256xbf16, #tpu.memory_space<vmem>>, vector<16x256xbf16>
    tpu.vector_store %arg4[%c0_6, %c0_7], %8 {strides = array<i32>} : memref<16x256xbf16, #tpu.memory_space<vmem>>, vector<16x256xbf16>,
    return
  }
  func.func @transform_0(%arg0: i32) -> (i32, i32) {
    %c0_i32 = arith.constant 0 : i32
    %c0_i32_0 = arith.constant 0 : i32
    %c0_i32_1 = arith.constant 0 : i32
    return %c0_i32, %c0_i32_0 : i32, i32
  }
  func.func @transform_1(%arg0: i32) -> (i32, i32) {
    %c0_i32 = arith.constant 0 : i32
    %c0_i32_0 = arith.constant 0 : i32
    return %c0_i32, %arg0 : i32, i32
  }
  func.func @transform_2(%arg0: i32) -> (i32, i32) {
    %c0_i32 = arith.constant 0 : i32
    %c0_i32_0 = arith.constant 0 : i32
    %c0_i32_1 = arith.constant 0 : i32
    return %c0_i32, %c0_i32_0 : i32, i32
  }
  func.func @transform_3(%arg0: i32) -> (i32, i32) {
    %c0_i32 = arith.constant 0 : i32
    %c0_i32_0 = arith.constant 0 : i32
    return %c0_i32, %arg0 : i32, i32
  }
}

module attributes {stable_mosaic.version = 11 : i64} {
  func.func @_matmul_affine_kernel(%arg0: i32, %arg1: memref<16x80xbf16, #tpu.memory_space<vmem>>, %arg2: memref<80x256xbf16, #tpu.memory_space<vmem>>, %arg3: memref<16x1xf32, #tpu.memory_space<vmem>>, %arg4: memref<16x1xf32, #tpu.memory_space<vmem>>, %arg5: memref<16x1xf32, #tpu.memory_space<vmem>>, %arg6: memref<16x256xbf16, #tpu.memory_space<vmem>>) attributes {dimension_semantics = [#tpu.dimension_semantics<parallel>], iteration_bounds = array<i64: 1>, scalar_prefetch = 0 : i64, scratch_operands = 0 : i64, tpu.core_type = #tpu.core_type<tc>, window_params = [{pipeline_mode = #tpu.pipeline_mode<synchronous>, transform_indices = @transform_0, window_bounds = array<i64: 16, 80>}, {transform_indices = @transform_1, window_bounds = array<i64: 80, 256>}, {pipeline_mode = #tpu.pipeline_mode<synchronous>, transform_indices = @transform_2, window_bounds = array<i64: 16, 1>}, {pipeline_mode = #tpu.pipeline_mode<synchronous>, transform_indices = @transform_3, window_bounds = array<i64: 16, 1>}, {pipeline_mode = #tpu.pipeline_mode<synchronous>, transform_indices = @transform_4, window_bounds = array<i64: 16, 1>}, {transform_indices = @transform_5, window_bounds = array<i64: 16, 256>}]} {
    %c0 = arith.constant 0 : index
    %c0_0 = arith.constant 0 : index
    %0 = vector.load %arg1[%c0, %c0_0] : memref<16x80xbf16, #tpu.memory_space<vmem>>, vector<16x80xbf16>
    %c0_1 = arith.constant 0 : index
    %c0_2 = arith.constant 0 : index
    %1 = vector.load %arg2[%c0_1, %c0_2] : memref<80x256xbf16, #tpu.memory_space<vmem>>, vector<80x256xbf16>
    %cst = arith.constant dense<0.000000e+00> : vector<16x256xf32>
    %2 = tpu.matmul %0, %1, %cst {dimension_numbers = #tpu.dot_dimension_numbers<[1], [0], [0], [1], [0, 0, 1, 1], [], []>} : vector<16x80xbf16>, vector<80x256xbf16>, vector<16x256xf32> -> vector<16x256xf32>
    %c0_3 = arith.constant 0 : index
    %c0_4 = arith.constant 0 : index
    %3 = vector.load %arg3[%c0_3, %c0_4] : memref<16x1xf32, #tpu.memory_space<vmem>>, vector<16x1xf32>
    %4 = vector.broadcast %3 : vector<16x1xf32> to vector<16x256xf32>
    %5 = arith.addf %2, %4 : vector<16x256xf32>
    %cst_5 = arith.constant 0.000000e+00 : f32
    %6 = vector.broadcast %cst_5 : f32 to vector<16x256xf32>
    %7 = arith.maximumf %5, %6 : vector<16x256xf32>
    %c0_6 = arith.constant 0 : index
    %c0_7 = arith.constant 0 : index
    %8 = vector.load %arg4[%c0_6, %c0_7] : memref<16x1xf32, #tpu.memory_space<vmem>>, vector<16x1xf32>
    %9 = vector.broadcast %8 : vector<16x1xf32> to vector<16x256xf32>
    %10 = arith.mulf %7, %9 : vector<16x256xf32>
    %c0_8 = arith.constant 0 : index
    %c0_9 = arith.constant 0 : index
    %11 = vector.load %arg5[%c0_8, %c0_9] : memref<16x1xf32, #tpu.memory_space<vmem>>, vector<16x1xf32>
    %12 = vector.broadcast %11 : vector<16x1xf32> to vector<16x256xf32>
    %13 = arith.addf %10, %12 : vector<16x256xf32>
    %cst_10 = arith.constant 0.000000e+00 : f32
    %14 = vector.broadcast %cst_10 : f32 to vector<16x256xf32>
    %15 = arith.maximumf %13, %14 : vector<16x256xf32>
    %16 = arith.truncf %15 : vector<16x256xf32> to vector<16x256xbf16>
    %c0_11 = arith.constant 0 : index
    %c0_12 = arith.constant 0 : index
    %17 = vector.load %arg6[%c0_11, %c0_12] : memref<16x256xbf16, #tpu.memory_space<vmem>>, vector<16x256xbf16>
    tpu.vector_store %arg6[%c0_11, %c0_12], %16 {strides = array<i32>} : memref<16x256xbf16, #tpu.memory_space<vmem>>, vector<16x256xbf16>,
    return
  }
  func.func @transform_0(%arg0: i32) -> (i32, i32) {
    %c0_i32 = arith.constant 0 : i32
    %c0_i32_0 = arith.constant 0 : i32
    %c0_i32_1 = arith.constant 0 : i32
    return %c0_i32, %c0_i32_0 : i32, i32
  }
  func.func @transform_1(%arg0: i32) -> (i32, i32) {
    %c0_i32 = arith.constant 0 : i32
    %c0_i32_0 = arith.constant 0 : i32
    return %c0_i32, %arg0 : i32, i32
  }
  func.func @transform_2(%arg0: i32) -> (i32, i32) {
    %c0_i32 = arith.constant 0 : i32
    %c0_i32_0 = arith.constant 0 : i32
    %c0_i32_1 = arith.constant 0 : i32
    return %c0_i32, %c0_i32_0 : i32, i32
  }
  func.func @transform_3(%arg0: i32) -> (i32, i32) {
    %c0_i32 = arith.constant 0 : i32
    %c0_i32_0 = arith.constant 0 : i32
    %c0_i32_1 = arith.constant 0 : i32
    return %c0_i32, %c0_i32_0 : i32, i32
  }
  func.func @transform_4(%arg0: i32) -> (i32, i32) {
    %c0_i32 = arith.constant 0 : i32
    %c0_i32_0 = arith.constant 0 : i32
    %c0_i32_1 = arith.constant 0 : i32
    return %c0_i32, %c0_i32_0 : i32, i32
  }
  func.func @transform_5(%arg0: i32) -> (i32, i32) {
    %c0_i32 = arith.constant 0 : i32
    %c0_i32_0 = arith.constant 0 : i32
    return %c0_i32, %arg0 : i32, i32
  }
}

module attributes {stable_mosaic.version = 11 : i64} {
  func.func @_matmul_affine_kernel(%arg0: i32, %arg1: memref<16x80xbf16, #tpu.memory_space<vmem>>, %arg2: memref<80x256xbf16, #tpu.memory_space<vmem>>, %arg3: memref<16x1xf32, #tpu.memory_space<vmem>>, %arg4: memref<16x256xbf16, #tpu.memory_space<vmem>>) attributes {dimension_semantics = [#tpu.dimension_semantics<parallel>], iteration_bounds = array<i64: 1>, scalar_prefetch = 0 : i64, scratch_operands = 0 : i64, tpu.core_type = #tpu.core_type<tc>, window_params = [{pipeline_mode = #tpu.pipeline_mode<synchronous>, transform_indices = @transform_0, window_bounds = array<i64: 16, 80>}, {transform_indices = @transform_1, window_bounds = array<i64: 80, 256>}, {pipeline_mode = #tpu.pipeline_mode<synchronous>, transform_indices = @transform_2, window_bounds = array<i64: 16, 1>}, {transform_indices = @transform_3, window_bounds = array<i64: 16, 256>}]} {
    %c0 = arith.constant 0 : index
    %c0_0 = arith.constant 0 : index
    %0 = vector.load %arg1[%c0, %c0_0] : memref<16x80xbf16, #tpu.memory_space<vmem>>, vector<16x80xbf16>
    %c0_1 = arith.constant 0 : index
    %c0_2 = arith.constant 0 : index
    %1 = vector.load %arg2[%c0_1, %c0_2] : memref<80x256xbf16, #tpu.memory_space<vmem>>, vector<80x256xbf16>
    %cst = arith.constant dense<0.000000e+00> : vector<16x256xf32>
    %2 = tpu.matmul %0, %1, %cst {dimension_numbers = #tpu.dot_dimension_numbers<[1], [0], [0], [1], [0, 0, 1, 1], [], []>} : vector<16x80xbf16>, vector<80x256xbf16>, vector<16x256xf32> -> vector<16x256xf32>
    %c0_3 = arith.constant 0 : index
    %c0_4 = arith.constant 0 : index
    %3 = vector.load %arg3[%c0_3, %c0_4] : memref<16x1xf32, #tpu.memory_space<vmem>>, vector<16x1xf32>
    %4 = vector.broadcast %3 : vector<16x1xf32> to vector<16x256xf32>
    %5 = arith.addf %2, %4 : vector<16x256xf32>
    %6 = arith.truncf %5 : vector<16x256xf32> to vector<16x256xbf16>
    %c0_5 = arith.constant 0 : index
    %c0_6 = arith.constant 0 : index
    %7 = vector.load %arg4[%c0_5, %c0_6] : memref<16x256xbf16, #tpu.memory_space<vmem>>, vector<16x256xbf16>
    tpu.vector_store %arg4[%c0_5, %c0_6], %6 {strides = array<i32>} : memref<16x256xbf16, #tpu.memory_space<vmem>>, vector<16x256xbf16>,
    return
  }
  func.func @transform_0(%arg0: i32) -> (i32, i32) {
    %c0_i32 = arith.constant 0 : i32
    %c0_i32_0 = arith.constant 0 : i32
    %c0_i32_1 = arith.constant 0 : i32
    return %c0_i32, %c0_i32_0 : i32, i32
  }
  func.func @transform_1(%arg0: i32) -> (i32, i32) {
    %c0_i32 = arith.constant 0 : i32
    %c0_i32_0 = arith.constant 0 : i32
    return %c0_i32, %arg0 : i32, i32
  }
  func.func @transform_2(%arg0: i32) -> (i32, i32) {
    %c0_i32 = arith.constant 0 : i32
    %c0_i32_0 = arith.constant 0 : i32
    %c0_i32_1 = arith.constant 0 : i32
    return %c0_i32, %c0_i32_0 : i32, i32
  }
  func.func @transform_3(%arg0: i32) -> (i32, i32) {
    %c0_i32 = arith.constant 0 : i32
    %c0_i32_0 = arith.constant 0 : i32
    return %c0_i32, %arg0 : i32, i32
  }
}

module attributes {stable_mosaic.version = 11 : i64} {
  func.func @_eca_residual_kernel(%arg0: memref<64x25xbf16, #tpu.memory_space<vmem>>, %arg1: memref<64x1xf32, #tpu.memory_space<vmem>>, %arg2: memref<64x25xbf16, #tpu.memory_space<vmem>>, %arg3: memref<64x25xbf16, #tpu.memory_space<vmem>>) attributes {dimension_semantics = [], scalar_prefetch = 0 : i64, scratch_operands = 0 : i64, tpu.core_type = #tpu.core_type<tc>} {
    %c0 = arith.constant 0 : index
    %c0_0 = arith.constant 0 : index
    %0 = vector.load %arg1[%c0, %c0_0] : memref<64x1xf32, #tpu.memory_space<vmem>>, vector<64x1xf32>
    %1 = arith.negf %0 : vector<64x1xf32>
    %2 = math.exp %1 : vector<64x1xf32>
    %cst = arith.constant 1.000000e+00 : f32
    %3 = vector.broadcast %cst : f32 to vector<64x1xf32>
    %4 = arith.addf %3, %2 : vector<64x1xf32>
    %5 = arith.divf %3, %4 : vector<64x1xf32>
    %c0_1 = arith.constant 0 : index
    %c0_2 = arith.constant 0 : index
    %6 = vector.load %arg0[%c0_1, %c0_2] : memref<64x25xbf16, #tpu.memory_space<vmem>>, vector<64x25xbf16>
    %7 = arith.extf %6 : vector<64x25xbf16> to vector<64x25xf32>
    %8 = vector.broadcast %5 : vector<64x1xf32> to vector<64x25xf32>
    %9 = arith.mulf %7, %8 : vector<64x25xf32>
    %c0_3 = arith.constant 0 : index
    %c0_4 = arith.constant 0 : index
    %10 = vector.load %arg2[%c0_3, %c0_4] : memref<64x25xbf16, #tpu.memory_space<vmem>>, vector<64x25xbf16>
    %11 = arith.extf %10 : vector<64x25xbf16> to vector<64x25xf32>
    %12 = arith.addf %9, %11 : vector<64x25xf32>
    %13 = arith.truncf %12 : vector<64x25xf32> to vector<64x25xbf16>
    %c0_5 = arith.constant 0 : index
    %c0_6 = arith.constant 0 : index
    %14 = vector.load %arg3[%c0_5, %c0_6] : memref<64x25xbf16, #tpu.memory_space<vmem>>, vector<64x25xbf16>
    tpu.vector_store %arg3[%c0_5, %c0_6], %13 {strides = array<i32>} : memref<64x25xbf16, #tpu.memory_space<vmem>>, vector<64x25xbf16>,
    return
  }
}

module attributes {stable_mosaic.version = 11 : i64} {
  func.func @_eca_residual_kernel(%arg0: memref<64x25xbf16, #tpu.memory_space<vmem>>, %arg1: memref<64x1xf32, #tpu.memory_space<vmem>>, %arg2: memref<64x25xbf16, #tpu.memory_space<vmem>>, %arg3: memref<64x1xf32, #tpu.memory_space<vmem>>, %arg4: memref<64x1xf32, #tpu.memory_space<vmem>>, %arg5: memref<64x25xbf16, #tpu.memory_space<vmem>>) attributes {dimension_semantics = [], scalar_prefetch = 0 : i64, scratch_operands = 0 : i64, tpu.core_type = #tpu.core_type<tc>} {
    %c0 = arith.constant 0 : index
    %c0_0 = arith.constant 0 : index
    %0 = vector.load %arg1[%c0, %c0_0] : memref<64x1xf32, #tpu.memory_space<vmem>>, vector<64x1xf32>
    %1 = arith.negf %0 : vector<64x1xf32>
    %2 = math.exp %1 : vector<64x1xf32>
    %cst = arith.constant 1.000000e+00 : f32
    %3 = vector.broadcast %cst : f32 to vector<64x1xf32>
    %4 = arith.addf %3, %2 : vector<64x1xf32>
    %5 = arith.divf %3, %4 : vector<64x1xf32>
    %c0_1 = arith.constant 0 : index
    %c0_2 = arith.constant 0 : index
    %6 = vector.load %arg0[%c0_1, %c0_2] : memref<64x25xbf16, #tpu.memory_space<vmem>>, vector<64x25xbf16>
    %7 = arith.extf %6 : vector<64x25xbf16> to vector<64x25xf32>
    %8 = vector.broadcast %5 : vector<64x1xf32> to vector<64x25xf32>
    %9 = arith.mulf %7, %8 : vector<64x25xf32>
    %c0_3 = arith.constant 0 : index
    %c0_4 = arith.constant 0 : index
    %10 = vector.load %arg2[%c0_3, %c0_4] : memref<64x25xbf16, #tpu.memory_space<vmem>>, vector<64x25xbf16>
    %11 = arith.extf %10 : vector<64x25xbf16> to vector<64x25xf32>
    %12 = arith.addf %9, %11 : vector<64x25xf32>
    %c0_5 = arith.constant 0 : index
    %c0_6 = arith.constant 0 : index
    %13 = vector.load %arg3[%c0_5, %c0_6] : memref<64x1xf32, #tpu.memory_space<vmem>>, vector<64x1xf32>
    %14 = vector.broadcast %13 : vector<64x1xf32> to vector<64x25xf32>
    %15 = arith.mulf %12, %14 : vector<64x25xf32>
    %c0_7 = arith.constant 0 : index
    %c0_8 = arith.constant 0 : index
    %16 = vector.load %arg4[%c0_7, %c0_8] : memref<64x1xf32, #tpu.memory_space<vmem>>, vector<64x1xf32>
    %17 = vector.broadcast %16 : vector<64x1xf32> to vector<64x25xf32>
    %18 = arith.addf %15, %17 : vector<64x25xf32>
    %cst_9 = arith.constant 0.000000e+00 : f32
    %19 = vector.broadcast %cst_9 : f32 to vector<64x25xf32>
    %20 = arith.maximumf %18, %19 : vector<64x25xf32>
    %21 = arith.truncf %20 : vector<64x25xf32> to vector<64x25xbf16>
    %c0_10 = arith.constant 0 : index
    %c0_11 = arith.constant 0 : index
    %22 = vector.load %arg5[%c0_10, %c0_11] : memref<64x25xbf16, #tpu.memory_space<vmem>>, vector<64x25xbf16>
    tpu.vector_store %arg5[%c0_10, %c0_11], %21 {strides = array<i32>} : memref<64x25xbf16, #tpu.memory_space<vmem>>, vector<64x25xbf16>,
    return
  }
}

</mosaic_0001>

<llo_original>
// kernel: s3kai_resnet_forward.15
$region0: #{s3kai_resnet_forward.15}
  #allocation0 [shape = 'u32[]', space=smem, size = 0x4, offset = 0x4, fixed_abs, tag = 'smem constant byte address 0x4 - core index']
  #allocation1 [shape = 'u32[144,128]{1,0:T(1,128)}', space=vmem, size = 0x12000, scoped, tag = 'internal scratch']
  %s0 = inlined_call_operand.vmem [shape: bf16[16,64], index: 0, kind: input, shape index: {}]
  %s1 = inlined_call_operand.vmem [shape: bf16[64,2560], index: 1, kind: input, shape index: {}]
  %s2 = inlined_call_operand.vmem [shape: f32[16,1], index: 2, kind: input, shape index: {}]
  %s3 = inlined_call_operand.vmem [shape: f32[16,2560], index: 3, kind: output, shape index: {}]
  %s4 = sld [smem:[#allocation0]]
  $region87: #{s3kai_resnet_forward.15} parent=0
    _
  %s6 = ssub.s32 1, %s4
  %s7 = scalar_select 0, %s6, %s4
  $region1: #{s3kai_resnet_forward.15} parent=0
    #allocation2 [shape = 'u8[131072]{0}', space=vmem, size = 0x20000, scoped, tag = 'input window, operand 1']
    #allocation3 [shape = 'u8[65536]{0}', space=vmem, size = 0x10000, scoped, tag = 'output window, operand 0']
    loop: start=0, step=1, limit=7
    $region2: #{s3kai_resnet_forward.15} parent=1 // loop_pre_header
      _
    $region3: #{s3kai_resnet_forward.15} parent=1 // loop_header
      %s9 = sphi 0, %s13
      %p10 = scmp.ge.s32.totalorder %s9, 7
      %s17 = sphi 0, %s17
      %s19 = sphi 0, %s17
      %s20 = sphi 0, %s19
      %s34 = sphi 0, %s20
      %s40 = sphi 0, %s42
      %s43 = sphi 0, %s40
      %s44 = sphi 0, %s43
      %s60 = sphi 0, %s44
      %s64 = sphi 0, %s64
      %s66 = sphi 0, %s64
      %s67 = sphi 0, %s66
      %s81 = sphi 0, %s67
      %s87 = sphi 0, %s89
      %s90 = sphi 0, %s87
      %s91 = sphi 0, %s90
      %s107 = sphi 0, %s91
    $region4: #{s3kai_resnet_forward.15} parent=1 // loop_header_branch
      %12 = sbr.rel (%p10) target = $region8
    $region5: #{s3kai_resnet_forward.15} parent=1 // loop_body
      %s14 = ssub.s32 %s9, 1
      %s15 = ssub.s32 %s9, 2
      %s16 = sadd.s32 %s9, 1
      %s18 = sadd.s32 %s17, 1
      %p21 = scmp.eq.s32.totalorder %s9, 4
      %p22 = scmp.ne.s32.totalorder %s17, %s19
      %p23 = scmp.eq.s32.totalorder %s9, 0
      %p24 = por %p22, %p23
      %p25 = scmp.ne.s32.totalorder %s17, %s19
      %p26 = scmp.eq.s32.totalorder %s14, 4
      %p27 = por %p25, %p26
      %p28 = scmp.ne.s32.totalorder %s19, %s20
      %p29 = scmp.eq.s32.totalorder %s14, 0
      %p30 = por %p28, %p29
      %p31 = scmp.ne.s32.totalorder %s19, %s20
      %p32 = scmp.eq.s32.totalorder %s15, 4
      %p33 = por %p31, %p32
      %p35 = scmp.ne.s32.totalorder %s20, %s34
      %p36 = scmp.eq.s32.totalorder %s15, 0
      %p37 = por %p35, %p36
      %s38 = ssub.s32 %s9, %s16
      %p39 = scmp.eq.s32.totalorder %s38, 0
      %s41 = sadd.s32 %s40, 1
      %s42 = scalar_select %p39, %s40, %s41
      %p45 = pneg %p39
      %p46 = scmp.eq.s32.totalorder %s9, 4
      %p47 = por %p45, %p46
      %p48 = scmp.ne.s32.totalorder %s40, %s43
      %p49 = scmp.eq.s32.totalorder %s9, 0
      %p50 = por %p48, %p49
      %p51 = scmp.ne.s32.totalorder %s40, %s43
      %p52 = scmp.eq.s32.totalorder %s14, 4
      %p53 = por %p51, %p52
      %p54 = scmp.ne.s32.totalorder %s43, %s44
      %p55 = scmp.eq.s32.totalorder %s14, 0
      %p56 = por %p54, %p55
      %p57 = scmp.ne.s32.totalorder %s43, %s44
      %p58 = scmp.eq.s32.totalorder %s15, 4
      %p59 = por %p57, %p58
      %p61 = scmp.ne.s32.totalorder %s44, %s60
      %p62 = scmp.eq.s32.totalorder %s15, 0
      %p63 = por %p61, %p62
      %s65 = sadd.s32 %s64, 1
      %p68 = scmp.eq.s32.totalorder %s9, 4
      %p69 = scmp.ne.s32.totalorder %s64, %s66
      %p70 = scmp.eq.s32.totalorder %s9, 0
      %p71 = por %p69, %p70
      %p72 = scmp.ne.s32.totalorder %s64, %s66
      %p73 = scmp.eq.s32.totalorder %s14, 4
      %p74 = por %p72, %p73
      %p75 = scmp.ne.s32.totalorder %s66, %s67
      %p76 = scmp.eq.s32.totalorder %s14, 0
      %p77 = por %p75, %p76
      %p78 = scmp.ne.s32.totalorder %s66, %s67
      %p79 = scmp.eq.s32.totalorder %s15, 4
      %p80 = por %p78, %p79
      %p82 = scmp.ne.s32.totalorder %s67, %s81
      %p83 = scmp.eq.s32.totalorder %s15, 0
      %p84 = por %p82, %p83
      %s85 = ssub.s32 %s9, %s16
      %p86 = scmp.eq.s32.totalorder %s85, 0
      %s88 = sadd.s32 %s87, 1
      %s89 = scalar_select %p86, %s87, %s88
      %p92 = pneg %p86
      %p93 = scmp.eq.s32.totalorder %s9, 4
      %p94 = por %p92, %p93
      %p95 = scmp.ne.s32.totalorder %s87, %s90
      %p96 = scmp.eq.s32.totalorder %s9, 0
      %p97 = por %p95, %p96
      %p98 = scmp.ne.s32.totalorder %s87, %s90
      %p99 = scmp.eq.s32.totalorder %s14, 4
      %p100 = por %p98, %p99
      %p101 = scmp.ne.s32.totalorder %s90, %s91
      %p102 = scmp.eq.s32.totalorder %s14, 0
      %p103 = por %p101, %p102
      %p104 = scmp.ne.s32.totalorder %s90, %s91
      %p105 = scmp.eq.s32.totalorder %s15, 4
      %p106 = por %p104, %p105
      %p108 = scmp.ne.s32.totalorder %s91, %s107
      %p109 = scmp.eq.s32.totalorder %s15, 0
      %p110 = por %p108, %p109
      %p111 = scmp.le.s32.totalorder 1, %s9
      %p112 = scmp.lt.s32.totalorder %s9, 6
      %p113 = pnand %p111, %p112
      %p114 = pneg %p113
      // Predicated region
      $region9: #{s3kai_resnet_forward.15} parent=5 // pred_check
        _
      $region10: #{s3kai_resnet_forward.15} parent=5 // pred_check_branch
        %116 = sbr.rel (%p113) target = $region12
      $region11: #{s3kai_resnet_forward.15} parent=5 // pred_region
        %s117 = ssub.s32 %s9, 1
        // Predicated region
        $region13: #{s3kai_resnet_forward.15} parent=11 // pred_check
          %p118 = pneg %p30
        $region14: #{s3kai_resnet_forward.15} parent=11 // pred_check_branch
          %120 = sbr.rel (%p118) target = $region16
        $region15: #{s3kai_resnet_forward.15} parent=11 // pred_region
          _
        $region16: #{s3kai_resnet_forward.15} parent=11 // pred_fallthru
          _
        // Predicated region
        $region17: #{s3kai_resnet_forward.15} parent=11 // pred_check
          %p121 = pneg %p77
        $region18: #{s3kai_resnet_forward.15} parent=11 // pred_check_branch
          %123 = sbr.rel (%p121) target = $region20
        $region19: #{s3kai_resnet_forward.15} parent=11 // pred_region
          _
        $region20: #{s3kai_resnet_forward.15} parent=11 // pred_fallthru
          _
      $region12: #{s3kai_resnet_forward.15} parent=5 // pred_fallthru
        _
      %p124 = scmp.lt.s32.totalorder %s9, 5
      // Predicated region
      $region21: #{s3kai_resnet_forward.15} parent=5 // pred_check
        %p125 = pneg %p124
      $region22: #{s3kai_resnet_forward.15} parent=5 // pred_check_branch
        %127 = sbr.rel (%p125) target = $region24
      $region23: #{s3kai_resnet_forward.15} parent=5 // pred_region
        // Predicated region
        $region25: #{s3kai_resnet_forward.15} parent=23 // pred_check
          %p128 = pneg %p50
        $region26: #{s3kai_resnet_forward.15} parent=23 // pred_check_branch
          %130 = sbr.rel (%p128) target = $region28
        $region27: #{s3kai_resnet_forward.15} parent=23 // pred_region
          %s131 = sand.u32 %s40, 1
          %s132 = sand.u32 %s40, 1
          %s133 = smul.addr %s132, 128
          %s134 = scalar_lea.vmem [#allocation2], %s133
          %s135 = smul.u32 4, %s9
          %s136 = smul.addr %s135, 4
          %s137 = scalar_lea.vmem %s1, %s136
          // Predicated region
          $region29: #{s3kai_resnet_forward.15} parent=27 // pred_check
            _
          $region30: #{s3kai_resnet_forward.15} parent=27 // pred_check_branch
            %139 = sbr.rel (0) target = $region32
          $region31: #{s3kai_resnet_forward.15} parent=27 // pred_region
            // Predicated region
            $region33: #{s3kai_resnet_forward.15} parent=31 // pred_check
              _
            $region34: #{s3kai_resnet_forward.15} parent=31 // pred_check_branch
              %141 = sbr.rel (0) target = $region36
            $region35: #{s3kai_resnet_forward.15} parent=31 // pred_region
              loop: start=0, step=1, limit=1
              $region37: #{s3kai_resnet_forward.15} parent=35 // loop_pre_header
                _
              $region38: #{s3kai_resnet_forward.15} parent=35 // loop_header
                %s143 = sphi 0, %s147
                %p144 = scmp.ge.s32.totalorder %s143, 1
                %s148 = sphi %s137, %s137
                %s149 = sphi %s134, %s134
              $region39: #{s3kai_resnet_forward.15} parent=35 // loop_header_branch
                %146 = sbr.rel (%p144) target = $region43
              $region40: #{s3kai_resnet_forward.15} parent=35 // loop_body
                %v150 = vld [vmem:[%s148] sm:$0xff]
                %151 = vst [vmem:[%s149] sm:$0xff] %v150
                %v152 = vld [vmem:[%s148 + $0x8] sm:$0xff]
                %153 = vst [vmem:[%s149 + $0x8] sm:$0xff] %v152
                %v154 = vld [vmem:[%s148 + $0x50] sm:$0xff]
                %155 = vst [vmem:[%s149 + $0x10] sm:$0xff] %v154
                %v156 = vld [vmem:[%s148 + $0x58] sm:$0xff]
                %157 = vst [vmem:[%s149 + $0x18] sm:$0xff] %v156
                %v158 = vld [vmem:[%s148 + $0xa0] sm:$0xff]
                %159 = vst [vmem:[%s149 + $0x20] sm:$0xff] %v158
                %v160 = vld [vmem:[%s148 + $0xa8] sm:$0xff]
                %161 = vst [vmem:[%s149 + $0x28] sm:$0xff] %v160
                %v162 = vld [vmem:[%s148 + $0xf0] sm:$0xff]
                %163 = vst [vmem:[%s149 + $0x30] sm:$0xff] %v162
                %v164 = vld [vmem:[%s148 + $0xf8] sm:$0xff]
                %165 = vst [vmem:[%s149 + $0x38] sm:$0xff] %v164
                %v166 = vld [vmem:[%s148 + $0x140] sm:$0xff]
                %167 = vst [vmem:[%s149 + $0x40] sm:$0xff] %v166
                %v168 = vld [vmem:[%s148 + $0x148] sm:$0xff]
                %169 = vst [vmem:[%s149 + $0x48] sm:$0xff] %v168
                %v170 = vld [vmem:[%s148 + $0x190] sm:$0xff]
                %171 = vst [vmem:[%s149 + $0x50] sm:$0xff] %v170
                %v172 = vld [vmem:[%s148 + $0x198] sm:$0xff]
                %173 = vst [vmem:[%s149 + $0x58] sm:$0xff] %v172
                %v174 = vld [vmem:[%s148 + $0x1e0] sm:$0xff]
                %175 = vst [vmem:[%s149 + $0x60] sm:$0xff] %v174
                %v176 = vld [vmem:[%s148 + $0x1e8] sm:$0xff]
                %177 = vst [vmem:[%s149 + $0x68] sm:$0xff] %v176
                %v178 = vld [vmem:[%s148 + $0x230] sm:$0xff]
                %179 = vst [vmem:[%s149 + $0x70] sm:$0xff] %v178
                %v180 = vld [vmem:[%s148 + $0x238] sm:$0xff]
                %181 = vst [vmem:[%s149 + $0x78] sm:$0xff] %v180
              $region41: #{s3kai_resnet_forward.15} parent=35 // loop_footer
                %s147 = sadd.s32 1, %s143
              $region42: #{s3kai_resnet_forward.15} parent=35 // loop_footer_branch
                %142 = sbr.rel target = $region38
              $region43: #{s3kai_resnet_forward.15} parent=35 // loop_exit
                _
            $region36: #{s3kai_resnet_forward.15} parent=31 // pred_fallthru
              _
            // Predicated region
            $region44: #{s3kai_resnet_forward.15} parent=31 // pred_check
              _
            $region45: #{s3kai_resnet_forward.15} parent=31 // pred_check_branch
              %183 = sbr.rel target = $region47
            $region46: #{s3kai_resnet_forward.15} parent=31 // pred_region
              _
            $region47: #{s3kai_resnet_forward.15} parent=31 // pred_fallthru
              _
          $region32: #{s3kai_resnet_forward.15} parent=27 // pred_fallthru
            _
          %184 = vnop
        $region28: #{s3kai_resnet_forward.15} parent=23 // pred_fallthru
          _
      $region24: #{s3kai_resnet_forward.15} parent=5 // pred_fallthru
        _
      %p185 = scmp.le.s32.totalorder 1, %s9
      %p186 = scmp.lt.s32.totalorder %s9, 6
      %p187 = pnand %p185, %p186
      %p188 = pneg %p187
      // Predicated region
      $region48: #{s3kai_resnet_forward.15} parent=5 // pred_check
        _
      $region49: #{s3kai_resnet_forward.15} parent=5 // pred_check_branch
        %190 = sbr.rel (%p187) target = $region51
      $region50: #{s3kai_resnet_forward.15} parent=5 // pred_region
        %s191 = ssub.s32 %s9, 1
        %s192 = sand.u32 %s43, 1
        %s193 = sand.u32 %s43, 1
        %s194 = smul.addr %s193, 128
        %s195 = scalar_lea.vmem [#allocation2], %s194
        // Predicated region
        $region52: #{s3kai_resnet_forward.15} parent=50 // pred_check
          %p196 = pneg %p56
        $region53: #{s3kai_resnet_forward.15} parent=50 // pred_check_branch
          %198 = sbr.rel (%p196) target = $region55
        $region54: #{s3kai_resnet_forward.15} parent=50 // pred_region
          _
        $region55: #{s3kai_resnet_forward.15} parent=50 // pred_fallthru
          _
        %p199 = pneg %p30
        %p200 = pneg %p27
        %s201 = sand.u32 %s43, 1
        %s202 = sand.u32 %s43, 1
        %s203 = smul.addr %s202, 128
        %s204 = scalar_lea.vmem [#allocation2], %s203
        %p205 = pneg %p56
        %p206 = pneg %p53
        %p207 = pneg %p77
        %p208 = pneg %p74
        %p209 = pneg %p103
        %p210 = pneg %p100
        %s211 = sand.u32 %s90, 1
        %s212 = sand.u32 %s90, 1
        %s213 = smul.addr %s212, 64
        %s214 = scalar_lea.vmem [#allocation3], %s213
        %s215 = smul.u32 4, %s14
        %s216 = smul.u32 4, %s14
        %v218 = vld [vmem:[%s0] sm:$0xf]
        %v219 = vld [vmem:[%s0 + $0x4] sm:$0xf]
        %v220 = vld [vmem:[%s195] sm:$0xff]
        %v221 = vld [vmem:[%s195 + $0x8] sm:$0xff]
        %v222 = vld [vmem:[%s195 + $0x10] sm:$0xff]
        %v223 = vld [vmem:[%s195 + $0x18] sm:$0xff]
        %v224 = vld [vmem:[%s195 + $0x20] sm:$0xff]
        %v225 = vld [vmem:[%s195 + $0x28] sm:$0xff]
        %v226 = vld [vmem:[%s195 + $0x30] sm:$0xff]
        %v227 = vld [vmem:[%s195 + $0x38] sm:$0xff]
        %v228 = vld [vmem:[%s195 + $0x40] sm:$0xff]
        %v229 = vld [vmem:[%s195 + $0x48] sm:$0xff]
        %v230 = vld [vmem:[%s195 + $0x50] sm:$0xff]
        %v231 = vld [vmem:[%s195 + $0x58] sm:$0xff]
        %v232 = vld [vmem:[%s195 + $0x60] sm:$0xff]
        %v233 = vld [vmem:[%s195 + $0x68] sm:$0xff]
        %v234 = vld [vmem:[%s195 + $0x70] sm:$0xff]
        %v235 = vld [vmem:[%s195 + $0x78] sm:$0xff]
        %v236 = vld [vmem:[%s2] sm:$0xff]
        %v237 = vld [vmem:[%s2 + $0x8] sm:$0xff]
        %239 = vset.pattern.permute.xlu0 0
        %240 = vperm.xlu0 %239, %v236
        %v241 = vpop.permute.xlu0 %240
        %244 = vset.pattern.permute.xlu0 0
        %245 = vperm.xlu0 %244, %v237
        %v246 = vpop.permute.xlu0 %245
        %v250 = vunpack.c.l.b16 %v218
        %v251 = vunpack.c.l.b16 %v219
        %v252 = vpack.c.b16 %v251, %v250
        %v269 = vunpack.c.l.b16 %v220
        %v270 = vunpack.c.h.b16 %v220
        %v271 = vunpack.c.l.b16 %v221
        %v272 = vunpack.c.h.b16 %v221
        %v273 = vunpack.c.l.b16 %v222
        %v274 = vunpack.c.h.b16 %v222
        %v275 = vunpack.c.l.b16 %v223
        %v276 = vunpack.c.h.b16 %v223
        %v277 = vunpack.c.l.b16 %v224
        %v278 = vunpack.c.h.b16 %v224
        %v279 = vunpack.c.l.b16 %v225
        %v280 = vunpack.c.h.b16 %v225
        %v281 = vunpack.c.l.b16 %v226
        %v282 = vunpack.c.h.b16 %v226
        %v283 = vunpack.c.l.b16 %v227
        %v284 = vunpack.c.h.b16 %v227
        %v285 = vunpack.c.l.b16 %v228
        %v286 = vunpack.c.h.b16 %v228
        %v287 = vunpack.c.l.b16 %v229
        %v288 = vunpack.c.h.b16 %v229
        %v289 = vunpack.c.l.b16 %v230
        %v290 = vunpack.c.h.b16 %v230
        %v291 = vunpack.c.l.b16 %v231
        %v292 = vunpack.c.h.b16 %v231
        %v293 = vunpack.c.l.b16 %v232
        %v294 = vunpack.c.h.b16 %v232
        %v295 = vunpack.c.l.b16 %v233
        %v296 = vunpack.c.h.b16 %v233
        %v297 = vunpack.c.l.b16 %v234
        %v298 = vunpack.c.h.b16 %v234
        %v299 = vunpack.c.l.b16 %v235
        %v300 = vunpack.c.h.b16 %v235
        %v301 = vpack.c.b16 %v273, %v269
        %v302 = vpack.c.b16 %v274, %v270
        %v303 = vpack.c.b16 %v275, %v271
        %v304 = vpack.c.b16 %v276, %v272
        %v305 = vpack.c.b16 %v281, %v277
        %v306 = vpack.c.b16 %v282, %v278
        %v307 = vpack.c.b16 %v283, %v279
        %v308 = vpack.c.b16 %v284, %v280
        %v309 = vpack.c.b16 %v289, %v285
        %v310 = vpack.c.b16 %v290, %v286
        %v311 = vpack.c.b16 %v291, %v287
        %v312 = vpack.c.b16 %v292, %v288
        %v313 = vpack.c.b16 %v297, %v293
        %v314 = vpack.c.b16 %v298, %v294
        %v315 = vpack.c.b16 %v299, %v295
        %v316 = vpack.c.b16 %v300, %v296
        %vm333 = vcmask 523264
        %v335 = vsel %vm333, %v252, 0
        %337 = vmatprep.subr.bf16.mxu0 %v302
        %338 = vmatpush1.bf16.msra.mxu0 %v301
        %339 = vmatprep.subr.bf16.mxu0 %v306
        %340 = vmatpush1.bf16.msra.mxu0 %v305
        %341 = vmatprep.subr.bf16.mxu0 %v310
        %342 = vmatpush1.bf16.msra.mxu0 %v309
        %343 = vmatprep.subr.bf16.mxu0 %v314
        %344 = vmatpush1.bf16.msra.mxu0 %v313
        %345 = vmatprep.subr.bf16.mxu0 0
        %346 = vmatpush1.bf16.msra.mxu0 0
        %347 = vmatprep.subr.bf16.mxu0 0
        %348 = vmatpush1.bf16.msra.mxu0 0
        %349 = vmatprep.subr.bf16.mxu0 0
        %350 = vmatpush1.bf16.msra.mxu0 0
        %351 = vmatprep.subr.bf16.mxu0 0
        %352 = vmatpush1.bf16.msra.mxu0 0
        %353 = vmatprep.subr.bf16.mxu0 0
        %354 = vmatpush1.bf16.msra.mxu0 0
        %355 = vmatprep.subr.bf16.mxu0 0
        %356 = vmatpush1.bf16.msra.mxu0 0
        %357 = vmatprep.subr.bf16.mxu0 0
        %358 = vmatpush1.bf16.msra.mxu0 0
        %359 = vmatprep.subr.bf16.mxu0 0
        %360 = vmatpush1.bf16.msra.mxu0 0
        %361 = vmatprep.subr.bf16.mxu0 0
        %362 = vmatpush1.bf16.msra.mxu0 0
        %363 = vmatprep.subr.bf16.mxu0 0
        %364 = vmatpush1.bf16.msra.mxu0 0
        %365 = vmatprep.subr.bf16.mxu0 0
        %366 = vmatpush1.bf16.msra.mxu0 0
        %367 = vmatprep.subr.bf16.mxu0 0
        %368 = vmatpush1.bf16.msra.mxu0 0
        %369 = vmatprep.mubr.bf16.mxu0 0
        %370 = vmatmul.mubr.bf16.gmra.mrb[0].mxu0 %v335
        %v371 = vpop.f32.mrb[0].mxu0
        %v372 = vadd.f32 %v241, %v371
        %v373 = vpop.f32.mrb[0].mxu0
        %v374 = vadd.f32 %v241, %v373
        %v375 = vpop.f32.mrb[0].mxu0
        %v376 = vadd.f32 %v246, %v375
        %v377 = vpop.f32.mrb[0].mxu0
        %v378 = vadd.f32 %v246, %v377
        %379 = vdwg.mxu0
        %380 = vmatprep.subr.bf16.mxu0 %v304
        %381 = vmatpush1.bf16.msra.mxu0 %v303
        %382 = vmatprep.subr.bf16.mxu0 %v308
        %383 = vmatpush1.bf16.msra.mxu0 %v307
        %384 = vmatprep.subr.bf16.mxu0 %v312
        %385 = vmatpush1.bf16.msra.mxu0 %v311
        %386 = vmatprep.subr.bf16.mxu0 %v316
        %387 = vmatpush1.bf16.msra.mxu0 %v315
        %388 = vmatprep.subr.bf16.mxu0 0
        %389 = vmatpush1.bf16.msra.mxu0 0
        %390 = vmatprep.subr.bf16.mxu0 0
        %391 = vmatpush1.bf16.msra.mxu0 0
        %392 = vmatprep.subr.bf16.mxu0 0
        %393 = vmatpush1.bf16.msra.mxu0 0
        %394 = vmatprep.subr.bf16.mxu0 0
        %395 = vmatpush1.bf16.msra.mxu0 0
        %396 = vmatprep.subr.bf16.mxu0 0
        %397 = vmatpush1.bf16.msra.mxu0 0
        %398 = vmatprep.subr.bf16.mxu0 0
        %399 = vmatpush1.bf16.msra.mxu0 0
        %400 = vmatprep.subr.bf16.mxu0 0
        %401 = vmatpush1.bf16.msra.mxu0 0
        %402 = vmatprep.subr.bf16.mxu0 0
        %403 = vmatpush1.bf16.msra.mxu0 0
        %404 = vmatprep.subr.bf16.mxu0 0
        %405 = vmatpush1.bf16.msra.mxu0 0
        %406 = vmatprep.subr.bf16.mxu0 0
        %407 = vmatpush1.bf16.msra.mxu0 0
        %408 = vmatprep.subr.bf16.mxu0 0
        %409 = vmatpush1.bf16.msra.mxu0 0
        %410 = vmatprep.subr.bf16.mxu0 0
        %411 = vmatpush1.bf16.msra.mxu0 0
        %412 = vmatprep.mubr.bf16.mxu0 0
        %413 = vmatmul.mubr.bf16.gmra.mrb[0].mxu0 %v335
        %v414 = vpop.f32.mrb[0].mxu0
        %v415 = vadd.f32 %v241, %v414
        %v416 = vpop.f32.mrb[0].mxu0
        %v417 = vadd.f32 %v241, %v416
        %v418 = vpop.f32.mrb[0].mxu0
        %v419 = vadd.f32 %v246, %v418
        %v420 = vpop.f32.mrb[0].mxu0
        %v421 = vadd.f32 %v246, %v420
        %422 = vdwg.mxu0
        %v423 = vmax.f32 %v372, 0.0
        %v424 = vmax.f32 %v374, 0.0
        %v425 = vmax.f32 %v415, 0.0
        %v426 = vmax.f32 %v417, 0.0
        %v427 = vmax.f32 %v376, 0.0
        %v428 = vmax.f32 %v378, 0.0
        %v429 = vmax.f32 %v419, 0.0
        %v430 = vmax.f32 %v421, 0.0
        %431 = vst [vmem:[%s214] sm:$0xff] %v423
        %432 = vst [vmem:[%s214 + $0x8] sm:$0xff] %v424
        %433 = vst [vmem:[%s214 + $0x10] sm:$0xff] %v425
        %434 = vst [vmem:[%s214 + $0x18] sm:$0xff] %v426
        %435 = vst [vmem:[%s214 + $0x20] sm:$0xff] %v427
        %436 = vst [vmem:[%s214 + $0x28] sm:$0xff] %v428
        %437 = vst [vmem:[%s214 + $0x30] sm:$0xff] %v429
        %438 = vst [vmem:[%s214 + $0x38] sm:$0xff] %v430
        %s439 = sand.u32 %s90, 1
        %s440 = sand.u32 %s90, 1
        %s441 = smul.addr %s440, 64
        %s442 = scalar_lea.vmem [#allocation3], %s441
        // Predicated region
        $region56: #{s3kai_resnet_forward.15} parent=50 // pred_check
          %p443 = pneg %p100
        $region57: #{s3kai_resnet_forward.15} parent=50 // pred_check_branch
          %445 = sbr.rel (%p443) target = $region59
        $region58: #{s3kai_resnet_forward.15} parent=50 // pred_region
          %s446 = smul.u32 4, %s14
          %s447 = smul.addr %s446, 8
          %s448 = scalar_lea.vmem %s3, %s447
          // Predicated region
          $region60: #{s3kai_resnet_forward.15} parent=58 // pred_check
            _
          $region61: #{s3kai_resnet_forward.15} parent=58 // pred_check_branch
            %450 = sbr.rel (0) target = $region63
          $region62: #{s3kai_resnet_forward.15} parent=58 // pred_region
            // Predicated region
            $region64: #{s3kai_resnet_forward.15} parent=62 // pred_check
              _
            $region65: #{s3kai_resnet_forward.15} parent=62 // pred_check_branch
              %452 = sbr.rel (0) target = $region67
            $region66: #{s3kai_resnet_forward.15} parent=62 // pred_region
              loop: start=0, step=1, limit=1
              $region68: #{s3kai_resnet_forward.15} parent=66 // loop_pre_header
                _
              $region69: #{s3kai_resnet_forward.15} parent=66 // loop_header
                %s454 = sphi 0, %s458
                %p455 = scmp.ge.s32.totalorder %s454, 1
                %s459 = sphi %s442, %s442
                %s460 = sphi %s448, %s448
              $region70: #{s3kai_resnet_forward.15} parent=66 // loop_header_branch
                %457 = sbr.rel (%p455) target = $region74
              $region71: #{s3kai_resnet_forward.15} parent=66 // loop_body
                %v461 = vld [vmem:[%s459] sm:$0xff]
                %462 = vst [vmem:[%s460] sm:$0xff] %v461
                %v463 = vld [vmem:[%s459 + $0x8] sm:$0xff]
                %464 = vst [vmem:[%s460 + $0x8] sm:$0xff] %v463
                %v465 = vld [vmem:[%s459 + $0x10] sm:$0xff]
                %466 = vst [vmem:[%s460 + $0x10] sm:$0xff] %v465
                %v467 = vld [vmem:[%s459 + $0x18] sm:$0xff]
                %468 = vst [vmem:[%s460 + $0x18] sm:$0xff] %v467
                %v469 = vld [vmem:[%s459 + $0x20] sm:$0xff]
                %470 = vst [vmem:[%s460 + $0xa0] sm:$0xff] %v469
                %v471 = vld [vmem:[%s459 + $0x28] sm:$0xff]
                %472 = vst [vmem:[%s460 + $0xa8] sm:$0xff] %v471
                %v473 = vld [vmem:[%s459 + $0x30] sm:$0xff]
                %474 = vst [vmem:[%s460 + $0xb0] sm:$0xff] %v473
                %v475 = vld [vmem:[%s459 + $0x38] sm:$0xff]
                %476 = vst [vmem:[%s460 + $0xb8] sm:$0xff] %v475
              $region72: #{s3kai_resnet_forward.15} parent=66 // loop_footer
                %s458 = sadd.s32 1, %s454
              $region73: #{s3kai_resnet_forward.15} parent=66 // loop_footer_branch
                %453 = sbr.rel target = $region69
              $region74: #{s3kai_resnet_forward.15} parent=66 // loop_exit
                _
            $region67: #{s3kai_resnet_forward.15} parent=62 // pred_fallthru
              _
            // Predicated region
            $region75: #{s3kai_resnet_forward.15} parent=62 // pred_check
              _
            $region76: #{s3kai_resnet_forward.15} parent=62 // pred_check_branch
              %478 = sbr.rel target = $region78
            $region77: #{s3kai_resnet_forward.15} parent=62 // pred_region
              _
            $region78: #{s3kai_resnet_forward.15} parent=62 // pred_fallthru
              _
          $region63: #{s3kai_resnet_forward.15} parent=58 // pred_fallthru
            _
          %479 = vnop
        $region59: #{s3kai_resnet_forward.15} parent=50 // pred_fallthru
          _
      $region51: #{s3kai_resnet_forward.15} parent=5 // pred_fallthru
        _
      %p480 = scmp.le.s32.totalorder 2, %s9
      // Predicated region
      $region79: #{s3kai_resnet_forward.15} parent=5 // pred_check
        %p481 = pneg %p480
      $region80: #{s3kai_resnet_forward.15} parent=5 // pred_check_branch
        %483 = sbr.rel (%p481) target = $region82
      $region81: #{s3kai_resnet_forward.15} parent=5 // pred_region
        %s484 = ssub.s32 %s9, 2
        // Predicated region
        $region83: #{s3kai_resnet_forward.15} parent=81 // pred_check
          %p485 = pneg %p106
        $region84: #{s3kai_resnet_forward.15} parent=81 // pred_check_branch
          %487 = sbr.rel (%p485) target = $region86
        $region85: #{s3kai_resnet_forward.15} parent=81 // pred_region
          %s488 = sand.u32 %s91, 1
          %s489 = sand.u32 %s91, 1
          %s490 = smul.addr %s489, 64
          %s491 = scalar_lea.vmem [#allocation3], %s490
        $region86: #{s3kai_resnet_forward.15} parent=81 // pred_fallthru
          _
      $region82: #{s3kai_resnet_forward.15} parent=5 // pred_fallthru
        _
    $region6: #{s3kai_resnet_forward.15} parent=1 // loop_footer
      %s13 = sadd.s32 1, %s9
    $region7: #{s3kai_resnet_forward.15} parent=1 // loop_footer_branch
      %8 = sbr.rel target = $region3
    $region8: #{s3kai_resnet_forward.15} parent=1 // loop_exit
      _

// kernel: s3kai_resnet_forward.16
$region0: #{s3kai_resnet_forward.16}
  #allocation0 [shape = 'u32[]', space=smem, size = 0x4, offset = 0x4, fixed_abs, tag = 'smem constant byte address 0x4 - core index']
  #allocation1 [shape = 'u32[144,128]{1,0:T(1,128)}', space=vmem, size = 0x12000, scoped, tag = 'internal scratch']
  %s0 = inlined_call_operand.vmem [shape: bf16[16,64], index: 0, kind: input, shape index: {}]
  %s1 = inlined_call_operand.vmem [shape: bf16[64,2560], index: 1, kind: input, shape index: {}]
  %s2 = inlined_call_operand.vmem [shape: f32[16,1], index: 2, kind: input, shape index: {}]
  %s3 = inlined_call_operand.vmem [shape: f32[16,1], index: 3, kind: input, shape index: {}]
  %s4 = inlined_call_operand.vmem [shape: f32[16,1], index: 4, kind: input, shape index: {}]
  %s5 = inlined_call_operand.vmem [shape: bf16[16,2560], index: 5, kind: output, shape index: {}]
  %s6 = sld [smem:[#allocation0]]
  $region95: #{s3kai_resnet_forward.16} parent=0
    _
  %s8 = ssub.s32 1, %s6
  %s9 = scalar_select 0, %s8, %s6
  $region1: #{s3kai_resnet_forward.16} parent=0
    #allocation2 [shape = 'u8[131072]{0}', space=vmem, size = 0x20000, scoped, tag = 'input window, operand 1']
    #allocation3 [shape = 'u8[32768]{0}', space=vmem, size = 0x8000, scoped, tag = 'output window, operand 0']
    loop: start=0, step=1, limit=7
    $region2: #{s3kai_resnet_forward.16} parent=1 // loop_pre_header
      _
    $region3: #{s3kai_resnet_forward.16} parent=1 // loop_header
      %s11 = sphi 0, %s15
      %p12 = scmp.ge.s32.totalorder %s11, 7
      %s19 = sphi 0, %s19
      %s21 = sphi 0, %s19
      %s22 = sphi 0, %s21
      %s36 = sphi 0, %s22
      %s42 = sphi 0, %s44
      %s45 = sphi 0, %s42
      %s46 = sphi 0, %s45
      %s62 = sphi 0, %s46
      %s66 = sphi 0, %s66
      %s68 = sphi 0, %s66
      %s69 = sphi 0, %s68
      %s83 = sphi 0, %s69
      %s87 = sphi 0, %s87
      %s89 = sphi 0, %s87
      %s90 = sphi 0, %s89
      %s104 = sphi 0, %s90
      %s108 = sphi 0, %s108
      %s110 = sphi 0, %s108
      %s111 = sphi 0, %s110
      %s125 = sphi 0, %s111
      %s131 = sphi 0, %s133
      %s134 = sphi 0, %s131
      %s135 = sphi 0, %s134
      %s151 = sphi 0, %s135
    $region4: #{s3kai_resnet_forward.16} parent=1 // loop_header_branch
      %14 = sbr.rel (%p12) target = $region8
    $region5: #{s3kai_resnet_forward.16} parent=1 // loop_body
      %s16 = ssub.s32 %s11, 1
      %s17 = ssub.s32 %s11, 2
      %s18 = sadd.s32 %s11, 1
      %s20 = sadd.s32 %s19, 1
      %p23 = scmp.eq.s32.totalorder %s11, 4
      %p24 = scmp.ne.s32.totalorder %s19, %s21
      %p25 = scmp.eq.s32.totalorder %s11, 0
      %p26 = por %p24, %p25
      %p27 = scmp.ne.s32.totalorder %s19, %s21
      %p28 = scmp.eq.s32.totalorder %s16, 4
      %p29 = por %p27, %p28
      %p30 = scmp.ne.s32.totalorder %s21, %s22
      %p31 = scmp.eq.s32.totalorder %s16, 0
      %p32 = por %p30, %p31
      %p33 = scmp.ne.s32.totalorder %s21, %s22
      %p34 = scmp.eq.s32.totalorder %s17, 4
      %p35 = por %p33, %p34
      %p37 = scmp.ne.s32.totalorder %s22, %s36
      %p38 = scmp.eq.s32.totalorder %s17, 0
      %p39 = por %p37, %p38
      %s40 = ssub.s32 %s11, %s18
      %p41 = scmp.eq.s32.totalorder %s40, 0
      %s43 = sadd.s32 %s42, 1
      %s44 = scalar_select %p41, %s42, %s43
      %p47 = pneg %p41
      %p48 = scmp.eq.s32.totalorder %s11, 4
      %p49 = por %p47, %p48
      %p50 = scmp.ne.s32.totalorder %s42, %s45
      %p51 = scmp.eq.s32.totalorder %s11, 0
      %p52 = por %p50, %p51
      %p53 = scmp.ne.s32.totalorder %s42, %s45
      %p54 = scmp.eq.s32.totalorder %s16, 4
      %p55 = por %p53, %p54
      %p56 = scmp.ne.s32.totalorder %s45, %s46
      %p57 = scmp.eq.s32.totalorder %s16, 0
      %p58 = por %p56, %p57
      %p59 = scmp.ne.s32.totalorder %s45, %s46
      %p60 = scmp.eq.s32.totalorder %s17, 4
      %p61 = por %p59, %p60
      %p63 = scmp.ne.s32.totalorder %s46, %s62
      %p64 = scmp.eq.s32.totalorder %s17, 0
      %p65 = por %p63, %p64
      %s67 = sadd.s32 %s66, 1
      %p70 = scmp.eq.s32.totalorder %s11, 4
      %p71 = scmp.ne.s32.totalorder %s66, %s68
      %p72 = scmp.eq.s32.totalorder %s11, 0
      %p73 = por %p71, %p72
      %p74 = scmp.ne.s32.totalorder %s66, %s68
      %p75 = scmp.eq.s32.totalorder %s16, 4
      %p76 = por %p74, %p75
      %p77 = scmp.ne.s32.totalorder %s68, %s69
      %p78 = scmp.eq.s32.totalorder %s16, 0
      %p79 = por %p77, %p78
      %p80 = scmp.ne.s32.totalorder %s68, %s69
      %p81 = scmp.eq.s32.totalorder %s17, 4
      %p82 = por %p80, %p81
      %p84 = scmp.ne.s32.totalorder %s69, %s83
      %p85 = scmp.eq.s32.totalorder %s17, 0
      %p86 = por %p84, %p85
      %s88 = sadd.s32 %s87, 1
      %p91 = scmp.eq.s32.totalorder %s11, 4
      %p92 = scmp.ne.s32.totalorder %s87, %s89
      %p93 = scmp.eq.s32.totalorder %s11, 0
      %p94 = por %p92, %p93
      %p95 = scmp.ne.s32.totalorder %s87, %s89
      %p96 = scmp.eq.s32.totalorder %s16, 4
      %p97 = por %p95, %p96
      %p98 = scmp.ne.s32.totalorder %s89, %s90
      %p99 = scmp.eq.s32.totalorder %s16, 0
      %p100 = por %p98, %p99
      %p101 = scmp.ne.s32.totalorder %s89, %s90
      %p102 = scmp.eq.s32.totalorder %s17, 4
      %p103 = por %p101, %p102
      %p105 = scmp.ne.s32.totalorder %s90, %s104
      %p106 = scmp.eq.s32.totalorder %s17, 0
      %p107 = por %p105, %p106
      %s109 = sadd.s32 %s108, 1
      %p112 = scmp.eq.s32.totalorder %s11, 4
      %p113 = scmp.ne.s32.totalorder %s108, %s110
      %p114 = scmp.eq.s32.totalorder %s11, 0
      %p115 = por %p113, %p114
      %p116 = scmp.ne.s32.totalorder %s108, %s110
      %p117 = scmp.eq.s32.totalorder %s16, 4
      %p118 = por %p116, %p117
      %p119 = scmp.ne.s32.totalorder %s110, %s111
      %p120 = scmp.eq.s32.totalorder %s16, 0
      %p121 = por %p119, %p120
      %p122 = scmp.ne.s32.totalorder %s110, %s111
      %p123 = scmp.eq.s32.totalorder %s17, 4
      %p124 = por %p122, %p123
      %p126 = scmp.ne.s32.totalorder %s111, %s125
      %p127 = scmp.eq.s32.totalorder %s17, 0
      %p128 = por %p126, %p127
      %s129 = ssub.s32 %s11, %s18
      %p130 = scmp.eq.s32.totalorder %s129, 0
      %s132 = sadd.s32 %s131, 1
      %s133 = scalar_select %p130, %s131, %s132
      %p136 = pneg %p130
      %p137 = scmp.eq.s32.totalorder %s11, 4
      %p138 = por %p136, %p137
      %p139 = scmp.ne.s32.totalorder %s131, %s134
      %p140 = scmp.eq.s32.totalorder %s11, 0
      %p141 = por %p139, %p140
      %p142 = scmp.ne.s32.totalorder %s131, %s134
      %p143 = scmp.eq.s32.totalorder %s16, 4
      %p144 = por %p142, %p143
      %p145 = scmp.ne.s32.totalorder %s134, %s135
      %p146 = scmp.eq.s32.totalorder %s16, 0
      %p147 = por %p145, %p146
      %p148 = scmp.ne.s32.totalorder %s134, %s135
      %p149 = scmp.eq.s32.totalorder %s17, 4
      %p150 = por %p148, %p149
      %p152 = scmp.ne.s32.totalorder %s135, %s151
      %p153 = scmp.eq.s32.totalorder %s17, 0
      %p154 = por %p152, %p153
      %p155 = scmp.le.s32.totalorder 1, %s11
      %p156 = scmp.lt.s32.totalorder %s11, 6
      %p157 = pnand %p155, %p156
      %p158 = pneg %p157
      // Predicated region
      $region9: #{s3kai_resnet_forward.16} parent=5 // pred_check
        _
      $region10: #{s3kai_resnet_forward.16} parent=5 // pred_check_branch
        %160 = sbr.rel (%p157) target = $region12
      $region11: #{s3kai_resnet_forward.16} parent=5 // pred_region
        %s161 = ssub.s32 %s11, 1
        // Predicated region
        $region13: #{s3kai_resnet_forward.16} parent=11 // pred_check
          %p162 = pneg %p32
        $region14: #{s3kai_resnet_forward.16} parent=11 // pred_check_branch
          %164 = sbr.rel (%p162) target = $region16
        $region15: #{s3kai_resnet_forward.16} parent=11 // pred_region
          _
        $region16: #{s3kai_resnet_forward.16} parent=11 // pred_fallthru
          _
        // Predicated region
        $region17: #{s3kai_resnet_forward.16} parent=11 // pred_check
          %p165 = pneg %p79
        $region18: #{s3kai_resnet_forward.16} parent=11 // pred_check_branch
          %167 = sbr.rel (%p165) target = $region20
        $region19: #{s3kai_resnet_forward.16} parent=11 // pred_region
          _
        $region20: #{s3kai_resnet_forward.16} parent=11 // pred_fallthru
          _
        // Predicated region
        $region21: #{s3kai_resnet_forward.16} parent=11 // pred_check
          %p168 = pneg %p100
        $region22: #{s3kai_resnet_forward.16} parent=11 // pred_check_branch
          %170 = sbr.rel (%p168) target = $region24
        $region23: #{s3kai_resnet_forward.16} parent=11 // pred_region
          _
        $region24: #{s3kai_resnet_forward.16} parent=11 // pred_fallthru
          _
        // Predicated region
        $region25: #{s3kai_resnet_forward.16} parent=11 // pred_check
          %p171 = pneg %p121
        $region26: #{s3kai_resnet_forward.16} parent=11 // pred_check_branch
          %173 = sbr.rel (%p171) target = $region28
        $region27: #{s3kai_resnet_forward.16} parent=11 // pred_region
          _
        $region28: #{s3kai_resnet_forward.16} parent=11 // pred_fallthru
          _
      $region12: #{s3kai_resnet_forward.16} parent=5 // pred_fallthru
        _
      %p174 = scmp.lt.s32.totalorder %s11, 5
      // Predicated region
      $region29: #{s3kai_resnet_forward.16} parent=5 // pred_check
        %p175 = pneg %p174
      $region30: #{s3kai_resnet_forward.16} parent=5 // pred_check_branch
        %177 = sbr.rel (%p175) target = $region32
      $region31: #{s3kai_resnet_forward.16} parent=5 // pred_region
        // Predicated region
        $region33: #{s3kai_resnet_forward.16} parent=31 // pred_check
          %p178 = pneg %p52
        $region34: #{s3kai_resnet_forward.16} parent=31 // pred_check_branch
          %180 = sbr.rel (%p178) target = $region36
        $region35: #{s3kai_resnet_forward.16} parent=31 // pred_region
          %s181 = sand.u32 %s42, 1
          %s182 = sand.u32 %s42, 1
          %s183 = smul.addr %s182, 128
          %s184 = scalar_lea.vmem [#allocation2], %s183
          %s185 = smul.u32 4, %s11
          %s186 = smul.addr %s185, 4
          %s187 = scalar_lea.vmem %s1, %s186
          // Predicated region
          $region37: #{s3kai_resnet_forward.16} parent=35 // pred_check
            _
          $region38: #{s3kai_resnet_forward.16} parent=35 // pred_check_branch
            %189 = sbr.rel (0) target = $region40
          $region39: #{s3kai_resnet_forward.16} parent=35 // pred_region
            // Predicated region
            $region41: #{s3kai_resnet_forward.16} parent=39 // pred_check
              _
            $region42: #{s3kai_resnet_forward.16} parent=39 // pred_check_branch
              %191 = sbr.rel (0) target = $region44
            $region43: #{s3kai_resnet_forward.16} parent=39 // pred_region
              loop: start=0, step=1, limit=1
              $region45: #{s3kai_resnet_forward.16} parent=43 // loop_pre_header
                _
              $region46: #{s3kai_resnet_forward.16} parent=43 // loop_header
                %s193 = sphi 0, %s197
                %p194 = scmp.ge.s32.totalorder %s193, 1
                %s198 = sphi %s187, %s187
                %s199 = sphi %s184, %s184
              $region47: #{s3kai_resnet_forward.16} parent=43 // loop_header_branch
                %196 = sbr.rel (%p194) target = $region51
              $region48: #{s3kai_resnet_forward.16} parent=43 // loop_body
                %v200 = vld [vmem:[%s198] sm:$0xff]
                %201 = vst [vmem:[%s199] sm:$0xff] %v200
                %v202 = vld [vmem:[%s198 + $0x8] sm:$0xff]
                %203 = vst [vmem:[%s199 + $0x8] sm:$0xff] %v202
                %v204 = vld [vmem:[%s198 + $0x50] sm:$0xff]
                %205 = vst [vmem:[%s199 + $0x10] sm:$0xff] %v204
                %v206 = vld [vmem:[%s198 + $0x58] sm:$0xff]
                %207 = vst [vmem:[%s199 + $0x18] sm:$0xff] %v206
                %v208 = vld [vmem:[%s198 + $0xa0] sm:$0xff]
                %209 = vst [vmem:[%s199 + $0x20] sm:$0xff] %v208
                %v210 = vld [vmem:[%s198 + $0xa8] sm:$0xff]
                %211 = vst [vmem:[%s199 + $0x28] sm:$0xff] %v210
                %v212 = vld [vmem:[%s198 + $0xf0] sm:$0xff]
                %213 = vst [vmem:[%s199 + $0x30] sm:$0xff] %v212
                %v214 = vld [vmem:[%s198 + $0xf8] sm:$0xff]
                %215 = vst [vmem:[%s199 + $0x38] sm:$0xff] %v214
                %v216 = vld [vmem:[%s198 + $0x140] sm:$0xff]
                %217 = vst [vmem:[%s199 + $0x40] sm:$0xff] %v216
                %v218 = vld [vmem:[%s198 + $0x148] sm:$0xff]
                %219 = vst [vmem:[%s199 + $0x48] sm:$0xff] %v218
                %v220 = vld [vmem:[%s198 + $0x190] sm:$0xff]
                %221 = vst [vmem:[%s199 + $0x50] sm:$0xff] %v220
                %v222 = vld [vmem:[%s198 + $0x198] sm:$0xff]
                %223 = vst [vmem:[%s199 + $0x58] sm:$0xff] %v222
                %v224 = vld [vmem:[%s198 + $0x1e0] sm:$0xff]
                %225 = vst [vmem:[%s199 + $0x60] sm:$0xff] %v224
                %v226 = vld [vmem:[%s198 + $0x1e8] sm:$0xff]
                %227 = vst [vmem:[%s199 + $0x68] sm:$0xff] %v226
                %v228 = vld [vmem:[%s198 + $0x230] sm:$0xff]
                %229 = vst [vmem:[%s199 + $0x70] sm:$0xff] %v228
                %v230 = vld [vmem:[%s198 + $0x238] sm:$0xff]
                %231 = vst [vmem:[%s199 + $0x78] sm:$0xff] %v230
              $region49: #{s3kai_resnet_forward.16} parent=43 // loop_footer
                %s197 = sadd.s32 1, %s193
              $region50: #{s3kai_resnet_forward.16} parent=43 // loop_footer_branch
                %192 = sbr.rel target = $region46
              $region51: #{s3kai_resnet_forward.16} parent=43 // loop_exit
                _
            $region44: #{s3kai_resnet_forward.16} parent=39 // pred_fallthru
              _
            // Predicated region
            $region52: #{s3kai_resnet_forward.16} parent=39 // pred_check
              _
            $region53: #{s3kai_resnet_forward.16} parent=39 // pred_check_branch
              %233 = sbr.rel target = $region55
            $region54: #{s3kai_resnet_forward.16} parent=39 // pred_region
              _
            $region55: #{s3kai_resnet_forward.16} parent=39 // pred_fallthru
              _
          $region40: #{s3kai_resnet_forward.16} parent=35 // pred_fallthru
            _
          %234 = vnop
        $region36: #{s3kai_resnet_forward.16} parent=31 // pred_fallthru
          _
      $region32: #{s3kai_resnet_forward.16} parent=5 // pred_fallthru
        _
      %p235 = scmp.le.s32.totalorder 1, %s11
      %p236 = scmp.lt.s32.totalorder %s11, 6
      %p237 = pnand %p235, %p236
      %p238 = pneg %p237
      // Predicated region
      $region56: #{s3kai_resnet_forward.16} parent=5 // pred_check
        _
      $region57: #{s3kai_resnet_forward.16} parent=5 // pred_check_branch
        %240 = sbr.rel (%p237) target = $region59
      $region58: #{s3kai_resnet_forward.16} parent=5 // pred_region
        %s241 = ssub.s32 %s11, 1
        %s242 = sand.u32 %s45, 1
        %s243 = sand.u32 %s45, 1
        %s244 = smul.addr %s243, 128
        %s245 = scalar_lea.vmem [#allocation2], %s244
        // Predicated region
        $region60: #{s3kai_resnet_forward.16} parent=58 // pred_check
          %p246 = pneg %p58
        $region61: #{s3kai_resnet_forward.16} parent=58 // pred_check_branch
          %248 = sbr.rel (%p246) target = $region63
        $region62: #{s3kai_resnet_forward.16} parent=58 // pred_region
          _
        $region63: #{s3kai_resnet_forward.16} parent=58 // pred_fallthru
          _
        %p249 = pneg %p32
        %p250 = pneg %p29
        %s251 = sand.u32 %s45, 1
        %s252 = sand.u32 %s45, 1
        %s253 = smul.addr %s252, 128
        %s254 = scalar_lea.vmem [#allocation2], %s253
        %p255 = pneg %p58
        %p256 = pneg %p55
        %p257 = pneg %p79
        %p258 = pneg %p76
        %p259 = pneg %p100
        %p260 = pneg %p97
        %p261 = pneg %p121
        %p262 = pneg %p118
        %p263 = pneg %p147
        %p264 = pneg %p144
        %s265 = sand.u32 %s134, 1
        %s266 = sand.u32 %s134, 1
        %s267 = smul.addr %s266, 32
        %s268 = scalar_lea.vmem [#allocation3], %s267
        %s269 = smul.u32 4, %s16
        %s270 = smul.u32 4, %s16
        %v272 = vld [vmem:[%s0] sm:$0xf]
        %v273 = vld [vmem:[%s0 + $0x4] sm:$0xf]
        %v274 = vld [vmem:[%s245] sm:$0xff]
        %v275 = vld [vmem:[%s245 + $0x8] sm:$0xff]
        %v276 = vld [vmem:[%s245 + $0x10] sm:$0xff]
        %v277 = vld [vmem:[%s245 + $0x18] sm:$0xff]
        %v278 = vld [vmem:[%s245 + $0x20] sm:$0xff]
        %v279 = vld [vmem:[%s245 + $0x28] sm:$0xff]
        %v280 = vld [vmem:[%s245 + $0x30] sm:$0xff]
        %v281 = vld [vmem:[%s245 + $0x38] sm:$0xff]
        %v282 = vld [vmem:[%s245 + $0x40] sm:$0xff]
        %v283 = vld [vmem:[%s245 + $0x48] sm:$0xff]
        %v284 = vld [vmem:[%s245 + $0x50] sm:$0xff]
        %v285 = vld [vmem:[%s245 + $0x58] sm:$0xff]
        %v286 = vld [vmem:[%s245 + $0x60] sm:$0xff]
        %v287 = vld [vmem:[%s245 + $0x68] sm:$0xff]
        %v288 = vld [vmem:[%s245 + $0x70] sm:$0xff]
        %v289 = vld [vmem:[%s245 + $0x78] sm:$0xff]
        %v290 = vld [vmem:[%s2] sm:$0xff]
        %v291 = vld [vmem:[%s2 + $0x8] sm:$0xff]
        %293 = vset.pattern.permute.xlu0 0
        %294 = vperm.xlu0 %293, %v290
        %v295 = vpop.permute.xlu0 %294
        %298 = vset.pattern.permute.xlu0 0
        %299 = vperm.xlu0 %298, %v291
        %v300 = vpop.permute.xlu0 %299
        %v304 = vunpack.c.l.b16 %v272
        %v305 = vunpack.c.l.b16 %v273
        %v306 = vpack.c.b16 %v305, %v304
        %v323 = vunpack.c.l.b16 %v274
        %v324 = vunpack.c.h.b16 %v274
        %v325 = vunpack.c.l.b16 %v275
        %v326 = vunpack.c.h.b16 %v275
        %v327 = vunpack.c.l.b16 %v276
        %v328 = vunpack.c.h.b16 %v276
        %v329 = vunpack.c.l.b16 %v277
        %v330 = vunpack.c.h.b16 %v277
        %v331 = vunpack.c.l.b16 %v278
        %v332 = vunpack.c.h.b16 %v278
        %v333 = vunpack.c.l.b16 %v279
        %v334 = vunpack.c.h.b16 %v279
        %v335 = vunpack.c.l.b16 %v280
        %v336 = vunpack.c.h.b16 %v280
        %v337 = vunpack.c.l.b16 %v281
        %v338 = vunpack.c.h.b16 %v281
        %v339 = vunpack.c.l.b16 %v282
        %v340 = vunpack.c.h.b16 %v282
        %v341 = vunpack.c.l.b16 %v283
        %v342 = vunpack.c.h.b16 %v283
        %v343 = vunpack.c.l.b16 %v284
        %v344 = vunpack.c.h.b16 %v284
        %v345 = vunpack.c.l.b16 %v285
        %v346 = vunpack.c.h.b16 %v285
        %v347 = vunpack.c.l.b16 %v286
        %v348 = vunpack.c.h.b16 %v286
        %v349 = vunpack.c.l.b16 %v287
        %v350 = vunpack.c.h.b16 %v287
        %v351 = vunpack.c.l.b16 %v288
        %v352 = vunpack.c.h.b16 %v288
        %v353 = vunpack.c.l.b16 %v289
        %v354 = vunpack.c.h.b16 %v289
        %v355 = vpack.c.b16 %v327, %v323
        %v356 = vpack.c.b16 %v328, %v324
        %v357 = vpack.c.b16 %v329, %v325
        %v358 = vpack.c.b16 %v330, %v326
        %v359 = vpack.c.b16 %v335, %v331
        %v360 = vpack.c.b16 %v336, %v332
        %v361 = vpack.c.b16 %v337, %v333
        %v362 = vpack.c.b16 %v338, %v334
        %v363 = vpack.c.b16 %v343, %v339
        %v364 = vpack.c.b16 %v344, %v340
        %v365 = vpack.c.b16 %v345, %v341
        %v366 = vpack.c.b16 %v346, %v342
        %v367 = vpack.c.b16 %v351, %v347
        %v368 = vpack.c.b16 %v352, %v348
        %v369 = vpack.c.b16 %v353, %v349
        %v370 = vpack.c.b16 %v354, %v350
        %vm387 = vcmask 523264
        %v389 = vsel %vm387, %v306, 0
        %391 = vmatprep.subr.bf16.mxu0 %v356
        %392 = vmatpush1.bf16.msra.mxu0 %v355
        %393 = vmatprep.subr.bf16.mxu0 %v360
        %394 = vmatpush1.bf16.msra.mxu0 %v359
        %395 = vmatprep.subr.bf16.mxu0 %v364
        %396 = vmatpush1.bf16.msra.mxu0 %v363
        %397 = vmatprep.subr.bf16.mxu0 %v368
        %398 = vmatpush1.bf16.msra.mxu0 %v367
        %399 = vmatprep.subr.bf16.mxu0 0
        %400 = vmatpush1.bf16.msra.mxu0 0
        %401 = vmatprep.subr.bf16.mxu0 0
        %402 = vmatpush1.bf16.msra.mxu0 0
        %403 = vmatprep.subr.bf16.mxu0 0
        %404 = vmatpush1.bf16.msra.mxu0 0
        %405 = vmatprep.subr.bf16.mxu0 0
        %406 = vmatpush1.bf16.msra.mxu0 0
        %407 = vmatprep.subr.bf16.mxu0 0
        %408 = vmatpush1.bf16.msra.mxu0 0
        %409 = vmatprep.subr.bf16.mxu0 0
        %410 = vmatpush1.bf16.msra.mxu0 0
        %411 = vmatprep.subr.bf16.mxu0 0
        %412 = vmatpush1.bf16.msra.mxu0 0
        %413 = vmatprep.subr.bf16.mxu0 0
        %414 = vmatpush1.bf16.msra.mxu0 0
        %415 = vmatprep.subr.bf16.mxu0 0
        %416 = vmatpush1.bf16.msra.mxu0 0
        %417 = vmatprep.subr.bf16.mxu0 0
        %418 = vmatpush1.bf16.msra.mxu0 0
        %419 = vmatprep.subr.bf16.mxu0 0
        %420 = vmatpush1.bf16.msra.mxu0 0
        %421 = vmatprep.subr.bf16.mxu0 0
        %422 = vmatpush1.bf16.msra.mxu0 0
        %423 = vmatprep.mubr.bf16.mxu0 0
        %424 = vmatmul.mubr.bf16.gmra.mrb[0].mxu0 %v389
        %v425 = vpop.f32.mrb[0].mxu0
        %v426 = vadd.f32 %v295, %v425
        %v427 = vpop.f32.mrb[0].mxu0
        %v428 = vadd.f32 %v295, %v427
        %v429 = vpop.f32.mrb[0].mxu0
        %v430 = vadd.f32 %v300, %v429
        %v431 = vpop.f32.mrb[0].mxu0
        %v432 = vadd.f32 %v300, %v431
        %433 = vdwg.mxu0
        %434 = vmatprep.subr.bf16.mxu0 %v358
        %435 = vmatpush1.bf16.msra.mxu0 %v357
        %436 = vmatprep.subr.bf16.mxu0 %v362
        %437 = vmatpush1.bf16.msra.mxu0 %v361
        %438 = vmatprep.subr.bf16.mxu0 %v366
        %439 = vmatpush1.bf16.msra.mxu0 %v365
        %440 = vmatprep.subr.bf16.mxu0 %v370
        %441 = vmatpush1.bf16.msra.mxu0 %v369
        %442 = vmatprep.subr.bf16.mxu0 0
        %443 = vmatpush1.bf16.msra.mxu0 0
        %444 = vmatprep.subr.bf16.mxu0 0
        %445 = vmatpush1.bf16.msra.mxu0 0
        %446 = vmatprep.subr.bf16.mxu0 0
        %447 = vmatpush1.bf16.msra.mxu0 0
        %448 = vmatprep.subr.bf16.mxu0 0
        %449 = vmatpush1.bf16.msra.mxu0 0
        %450 = vmatprep.subr.bf16.mxu0 0
        %451 = vmatpush1.bf16.msra.mxu0 0
        %452 = vmatprep.subr.bf16.mxu0 0
        %453 = vmatpush1.bf16.msra.mxu0 0
        %454 = vmatprep.subr.bf16.mxu0 0
        %455 = vmatpush1.bf16.msra.mxu0 0
        %456 = vmatprep.subr.bf16.mxu0 0
        %457 = vmatpush1.bf16.msra.mxu0 0
        %458 = vmatprep.subr.bf16.mxu0 0
        %459 = vmatpush1.bf16.msra.mxu0 0
        %460 = vmatprep.subr.bf16.mxu0 0
        %461 = vmatpush1.bf16.msra.mxu0 0
        %462 = vmatprep.subr.bf16.mxu0 0
        %463 = vmatpush1.bf16.msra.mxu0 0
        %464 = vmatprep.subr.bf16.mxu0 0
        %465 = vmatpush1.bf16.msra.mxu0 0
        %466 = vmatprep.mubr.bf16.mxu0 0
        %467 = vmatmul.mubr.bf16.gmra.mrb[0].mxu0 %v389
        %v468 = vpop.f32.mrb[0].mxu0
        %v469 = vadd.f32 %v295, %v468
        %v470 = vpop.f32.mrb[0].mxu0
        %v471 = vadd.f32 %v295, %v470
        %v472 = vpop.f32.mrb[0].mxu0
        %v473 = vadd.f32 %v300, %v472
        %v474 = vpop.f32.mrb[0].mxu0
        %v475 = vadd.f32 %v300, %v474
        %476 = vdwg.mxu0
        %v477 = vmax.f32 %v426, 0.0
        %v478 = vmax.f32 %v428, 0.0
        %v479 = vmax.f32 %v469, 0.0
        %v480 = vmax.f32 %v471, 0.0
        %v481 = vmax.f32 %v430, 0.0
        %v482 = vmax.f32 %v432, 0.0
        %v483 = vmax.f32 %v473, 0.0
        %v484 = vmax.f32 %v475, 0.0
        %v485 = vld [vmem:[%s3] sm:$0xff]
        %v486 = vld [vmem:[%s3 + $0x8] sm:$0xff]
        %488 = vset.pattern.permute.xlu0 0
        %489 = vperm.xlu0 %488, %v485
        %v490 = vpop.permute.xlu0 %489
        %493 = vset.pattern.permute.xlu0 0
        %494 = vperm.xlu0 %493, %v486
        %v495 = vpop.permute.xlu0 %494
        %v497 = vmul.f32 %v477, %v490
        %v498 = vmul.f32 %v478, %v490
        %v499 = vmul.f32 %v479, %v490
        %v500 = vmul.f32 %v480, %v490
        %v501 = vmul.f32 %v481, %v495
        %v502 = vmul.f32 %v482, %v495
        %v503 = vmul.f32 %v483, %v495
        %v504 = vmul.f32 %v484, %v495
        %v505 = vld [vmem:[%s4] sm:$0xff]
        %v506 = vld [vmem:[%s4 + $0x8] sm:$0xff]
        %508 = vset.pattern.permute.xlu0 0
        %509 = vperm.xlu0 %508, %v505
        %v510 = vpop.permute.xlu0 %509
        %513 = vset.pattern.permute.xlu0 0
        %514 = vperm.xlu0 %513, %v506
        %v515 = vpop.permute.xlu0 %514
        %v517 = vadd.f32 %v497, %v510
        %v518 = vadd.f32 %v498, %v510
        %v519 = vadd.f32 %v499, %v510
        %v520 = vadd.f32 %v500, %v510
        %v521 = vadd.f32 %v501, %v515
        %v522 = vadd.f32 %v502, %v515
        %v523 = vadd.f32 %v503, %v515
        %v524 = vadd.f32 %v504, %v515
        %v525 = vmax.f32 %v517, 0.0
        %v526 = vmax.f32 %v518, 0.0
        %v527 = vmax.f32 %v519, 0.0
        %v528 = vmax.f32 %v520, 0.0
        %v529 = vmax.f32 %v521, 0.0
        %v530 = vmax.f32 %v522, 0.0
        %v531 = vmax.f32 %v523, 0.0
        %v532 = vmax.f32 %v524, 0.0
        %v533 = vpack.c.bf16 %v529, %v525
        %v534 = vpack.c.bf16 %v530, %v526
        %v535 = vpack.c.bf16 %v531, %v527
        %v536 = vpack.c.bf16 %v532, %v528
        %v541 = vunpack.c.l.b16 %v533
        %v542 = vunpack.c.l.b16 %v534
        %v543 = vunpack.c.l.b16 %v535
        %v544 = vunpack.c.l.b16 %v536
        %v545 = vunpack.c.h.b16 %v533
        %v546 = vunpack.c.h.b16 %v534
        %v547 = vunpack.c.h.b16 %v535
        %v548 = vunpack.c.h.b16 %v536
        %v549 = vpack.c.b16 %v542, %v541
        %v550 = vpack.c.b16 %v544, %v543
        %v551 = vpack.c.b16 %v546, %v545
        %v552 = vpack.c.b16 %v548, %v547
        %557 = vst [vmem:[%s268] sm:$0xff] %v549
        %558 = vst [vmem:[%s268 + $0x8] sm:$0xff] %v550
        %559 = vst [vmem:[%s268 + $0x10] sm:$0xff] %v551
        %560 = vst [vmem:[%s268 + $0x18] sm:$0xff] %v552
        %s561 = sand.u32 %s134, 1
        %s562 = sand.u32 %s134, 1
        %s563 = smul.addr %s562, 32
        %s564 = scalar_lea.vmem [#allocation3], %s563
        // Predicated region
        $region64: #{s3kai_resnet_forward.16} parent=58 // pred_check
          %p565 = pneg %p144
        $region65: #{s3kai_resnet_forward.16} parent=58 // pred_check_branch
          %567 = sbr.rel (%p565) target = $region67
        $region66: #{s3kai_resnet_forward.16} parent=58 // pred_region
          %s568 = smul.u32 4, %s16
          %s569 = smul.addr %s568, 4
          %s570 = scalar_lea.vmem %s5, %s569
          // Predicated region
          $region68: #{s3kai_resnet_forward.16} parent=66 // pred_check
            _
          $region69: #{s3kai_resnet_forward.16} parent=66 // pred_check_branch
            %572 = sbr.rel (0) target = $region71
          $region70: #{s3kai_resnet_forward.16} parent=66 // pred_region
            // Predicated region
            $region72: #{s3kai_resnet_forward.16} parent=70 // pred_check
              _
            $region73: #{s3kai_resnet_forward.16} parent=70 // pred_check_branch
              %574 = sbr.rel (0) target = $region75
            $region74: #{s3kai_resnet_forward.16} parent=70 // pred_region
              loop: start=0, step=1, limit=1
              $region76: #{s3kai_resnet_forward.16} parent=74 // loop_pre_header
                _
              $region77: #{s3kai_resnet_forward.16} parent=74 // loop_header
                %s576 = sphi 0, %s580
                %p577 = scmp.ge.s32.totalorder %s576, 1
                %s581 = sphi %s564, %s564
                %s582 = sphi %s570, %s570
              $region78: #{s3kai_resnet_forward.16} parent=74 // loop_header_branch
                %579 = sbr.rel (%p577) target = $region82
              $region79: #{s3kai_resnet_forward.16} parent=74 // loop_body
                %v583 = vld [vmem:[%s581] sm:$0xff]
                %584 = vst [vmem:[%s582] sm:$0xff] %v583
                %v585 = vld [vmem:[%s581 + $0x8] sm:$0xff]
                %586 = vst [vmem:[%s582 + $0x8] sm:$0xff] %v585
                %v587 = vld [vmem:[%s581 + $0x10] sm:$0xff]
                %588 = vst [vmem:[%s582 + $0x50] sm:$0xff] %v587
                %v589 = vld [vmem:[%s581 + $0x18] sm:$0xff]
                %590 = vst [vmem:[%s582 + $0x58] sm:$0xff] %v589
              $region80: #{s3kai_resnet_forward.16} parent=74 // loop_footer
                %s580 = sadd.s32 1, %s576
              $region81: #{s3kai_resnet_forward.16} parent=74 // loop_footer_branch
                %575 = sbr.rel target = $region77
              $region82: #{s3kai_resnet_forward.16} parent=74 // loop_exit
                _
            $region75: #{s3kai_resnet_forward.16} parent=70 // pred_fallthru
              _
            // Predicated region
            $region83: #{s3kai_resnet_forward.16} parent=70 // pred_check
              _
            $region84: #{s3kai_resnet_forward.16} parent=70 // pred_check_branch
              %592 = sbr.rel target = $region86
            $region85: #{s3kai_resnet_forward.16} parent=70 // pred_region
              _
            $region86: #{s3kai_resnet_forward.16} parent=70 // pred_fallthru
              _
          $region71: #{s3kai_resnet_forward.16} parent=66 // pred_fallthru
            _
          %593 = vnop
        $region67: #{s3kai_resnet_forward.16} parent=58 // pred_fallthru
          _
      $region59: #{s3kai_resnet_forward.16} parent=5 // pred_fallthru
        _
      %p594 = scmp.le.s32.totalorder 2, %s11
      // Predicated region
      $region87: #{s3kai_resnet_forward.16} parent=5 // pred_check
        %p595 = pneg %p594
      $region88: #{s3kai_resnet_forward.16} parent=5 // pred_check_branch
        %597 = sbr.rel (%p595) target = $region90
      $region89: #{s3kai_resnet_forward.16} parent=5 // pred_region
        %s598 = ssub.s32 %s11, 2
        // Predicated region
        $region91: #{s3kai_resnet_forward.16} parent=89 // pred_check
          %p599 = pneg %p150
        $region92: #{s3kai_resnet_forward.16} parent=89 // pred_check_branch
          %601 = sbr.rel (%p599) target = $region94
        $region93: #{s3kai_resnet_forward.16} parent=89 // pred_region
          %s602 = sand.u32 %s135, 1
          %s603 = sand.u32 %s135, 1
          %s604 = smul.addr %s603, 32
          %s605 = scalar_lea.vmem [#allocation3], %s604
        $region94: #{s3kai_resnet_forward.16} parent=89 // pred_fallthru
          _
      $region90: #{s3kai_resnet_forward.16} parent=5 // pred_fallthru
        _
    $region6: #{s3kai_resnet_forward.16} parent=1 // loop_footer
      %s15 = sadd.s32 1, %s11
    $region7: #{s3kai_resnet_forward.16} parent=1 // loop_footer_branch
      %10 = sbr.rel target = $region3
    $region8: #{s3kai_resnet_forward.16} parent=1 // loop_exit
      _

// kernel: s3kai_resnet_forward.17
$region0: #{s3kai_resnet_forward.17}
  #allocation0 [shape = 'u32[]', space=smem, size = 0x4, offset = 0x4, fixed_abs, tag = 'smem constant byte address 0x4 - core index']
  #allocation1 [shape = 'u32[144,128]{1,0:T(1,128)}', space=vmem, size = 0x12000, scoped, tag = 'internal scratch']
  %s0 = inlined_call_operand.vmem [shape: bf16[16,64], index: 0, kind: input, shape index: {}]
  %s1 = inlined_call_operand.vmem [shape: bf16[64,2560], index: 1, kind: input, shape index: {}]
  %s2 = inlined_call_operand.vmem [shape: f32[16,1], index: 2, kind: input, shape index: {}]
  %s3 = inlined_call_operand.vmem [shape: bf16[16,2560], index: 3, kind: output, shape index: {}]
  %s4 = sld [smem:[#allocation0]]
  $region87: #{s3kai_resnet_forward.17} parent=0
    _
  %s6 = ssub.s32 1, %s4
  %s7 = scalar_select 0, %s6, %s4
  $region1: #{s3kai_resnet_forward.17} parent=0
    #allocation2 [shape = 'u8[131072]{0}', space=vmem, size = 0x20000, scoped, tag = 'input window, operand 1']
    #allocation3 [shape = 'u8[32768]{0}', space=vmem, size = 0x8000, scoped, tag = 'output window, operand 0']
    loop: start=0, step=1, limit=7
    $region2: #{s3kai_resnet_forward.17} parent=1 // loop_pre_header
      _
    $region3: #{s3kai_resnet_forward.17} parent=1 // loop_header
      %s9 = sphi 0, %s13
      %p10 = scmp.ge.s32.totalorder %s9, 7
      %s17 = sphi 0, %s17
      %s19 = sphi 0, %s17
      %s20 = sphi 0, %s19
      %s34 = sphi 0, %s20
      %s40 = sphi 0, %s42
      %s43 = sphi 0, %s40
      %s44 = sphi 0, %s43
      %s60 = sphi 0, %s44
      %s64 = sphi 0, %s64
      %s66 = sphi 0, %s64
      %s67 = sphi 0, %s66
      %s81 = sphi 0, %s67
      %s87 = sphi 0, %s89
      %s90 = sphi 0, %s87
      %s91 = sphi 0, %s90
      %s107 = sphi 0, %s91
    $region4: #{s3kai_resnet_forward.17} parent=1 // loop_header_branch
      %12 = sbr.rel (%p10) target = $region8
    $region5: #{s3kai_resnet_forward.17} parent=1 // loop_body
      %s14 = ssub.s32 %s9, 1
      %s15 = ssub.s32 %s9, 2
      %s16 = sadd.s32 %s9, 1
      %s18 = sadd.s32 %s17, 1
      %p21 = scmp.eq.s32.totalorder %s9, 4
      %p22 = scmp.ne.s32.totalorder %s17, %s19
      %p23 = scmp.eq.s32.totalorder %s9, 0
      %p24 = por %p22, %p23
      %p25 = scmp.ne.s32.totalorder %s17, %s19
      %p26 = scmp.eq.s32.totalorder %s14, 4
      %p27 = por %p25, %p26
      %p28 = scmp.ne.s32.totalorder %s19, %s20
      %p29 = scmp.eq.s32.totalorder %s14, 0
      %p30 = por %p28, %p29
      %p31 = scmp.ne.s32.totalorder %s19, %s20
      %p32 = scmp.eq.s32.totalorder %s15, 4
      %p33 = por %p31, %p32
      %p35 = scmp.ne.s32.totalorder %s20, %s34
      %p36 = scmp.eq.s32.totalorder %s15, 0
      %p37 = por %p35, %p36
      %s38 = ssub.s32 %s9, %s16
      %p39 = scmp.eq.s32.totalorder %s38, 0
      %s41 = sadd.s32 %s40, 1
      %s42 = scalar_select %p39, %s40, %s41
      %p45 = pneg %p39
      %p46 = scmp.eq.s32.totalorder %s9, 4
      %p47 = por %p45, %p46
      %p48 = scmp.ne.s32.totalorder %s40, %s43
      %p49 = scmp.eq.s32.totalorder %s9, 0
      %p50 = por %p48, %p49
      %p51 = scmp.ne.s32.totalorder %s40, %s43
      %p52 = scmp.eq.s32.totalorder %s14, 4
      %p53 = por %p51, %p52
      %p54 = scmp.ne.s32.totalorder %s43, %s44
      %p55 = scmp.eq.s32.totalorder %s14, 0
      %p56 = por %p54, %p55
      %p57 = scmp.ne.s32.totalorder %s43, %s44
      %p58 = scmp.eq.s32.totalorder %s15, 4
      %p59 = por %p57, %p58
      %p61 = scmp.ne.s32.totalorder %s44, %s60
      %p62 = scmp.eq.s32.totalorder %s15, 0
      %p63 = por %p61, %p62
      %s65 = sadd.s32 %s64, 1
      %p68 = scmp.eq.s32.totalorder %s9, 4
      %p69 = scmp.ne.s32.totalorder %s64, %s66
      %p70 = scmp.eq.s32.totalorder %s9, 0
      %p71 = por %p69, %p70
      %p72 = scmp.ne.s32.totalorder %s64, %s66
      %p73 = scmp.eq.s32.totalorder %s14, 4
      %p74 = por %p72, %p73
      %p75 = scmp.ne.s32.totalorder %s66, %s67
      %p76 = scmp.eq.s32.totalorder %s14, 0
      %p77 = por %p75, %p76
      %p78 = scmp.ne.s32.totalorder %s66, %s67
      %p79 = scmp.eq.s32.totalorder %s15, 4
      %p80 = por %p78, %p79
      %p82 = scmp.ne.s32.totalorder %s67, %s81
      %p83 = scmp.eq.s32.totalorder %s15, 0
      %p84 = por %p82, %p83
      %s85 = ssub.s32 %s9, %s16
      %p86 = scmp.eq.s32.totalorder %s85, 0
      %s88 = sadd.s32 %s87, 1
      %s89 = scalar_select %p86, %s87, %s88
      %p92 = pneg %p86
      %p93 = scmp.eq.s32.totalorder %s9, 4
      %p94 = por %p92, %p93
      %p95 = scmp.ne.s32.totalorder %s87, %s90
      %p96 = scmp.eq.s32.totalorder %s9, 0
      %p97 = por %p95, %p96
      %p98 = scmp.ne.s32.totalorder %s87, %s90
      %p99 = scmp.eq.s32.totalorder %s14, 4
      %p100 = por %p98, %p99
      %p101 = scmp.ne.s32.totalorder %s90, %s91
      %p102 = scmp.eq.s32.totalorder %s14, 0
      %p103 = por %p101, %p102
      %p104 = scmp.ne.s32.totalorder %s90, %s91
      %p105 = scmp.eq.s32.totalorder %s15, 4
      %p106 = por %p104, %p105
      %p108 = scmp.ne.s32.totalorder %s91, %s107
      %p109 = scmp.eq.s32.totalorder %s15, 0
      %p110 = por %p108, %p109
      %p111 = scmp.le.s32.totalorder 1, %s9
      %p112 = scmp.lt.s32.totalorder %s9, 6
      %p113 = pnand %p111, %p112
      %p114 = pneg %p113
      // Predicated region
      $region9: #{s3kai_resnet_forward.17} parent=5 // pred_check
        _
      $region10: #{s3kai_resnet_forward.17} parent=5 // pred_check_branch
        %116 = sbr.rel (%p113) target = $region12
      $region11: #{s3kai_resnet_forward.17} parent=5 // pred_region
        %s117 = ssub.s32 %s9, 1
        // Predicated region
        $region13: #{s3kai_resnet_forward.17} parent=11 // pred_check
          %p118 = pneg %p30
        $region14: #{s3kai_resnet_forward.17} parent=11 // pred_check_branch
          %120 = sbr.rel (%p118) target = $region16
        $region15: #{s3kai_resnet_forward.17} parent=11 // pred_region
          _
        $region16: #{s3kai_resnet_forward.17} parent=11 // pred_fallthru
          _
        // Predicated region
        $region17: #{s3kai_resnet_forward.17} parent=11 // pred_check
          %p121 = pneg %p77
        $region18: #{s3kai_resnet_forward.17} parent=11 // pred_check_branch
          %123 = sbr.rel (%p121) target = $region20
        $region19: #{s3kai_resnet_forward.17} parent=11 // pred_region
          _
        $region20: #{s3kai_resnet_forward.17} parent=11 // pred_fallthru
          _
      $region12: #{s3kai_resnet_forward.17} parent=5 // pred_fallthru
        _
      %p124 = scmp.lt.s32.totalorder %s9, 5
      // Predicated region
      $region21: #{s3kai_resnet_forward.17} parent=5 // pred_check
        %p125 = pneg %p124
      $region22: #{s3kai_resnet_forward.17} parent=5 // pred_check_branch
        %127 = sbr.rel (%p125) target = $region24
      $region23: #{s3kai_resnet_forward.17} parent=5 // pred_region
        // Predicated region
        $region25: #{s3kai_resnet_forward.17} parent=23 // pred_check
          %p128 = pneg %p50
        $region26: #{s3kai_resnet_forward.17} parent=23 // pred_check_branch
          %130 = sbr.rel (%p128) target = $region28
        $region27: #{s3kai_resnet_forward.17} parent=23 // pred_region
          %s131 = sand.u32 %s40, 1
          %s132 = sand.u32 %s40, 1
          %s133 = smul.addr %s132, 128
          %s134 = scalar_lea.vmem [#allocation2], %s133
          %s135 = smul.u32 4, %s9
          %s136 = smul.addr %s135, 4
          %s137 = scalar_lea.vmem %s1, %s136
          // Predicated region
          $region29: #{s3kai_resnet_forward.17} parent=27 // pred_check
            _
          $region30: #{s3kai_resnet_forward.17} parent=27 // pred_check_branch
            %139 = sbr.rel (0) target = $region32
          $region31: #{s3kai_resnet_forward.17} parent=27 // pred_region
            // Predicated region
            $region33: #{s3kai_resnet_forward.17} parent=31 // pred_check
              _
            $region34: #{s3kai_resnet_forward.17} parent=31 // pred_check_branch
              %141 = sbr.rel (0) target = $region36
            $region35: #{s3kai_resnet_forward.17} parent=31 // pred_region
              loop: start=0, step=1, limit=1
              $region37: #{s3kai_resnet_forward.17} parent=35 // loop_pre_header
                _
              $region38: #{s3kai_resnet_forward.17} parent=35 // loop_header
                %s143 = sphi 0, %s147
                %p144 = scmp.ge.s32.totalorder %s143, 1
                %s148 = sphi %s137, %s137
                %s149 = sphi %s134, %s134
              $region39: #{s3kai_resnet_forward.17} parent=35 // loop_header_branch
                %146 = sbr.rel (%p144) target = $region43
              $region40: #{s3kai_resnet_forward.17} parent=35 // loop_body
                %v150 = vld [vmem:[%s148] sm:$0xff]
                %151 = vst [vmem:[%s149] sm:$0xff] %v150
                %v152 = vld [vmem:[%s148 + $0x8] sm:$0xff]
                %153 = vst [vmem:[%s149 + $0x8] sm:$0xff] %v152
                %v154 = vld [vmem:[%s148 + $0x50] sm:$0xff]
                %155 = vst [vmem:[%s149 + $0x10] sm:$0xff] %v154
                %v156 = vld [vmem:[%s148 + $0x58] sm:$0xff]
                %157 = vst [vmem:[%s149 + $0x18] sm:$0xff] %v156
                %v158 = vld [vmem:[%s148 + $0xa0] sm:$0xff]
                %159 = vst [vmem:[%s149 + $0x20] sm:$0xff] %v158
                %v160 = vld [vmem:[%s148 + $0xa8] sm:$0xff]
                %161 = vst [vmem:[%s149 + $0x28] sm:$0xff] %v160
                %v162 = vld [vmem:[%s148 + $0xf0] sm:$0xff]
                %163 = vst [vmem:[%s149 + $0x30] sm:$0xff] %v162
                %v164 = vld [vmem:[%s148 + $0xf8] sm:$0xff]
                %165 = vst [vmem:[%s149 + $0x38] sm:$0xff] %v164
                %v166 = vld [vmem:[%s148 + $0x140] sm:$0xff]
                %167 = vst [vmem:[%s149 + $0x40] sm:$0xff] %v166
                %v168 = vld [vmem:[%s148 + $0x148] sm:$0xff]
                %169 = vst [vmem:[%s149 + $0x48] sm:$0xff] %v168
                %v170 = vld [vmem:[%s148 + $0x190] sm:$0xff]
                %171 = vst [vmem:[%s149 + $0x50] sm:$0xff] %v170
                %v172 = vld [vmem:[%s148 + $0x198] sm:$0xff]
                %173 = vst [vmem:[%s149 + $0x58] sm:$0xff] %v172
                %v174 = vld [vmem:[%s148 + $0x1e0] sm:$0xff]
                %175 = vst [vmem:[%s149 + $0x60] sm:$0xff] %v174
                %v176 = vld [vmem:[%s148 + $0x1e8] sm:$0xff]
                %177 = vst [vmem:[%s149 + $0x68] sm:$0xff] %v176
                %v178 = vld [vmem:[%s148 + $0x230] sm:$0xff]
                %179 = vst [vmem:[%s149 + $0x70] sm:$0xff] %v178
                %v180 = vld [vmem:[%s148 + $0x238] sm:$0xff]
                %181 = vst [vmem:[%s149 + $0x78] sm:$0xff] %v180
              $region41: #{s3kai_resnet_forward.17} parent=35 // loop_footer
                %s147 = sadd.s32 1, %s143
              $region42: #{s3kai_resnet_forward.17} parent=35 // loop_footer_branch
                %142 = sbr.rel target = $region38
              $region43: #{s3kai_resnet_forward.17} parent=35 // loop_exit
                _
            $region36: #{s3kai_resnet_forward.17} parent=31 // pred_fallthru
              _
            // Predicated region
            $region44: #{s3kai_resnet_forward.17} parent=31 // pred_check
              _
            $region45: #{s3kai_resnet_forward.17} parent=31 // pred_check_branch
              %183 = sbr.rel target = $region47
            $region46: #{s3kai_resnet_forward.17} parent=31 // pred_region
              _
            $region47: #{s3kai_resnet_forward.17} parent=31 // pred_fallthru
              _
          $region32: #{s3kai_resnet_forward.17} parent=27 // pred_fallthru
            _
          %184 = vnop
        $region28: #{s3kai_resnet_forward.17} parent=23 // pred_fallthru
          _
      $region24: #{s3kai_resnet_forward.17} parent=5 // pred_fallthru
        _
      %p185 = scmp.le.s32.totalorder 1, %s9
      %p186 = scmp.lt.s32.totalorder %s9, 6
      %p187 = pnand %p185, %p186
      %p188 = pneg %p187
      // Predicated region
      $region48: #{s3kai_resnet_forward.17} parent=5 // pred_check
        _
      $region49: #{s3kai_resnet_forward.17} parent=5 // pred_check_branch
        %190 = sbr.rel (%p187) target = $region51
      $region50: #{s3kai_resnet_forward.17} parent=5 // pred_region
        %s191 = ssub.s32 %s9, 1
        %s192 = sand.u32 %s43, 1
        %s193 = sand.u32 %s43, 1
        %s194 = smul.addr %s193, 128
        %s195 = scalar_lea.vmem [#allocation2], %s194
        // Predicated region
        $region52: #{s3kai_resnet_forward.17} parent=50 // pred_check
          %p196 = pneg %p56
        $region53: #{s3kai_resnet_forward.17} parent=50 // pred_check_branch
          %198 = sbr.rel (%p196) target = $region55
        $region54: #{s3kai_resnet_forward.17} parent=50 // pred_region
          _
        $region55: #{s3kai_resnet_forward.17} parent=50 // pred_fallthru
          _
        %p199 = pneg %p30
        %p200 = pneg %p27
        %s201 = sand.u32 %s43, 1
        %s202 = sand.u32 %s43, 1
        %s203 = smul.addr %s202, 128
        %s204 = scalar_lea.vmem [#allocation2], %s203
        %p205 = pneg %p56
        %p206 = pneg %p53
        %p207 = pneg %p77
        %p208 = pneg %p74
        %p209 = pneg %p103
        %p210 = pneg %p100
        %s211 = sand.u32 %s90, 1
        %s212 = sand.u32 %s90, 1
        %s213 = smul.addr %s212, 32
        %s214 = scalar_lea.vmem [#allocation3], %s213
        %s215 = smul.u32 4, %s14
        %s216 = smul.u32 4, %s14
        %v218 = vld [vmem:[%s0] sm:$0xf]
        %v219 = vld [vmem:[%s0 + $0x4] sm:$0xf]
        %v220 = vld [vmem:[%s195] sm:$0xff]
        %v221 = vld [vmem:[%s195 + $0x8] sm:$0xff]
        %v222 = vld [vmem:[%s195 + $0x10] sm:$0xff]
        %v223 = vld [vmem:[%s195 + $0x18] sm:$0xff]
        %v224 = vld [vmem:[%s195 + $0x20] sm:$0xff]
        %v225 = vld [vmem:[%s195 + $0x28] sm:$0xff]
        %v226 = vld [vmem:[%s195 + $0x30] sm:$0xff]
        %v227 = vld [vmem:[%s195 + $0x38] sm:$0xff]
        %v228 = vld [vmem:[%s195 + $0x40] sm:$0xff]
        %v229 = vld [vmem:[%s195 + $0x48] sm:$0xff]
        %v230 = vld [vmem:[%s195 + $0x50] sm:$0xff]
        %v231 = vld [vmem:[%s195 + $0x58] sm:$0xff]
        %v232 = vld [vmem:[%s195 + $0x60] sm:$0xff]
        %v233 = vld [vmem:[%s195 + $0x68] sm:$0xff]
        %v234 = vld [vmem:[%s195 + $0x70] sm:$0xff]
        %v235 = vld [vmem:[%s195 + $0x78] sm:$0xff]
        %v236 = vld [vmem:[%s2] sm:$0xff]
        %v237 = vld [vmem:[%s2 + $0x8] sm:$0xff]
        %239 = vset.pattern.permute.xlu0 0
        %240 = vperm.xlu0 %239, %v236
        %v241 = vpop.permute.xlu0 %240
        %244 = vset.pattern.permute.xlu0 0
        %245 = vperm.xlu0 %244, %v237
        %v246 = vpop.permute.xlu0 %245
        %v250 = vunpack.c.l.b16 %v218
        %v251 = vunpack.c.l.b16 %v219
        %v252 = vpack.c.b16 %v251, %v250
        %v269 = vunpack.c.l.b16 %v220
        %v270 = vunpack.c.h.b16 %v220
        %v271 = vunpack.c.l.b16 %v221
        %v272 = vunpack.c.h.b16 %v221
        %v273 = vunpack.c.l.b16 %v222
        %v274 = vunpack.c.h.b16 %v222
        %v275 = vunpack.c.l.b16 %v223
        %v276 = vunpack.c.h.b16 %v223
        %v277 = vunpack.c.l.b16 %v224
        %v278 = vunpack.c.h.b16 %v224
        %v279 = vunpack.c.l.b16 %v225
        %v280 = vunpack.c.h.b16 %v225
        %v281 = vunpack.c.l.b16 %v226
        %v282 = vunpack.c.h.b16 %v226
        %v283 = vunpack.c.l.b16 %v227
        %v284 = vunpack.c.h.b16 %v227
        %v285 = vunpack.c.l.b16 %v228
        %v286 = vunpack.c.h.b16 %v228
        %v287 = vunpack.c.l.b16 %v229
        %v288 = vunpack.c.h.b16 %v229
        %v289 = vunpack.c.l.b16 %v230
        %v290 = vunpack.c.h.b16 %v230
        %v291 = vunpack.c.l.b16 %v231
        %v292 = vunpack.c.h.b16 %v231
        %v293 = vunpack.c.l.b16 %v232
        %v294 = vunpack.c.h.b16 %v232
        %v295 = vunpack.c.l.b16 %v233
        %v296 = vunpack.c.h.b16 %v233
        %v297 = vunpack.c.l.b16 %v234
        %v298 = vunpack.c.h.b16 %v234
        %v299 = vunpack.c.l.b16 %v235
        %v300 = vunpack.c.h.b16 %v235
        %v301 = vpack.c.b16 %v273, %v269
        %v302 = vpack.c.b16 %v274, %v270
        %v303 = vpack.c.b16 %v275, %v271
        %v304 = vpack.c.b16 %v276, %v272
        %v305 = vpack.c.b16 %v281, %v277
        %v306 = vpack.c.b16 %v282, %v278
        %v307 = vpack.c.b16 %v283, %v279
        %v308 = vpack.c.b16 %v284, %v280
        %v309 = vpack.c.b16 %v289, %v285
        %v310 = vpack.c.b16 %v290, %v286
        %v311 = vpack.c.b16 %v291, %v287
        %v312 = vpack.c.b16 %v292, %v288
        %v313 = vpack.c.b16 %v297, %v293
        %v314 = vpack.c.b16 %v298, %v294
        %v315 = vpack.c.b16 %v299, %v295
        %v316 = vpack.c.b16 %v300, %v296
        %vm333 = vcmask 523264
        %v335 = vsel %vm333, %v252, 0
        %337 = vmatprep.subr.bf16.mxu0 %v302
        %338 = vmatpush1.bf16.msra.mxu0 %v301
        %339 = vmatprep.subr.bf16.mxu0 %v306
        %340 = vmatpush1.bf16.msra.mxu0 %v305
        %341 = vmatprep.subr.bf16.mxu0 %v310
        %342 = vmatpush1.bf16.msra.mxu0 %v309
        %343 = vmatprep.subr.bf16.mxu0 %v314
        %344 = vmatpush1.bf16.msra.mxu0 %v313
        %345 = vmatprep.subr.bf16.mxu0 0
        %346 = vmatpush1.bf16.msra.mxu0 0
        %347 = vmatprep.subr.bf16.mxu0 0
        %348 = vmatpush1.bf16.msra.mxu0 0
        %349 = vmatprep.subr.bf16.mxu0 0
        %350 = vmatpush1.bf16.msra.mxu0 0
        %351 = vmatprep.subr.bf16.mxu0 0
        %352 = vmatpush1.bf16.msra.mxu0 0
        %353 = vmatprep.subr.bf16.mxu0 0
        %354 = vmatpush1.bf16.msra.mxu0 0
        %355 = vmatprep.subr.bf16.mxu0 0
        %356 = vmatpush1.bf16.msra.mxu0 0
        %357 = vmatprep.subr.bf16.mxu0 0
        %358 = vmatpush1.bf16.msra.mxu0 0
        %359 = vmatprep.subr.bf16.mxu0 0
        %360 = vmatpush1.bf16.msra.mxu0 0
        %361 = vmatprep.subr.bf16.mxu0 0
        %362 = vmatpush1.bf16.msra.mxu0 0
        %363 = vmatprep.subr.bf16.mxu0 0
        %364 = vmatpush1.bf16.msra.mxu0 0
        %365 = vmatprep.subr.bf16.mxu0 0
        %366 = vmatpush1.bf16.msra.mxu0 0
        %367 = vmatprep.subr.bf16.mxu0 0
        %368 = vmatpush1.bf16.msra.mxu0 0
        %369 = vmatprep.mubr.bf16.mxu0 0
        %370 = vmatmul.mubr.bf16.gmra.mrb[0].mxu0 %v335
        %v371 = vpop.f32.mrb[0].mxu0
        %v372 = vadd.f32 %v241, %v371
        %v373 = vpop.f32.mrb[0].mxu0
        %v374 = vadd.f32 %v241, %v373
        %v375 = vpop.f32.mrb[0].mxu0
        %v376 = vadd.f32 %v246, %v375
        %v377 = vpop.f32.mrb[0].mxu0
        %v378 = vadd.f32 %v246, %v377
        %379 = vdwg.mxu0
        %380 = vmatprep.subr.bf16.mxu0 %v304
        %381 = vmatpush1.bf16.msra.mxu0 %v303
        %382 = vmatprep.subr.bf16.mxu0 %v308
        %383 = vmatpush1.bf16.msra.mxu0 %v307
        %384 = vmatprep.subr.bf16.mxu0 %v312
        %385 = vmatpush1.bf16.msra.mxu0 %v311
        %386 = vmatprep.subr.bf16.mxu0 %v316
        %387 = vmatpush1.bf16.msra.mxu0 %v315
        %388 = vmatprep.subr.bf16.mxu0 0
        %389 = vmatpush1.bf16.msra.mxu0 0
        %390 = vmatprep.subr.bf16.mxu0 0
        %391 = vmatpush1.bf16.msra.mxu0 0
        %392 = vmatprep.subr.bf16.mxu0 0
        %393 = vmatpush1.bf16.msra.mxu0 0
        %394 = vmatprep.subr.bf16.mxu0 0
        %395 = vmatpush1.bf16.msra.mxu0 0
        %396 = vmatprep.subr.bf16.mxu0 0
        %397 = vmatpush1.bf16.msra.mxu0 0
        %398 = vmatprep.subr.bf16.mxu0 0
        %399 = vmatpush1.bf16.msra.mxu0 0
        %400 = vmatprep.subr.bf16.mxu0 0
        %401 = vmatpush1.bf16.msra.mxu0 0
        %402 = vmatprep.subr.bf16.mxu0 0
        %403 = vmatpush1.bf16.msra.mxu0 0
        %404 = vmatprep.subr.bf16.mxu0 0
        %405 = vmatpush1.bf16.msra.mxu0 0
        %406 = vmatprep.subr.bf16.mxu0 0
        %407 = vmatpush1.bf16.msra.mxu0 0
        %408 = vmatprep.subr.bf16.mxu0 0
        %409 = vmatpush1.bf16.msra.mxu0 0
        %410 = vmatprep.subr.bf16.mxu0 0
        %411 = vmatpush1.bf16.msra.mxu0 0
        %412 = vmatprep.mubr.bf16.mxu0 0
        %413 = vmatmul.mubr.bf16.gmra.mrb[0].mxu0 %v335
        %v414 = vpop.f32.mrb[0].mxu0
        %v415 = vadd.f32 %v241, %v414
        %v416 = vpop.f32.mrb[0].mxu0
        %v417 = vadd.f32 %v241, %v416
        %v418 = vpop.f32.mrb[0].mxu0
        %v419 = vadd.f32 %v246, %v418
        %v420 = vpop.f32.mrb[0].mxu0
        %v421 = vadd.f32 %v246, %v420
        %422 = vdwg.mxu0
        %v423 = vpack.c.bf16 %v376, %v372
        %v424 = vpack.c.bf16 %v378, %v374
        %v425 = vpack.c.bf16 %v419, %v415
        %v426 = vpack.c.bf16 %v421, %v417
        %v431 = vunpack.c.l.b16 %v423
        %v432 = vunpack.c.l.b16 %v424
        %v433 = vunpack.c.l.b16 %v425
        %v434 = vunpack.c.l.b16 %v426
        %v435 = vunpack.c.h.b16 %v423
        %v436 = vunpack.c.h.b16 %v424
        %v437 = vunpack.c.h.b16 %v425
        %v438 = vunpack.c.h.b16 %v426
        %v439 = vpack.c.b16 %v432, %v431
        %v440 = vpack.c.b16 %v434, %v433
        %v441 = vpack.c.b16 %v436, %v435
        %v442 = vpack.c.b16 %v438, %v437
        %447 = vst [vmem:[%s214] sm:$0xff] %v439
        %448 = vst [vmem:[%s214 + $0x8] sm:$0xff] %v440
        %449 = vst [vmem:[%s214 + $0x10] sm:$0xff] %v441
        %450 = vst [vmem:[%s214 + $0x18] sm:$0xff] %v442
        %s451 = sand.u32 %s90, 1
        %s452 = sand.u32 %s90, 1
        %s453 = smul.addr %s452, 32
        %s454 = scalar_lea.vmem [#allocation3], %s453
        // Predicated region
        $region56: #{s3kai_resnet_forward.17} parent=50 // pred_check
          %p455 = pneg %p100
        $region57: #{s3kai_resnet_forward.17} parent=50 // pred_check_branch
          %457 = sbr.rel (%p455) target = $region59
        $region58: #{s3kai_resnet_forward.17} parent=50 // pred_region
          %s458 = smul.u32 4, %s14
          %s459 = smul.addr %s458, 4
          %s460 = scalar_lea.vmem %s3, %s459
          // Predicated region
          $region60: #{s3kai_resnet_forward.17} parent=58 // pred_check
            _
          $region61: #{s3kai_resnet_forward.17} parent=58 // pred_check_branch
            %462 = sbr.rel (0) target = $region63
          $region62: #{s3kai_resnet_forward.17} parent=58 // pred_region
            // Predicated region
            $region64: #{s3kai_resnet_forward.17} parent=62 // pred_check
              _
            $region65: #{s3kai_resnet_forward.17} parent=62 // pred_check_branch
              %464 = sbr.rel (0) target = $region67
            $region66: #{s3kai_resnet_forward.17} parent=62 // pred_region
              loop: start=0, step=1, limit=1
              $region68: #{s3kai_resnet_forward.17} parent=66 // loop_pre_header
                _
              $region69: #{s3kai_resnet_forward.17} parent=66 // loop_header
                %s466 = sphi 0, %s470
                %p467 = scmp.ge.s32.totalorder %s466, 1
                %s471 = sphi %s454, %s454
                %s472 = sphi %s460, %s460
              $region70: #{s3kai_resnet_forward.17} parent=66 // loop_header_branch
                %469 = sbr.rel (%p467) target = $region74
              $region71: #{s3kai_resnet_forward.17} parent=66 // loop_body
                %v473 = vld [vmem:[%s471] sm:$0xff]
                %474 = vst [vmem:[%s472] sm:$0xff] %v473
                %v475 = vld [vmem:[%s471 + $0x8] sm:$0xff]
                %476 = vst [vmem:[%s472 + $0x8] sm:$0xff] %v475
                %v477 = vld [vmem:[%s471 + $0x10] sm:$0xff]
                %478 = vst [vmem:[%s472 + $0x50] sm:$0xff] %v477
                %v479 = vld [vmem:[%s471 + $0x18] sm:$0xff]
                %480 = vst [vmem:[%s472 + $0x58] sm:$0xff] %v479
              $region72: #{s3kai_resnet_forward.17} parent=66 // loop_footer
                %s470 = sadd.s32 1, %s466
              $region73: #{s3kai_resnet_forward.17} parent=66 // loop_footer_branch
                %465 = sbr.rel target = $region69
              $region74: #{s3kai_resnet_forward.17} parent=66 // loop_exit
                _
            $region67: #{s3kai_resnet_forward.17} parent=62 // pred_fallthru
              _
            // Predicated region
            $region75: #{s3kai_resnet_forward.17} parent=62 // pred_check
              _
            $region76: #{s3kai_resnet_forward.17} parent=62 // pred_check_branch
              %482 = sbr.rel target = $region78
            $region77: #{s3kai_resnet_forward.17} parent=62 // pred_region
              _
            $region78: #{s3kai_resnet_forward.17} parent=62 // pred_fallthru
              _
          $region63: #{s3kai_resnet_forward.17} parent=58 // pred_fallthru
            _
          %483 = vnop
        $region59: #{s3kai_resnet_forward.17} parent=50 // pred_fallthru
          _
      $region51: #{s3kai_resnet_forward.17} parent=5 // pred_fallthru
        _
      %p484 = scmp.le.s32.totalorder 2, %s9
      // Predicated region
      $region79: #{s3kai_resnet_forward.17} parent=5 // pred_check
        %p485 = pneg %p484
      $region80: #{s3kai_resnet_forward.17} parent=5 // pred_check_branch
        %487 = sbr.rel (%p485) target = $region82
      $region81: #{s3kai_resnet_forward.17} parent=5 // pred_region
        %s488 = ssub.s32 %s9, 2
        // Predicated region
        $region83: #{s3kai_resnet_forward.17} parent=81 // pred_check
          %p489 = pneg %p106
        $region84: #{s3kai_resnet_forward.17} parent=81 // pred_check_branch
          %491 = sbr.rel (%p489) target = $region86
        $region85: #{s3kai_resnet_forward.17} parent=81 // pred_region
          %s492 = sand.u32 %s91, 1
          %s493 = sand.u32 %s91, 1
          %s494 = smul.addr %s493, 32
          %s495 = scalar_lea.vmem [#allocation3], %s494
        $region86: #{s3kai_resnet_forward.17} parent=81 // pred_fallthru
          _
      $region82: #{s3kai_resnet_forward.17} parent=5 // pred_fallthru
        _
    $region6: #{s3kai_resnet_forward.17} parent=1 // loop_footer
      %s13 = sadd.s32 1, %s9
    $region7: #{s3kai_resnet_forward.17} parent=1 // loop_footer_branch
      %8 = sbr.rel target = $region3
    $region8: #{s3kai_resnet_forward.17} parent=1 // loop_exit
      _

// kernel: reverse
$region0: #{reverse}
  %s0 = inlined_call_operand.vmem [shape: f32[1,1,3,3], index: 0, kind: input, shape index: {}]
  %s1 = inlined_call_operand.vmem [shape: bf16[1,1,3,3], index: 1, kind: output, shape index: {}]
  %v2 = vlaneseq
  %v3 = vsub.s32 2, %v2
  %4 = vset.pattern.permute.xlu0 %v3
  $region1: #{reverse} parent=0
    #allocation0 [shape = 'u8[12288]{0}', space=vmem, size = 0x3000, scoped, tag = 'operand span for operand 0']
    #allocation1 [shape = 'u8[1536]{0}', space=vmem, size = 0x800, scoped, tag = 'packed  for operand 0']
    #allocation2 [shape = 'u8[12288]{0}', space=vmem, size = 0x3000, scoped, tag = 'operand span for operand 1']
    #allocation3 [shape = 'u8[1536]{0}', space=vmem, size = 0x800, scoped, tag = 'packed  for operand 1']
    // Predicated region
    $region2: #{reverse} parent=1 // pred_check
      _
    $region3: #{reverse} parent=1 // pred_check_branch
      %6 = sbr.rel (0) target = $region5
    $region4: #{reverse} parent=1 // pred_region
      // Predicated region
      $region6: #{reverse} parent=4 // pred_check
        _
      $region7: #{reverse} parent=4 // pred_check_branch
        %8 = sbr.rel target = $region9
      $region8: #{reverse} parent=4 // pred_region
        // Predicated region
        $region21: #{reverse} parent=8 // pred_check
          _
        $region22: #{reverse} parent=8 // pred_check_branch
          %23 = sbr.rel (0) target = $region24
        $region23: #{reverse} parent=8 // pred_region
          loop: start=0, step=1, limit=1
          $region25: #{reverse} parent=23 // loop_pre_header
            _
          $region26: #{reverse} parent=23 // loop_header
            %s26 = sphi 0, %s30
            %p27 = scmp.ge.s32.totalorder %s26, 1
            %s31 = sphi %s0, %s0
            %s32 = sphi [#allocation1], [#allocation1]
          $region27: #{reverse} parent=23 // loop_header_branch
            %29 = sbr.rel (%p27) target = $region31
          $region28: #{reverse} parent=23 // loop_body
            %v33 = vld [vmem:[%s31] sm:$0x7]
            %34 = vst [vmem:[%s32] sm:$0x7] %v33
          $region29: #{reverse} parent=23 // loop_footer
            %s30 = sadd.s32 1, %s26
          $region30: #{reverse} parent=23 // loop_footer_branch
            %25 = sbr.rel target = $region26
          $region31: #{reverse} parent=23 // loop_exit
            _
        $region24: #{reverse} parent=8 // pred_fallthru
          _
      $region9: #{reverse} parent=4 // pred_fallthru
        _
      // Predicated region
      $region10: #{reverse} parent=4 // pred_check
        _
      $region11: #{reverse} parent=4 // pred_check_branch
        %10 = sbr.rel (0) target = $region13
      $region12: #{reverse} parent=4 // pred_region
        loop: start=0, step=1, limit=1
        $region14: #{reverse} parent=12 // loop_pre_header
          _
        $region15: #{reverse} parent=12 // loop_header
          %s13 = sphi 0, %s17
          %p14 = scmp.ge.s32.totalorder %s13, 1
          %s18 = sphi %s0, %s0
          %s19 = sphi [#allocation1], [#allocation1]
        $region16: #{reverse} parent=12 // loop_header_branch
          %16 = sbr.rel (%p14) target = $region20
        $region17: #{reverse} parent=12 // loop_body
          %v20 = vld [vmem:[%s18] sm:$0x7]
          %21 = vst [vmem:[%s19] sm:$0x7] %v20
        $region18: #{reverse} parent=12 // loop_footer
          %s17 = sadd.s32 1, %s13
        $region19: #{reverse} parent=12 // loop_footer_branch
          %12 = sbr.rel target = $region15
        $region20: #{reverse} parent=12 // loop_exit
          _
      $region13: #{reverse} parent=4 // pred_fallthru
        _
    $region5: #{reverse} parent=1 // pred_fallthru
      _
    %35 = vnop
    %s37 = sshllo.u32 0, 1
    %s38 = smul.addr 1, 2
    %s39 = scalar_lea.vmem [#allocation1], %s38
    %v40 = vld [vmem:[%s39] sm:%s37]
    %s41 = scalar_lea.vmem [#allocation0], 16
    %42 = vst [vmem:[%s41] sm:%s37] %v40
    %s43 = scalar_lea.vmem [#allocation1], 1
    %v44 = vld [vmem:[%s43] sm:%s37]
    %s45 = scalar_lea.vmem [#allocation0], 8
    %46 = vst [vmem:[%s45] sm:%s37] %v44
    %v47 = vld [vmem:[#allocation1] sm:%s37]
    %48 = vst [vmem:[#allocation0] sm:%s37] %v47
    %s49 = scalar_lea.vmem [#allocation0], 16
    %v50 = vld [vmem:[%s49] sm:$0xff]
    %51 = vperm.xlu0 %4, %v50
    %v52 = vpop.permute.xlu0 %51
    %53 = vst [vmem:[#allocation2] sm:$0xff] %v52
    %s54 = scalar_lea.vmem [#allocation2], 8
    %s55 = scalar_lea.vmem [#allocation0], 8
    %v56 = vld [vmem:[%s55] sm:$0xff]
    %57 = vperm.xlu0 %4, %v56
    %v58 = vpop.permute.xlu0 %57
    %59 = vst [vmem:[%s54] sm:$0xff] %v58
    %s60 = scalar_lea.vmem [#allocation2], 16
    %v61 = vld [vmem:[#allocation0] sm:$0xff]
    %62 = vperm.xlu0 %4, %v61
    %v63 = vpop.permute.xlu0 %62
    %64 = vst [vmem:[%s60] sm:$0xff] %v63
    %s66 = smul.u32 1, 2
    %s67 = sshllo.u32 0, %s66
    %s68 = sshrl.u32 %s66, 1
    %v69 = vld [vmem:[#allocation2] sm:%s67]
    %v70 = vpack.c.bf16 0.0, %v69
    %s71 = sshllo.u32 0, %s68
    %72 = vst [vmem:[#allocation3] sm:%s71] %v70
    %s73 = scalar_lea.vmem [#allocation2], 8
    %v74 = vld [vmem:[%s73] sm:%s67]
    %v75 = vpack.c.bf16 0.0, %v74
    %s76 = sshllo.u32 0, %s68
    %s77 = scalar_lea.vmem [#allocation3], 1
    %78 = vst [vmem:[%s77] sm:%s76] %v75
    %s79 = scalar_lea.vmem [#allocation2], 16
    %v80 = vld [vmem:[%s79] sm:%s67]
    %v81 = vpack.c.bf16 0.0, %v80
    %s82 = sshllo.u32 0, %s68
    %s83 = smul.addr 1, 2
    %s84 = scalar_lea.vmem [#allocation3], %s83
    %85 = vst [vmem:[%s84] sm:%s82] %v81
    // Predicated region
    $region32: #{reverse} parent=1 // pred_check
      _
    $region33: #{reverse} parent=1 // pred_check_branch
      %87 = sbr.rel (0) target = $region35
    $region34: #{reverse} parent=1 // pred_region
      // Predicated region
      $region36: #{reverse} parent=34 // pred_check
        _
      $region37: #{reverse} parent=34 // pred_check_branch
        %89 = sbr.rel target = $region39
      $region38: #{reverse} parent=34 // pred_region
        // Predicated region
        $region51: #{reverse} parent=38 // pred_check
          _
        $region52: #{reverse} parent=38 // pred_check_branch
          %104 = sbr.rel (0) target = $region54
        $region53: #{reverse} parent=38 // pred_region
          loop: start=0, step=1, limit=1
          $region55: #{reverse} parent=53 // loop_pre_header
            _
          $region56: #{reverse} parent=53 // loop_header
            %s107 = sphi 0, %s111
            %p108 = scmp.ge.s32.totalorder %s107, 1
            %s112 = sphi [#allocation3], [#allocation3]
            %s113 = sphi %s1, %s1
          $region57: #{reverse} parent=53 // loop_header_branch
            %110 = sbr.rel (%p108) target = $region61
          $region58: #{reverse} parent=53 // loop_body
            %v114 = vld [vmem:[%s112] sm:$0x7]
            %115 = vst [vmem:[%s113] sm:$0x7] %v114
          $region59: #{reverse} parent=53 // loop_footer
            %s111 = sadd.s32 1, %s107
          $region60: #{reverse} parent=53 // loop_footer_branch
            %106 = sbr.rel target = $region56
          $region61: #{reverse} parent=53 // loop_exit
            _
        $region54: #{reverse} parent=38 // pred_fallthru
          _
      $region39: #{reverse} parent=34 // pred_fallthru
        _
      // Predicated region
      $region40: #{reverse} parent=34 // pred_check
        _
      $region41: #{reverse} parent=34 // pred_check_branch
        %91 = sbr.rel (0) target = $region43
      $region42: #{reverse} parent=34 // pred_region
        loop: start=0, step=1, limit=1
        $region44: #{reverse} parent=42 // loop_pre_header
          _
        $region45: #{reverse} parent=42 // loop_header
          %s94 = sphi 0, %s98
          %p95 = scmp.ge.s32.totalorder %s94, 1
          %s99 = sphi [#allocation3], [#allocation3]
          %s100 = sphi %s1, %s1
        $region46: #{reverse} parent=42 // loop_header_branch
          %97 = sbr.rel (%p95) target = $region50
        $region47: #{reverse} parent=42 // loop_body
          %v101 = vld [vmem:[%s99] sm:$0x7]
          %102 = vst [vmem:[%s100] sm:$0x7] %v101
        $region48: #{reverse} parent=42 // loop_footer
          %s98 = sadd.s32 1, %s94
        $region49: #{reverse} parent=42 // loop_footer_branch
          %93 = sbr.rel target = $region45
        $region50: #{reverse} parent=42 // loop_exit
          _
      $region43: #{reverse} parent=34 // pred_fallthru
        _
    $region35: #{reverse} parent=1 // pred_fallthru
      _
    %116 = vnop

// kernel: s3kai_resnet_forward.18
$region0: #{s3kai_resnet_forward.18}
  #allocation0 [shape = 'u32[]', space=smem, size = 0x4, offset = 0x4, fixed_abs, tag = 'smem constant byte address 0x4 - core index']
  #allocation1 [shape = 'u32[144,128]{1,0:T(1,128)}', space=vmem, size = 0x12000, scoped, tag = 'internal scratch']
  %s0 = inlined_call_operand.vmem [shape: bf16[64,294], index: 0, kind: input, shape index: {}]
  %s1 = inlined_call_operand.vmem [shape: f32[64,1], index: 1, kind: input, shape index: {}]
  %s2 = inlined_call_operand.vmem [shape: bf16[64,294], index: 2, kind: input, shape index: {}]
  %s3 = inlined_call_operand.vmem [shape: bf16[64,294], index: 3, kind: output, shape index: {}]
  %s4 = sld [smem:[#allocation0]]
  $region22: #{s3kai_resnet_forward.18} parent=0
    _
  %s6 = ssub.s32 1, %s4
  %s7 = scalar_select 0, %s6, %s4
  // Predicated region
  $region2: #{s3kai_resnet_forward.18} parent=0 // pred_check
    _
  $region3: #{s3kai_resnet_forward.18} parent=0 // pred_check_branch
    %9 = sbr.rel (0) target = $region5
  $region4: #{s3kai_resnet_forward.18} parent=0 // pred_region
    _
  $region5: #{s3kai_resnet_forward.18} parent=0 // pred_fallthru
    _
  // Predicated region
  $region6: #{s3kai_resnet_forward.18} parent=0 // pred_check
    _
  $region7: #{s3kai_resnet_forward.18} parent=0 // pred_check_branch
    %11 = sbr.rel (0) target = $region9
  $region8: #{s3kai_resnet_forward.18} parent=0 // pred_region
    _
  $region9: #{s3kai_resnet_forward.18} parent=0 // pred_fallthru
    _
  // Predicated region
  $region10: #{s3kai_resnet_forward.18} parent=0 // pred_check
    _
  $region11: #{s3kai_resnet_forward.18} parent=0 // pred_check_branch
    %13 = sbr.rel (0) target = $region13
  $region12: #{s3kai_resnet_forward.18} parent=0 // pred_region
    _
  $region13: #{s3kai_resnet_forward.18} parent=0 // pred_fallthru
    _
  %v14 = vld [vmem:[%s1] sm:$0xff]
  %v15 = vld [vmem:[%s1 + $0x8] sm:$0xff]
  %v16 = vld [vmem:[%s1 + $0x10] sm:$0xff]
  %v17 = vld [vmem:[%s1 + $0x18] sm:$0xff]
  %v18 = vld [vmem:[%s1 + $0x20] sm:$0xff]
  %v19 = vld [vmem:[%s1 + $0x28] sm:$0xff]
  %v20 = vld [vmem:[%s1 + $0x30] sm:$0xff]
  %v21 = vld [vmem:[%s1 + $0x38] sm:$0xff]
  %v22 = vxor.u32 %v14, 2147483648
  %v23 = vxor.u32 %v15, 2147483648
  %v24 = vxor.u32 %v16, 2147483648
  %v25 = vxor.u32 %v17, 2147483648
  %v26 = vxor.u32 %v18, 2147483648
  %v27 = vxor.u32 %v19, 2147483648
  %v28 = vxor.u32 %v20, 2147483648
  %v29 = vxor.u32 %v21, 2147483648
  %v30 = vmul.f32 %v22, 1.442695
  %v31 = vpow.pop %v30
  %v32 = vmul.f32 %v23, 1.442695
  %v33 = vpow.pop %v32
  %v34 = vmul.f32 %v24, 1.442695
  %v35 = vpow.pop %v34
  %v36 = vmul.f32 %v25, 1.442695
  %v37 = vpow.pop %v36
  %v38 = vmul.f32 %v26, 1.442695
  %v39 = vpow.pop %v38
  %v40 = vmul.f32 %v27, 1.442695
  %v41 = vpow.pop %v40
  %v42 = vmul.f32 %v28, 1.442695
  %v43 = vpow.pop %v42
  %v44 = vmul.f32 %v29, 1.442695
  %v45 = vpow.pop %v44
  %v46 = vadd.f32 %v31, 1.0
  %v47 = vadd.f32 %v33, 1.0
  %v48 = vadd.f32 %v35, 1.0
  %v49 = vadd.f32 %v37, 1.0
  %v50 = vadd.f32 %v39, 1.0
  %v51 = vadd.f32 %v41, 1.0
  %v52 = vadd.f32 %v43, 1.0
  %v53 = vadd.f32 %v45, 1.0
  %v54 = vrcp.pop %v46
  %v55 = vmul.f32 1.0, %v54
  %v56 = vrcp.pop %v47
  %v57 = vmul.f32 1.0, %v56
  %v58 = vrcp.pop %v48
  %v59 = vmul.f32 1.0, %v58
  %v60 = vrcp.pop %v49
  %v61 = vmul.f32 1.0, %v60
  %v62 = vrcp.pop %v50
  %v63 = vmul.f32 1.0, %v62
  %v64 = vrcp.pop %v51
  %v65 = vmul.f32 1.0, %v64
  %v66 = vrcp.pop %v52
  %v67 = vmul.f32 1.0, %v66
  %v68 = vrcp.pop %v53
  %v69 = vmul.f32 1.0, %v68
  %v70 = vld [vmem:[%s0] sm:$0xff]
  %v71 = vld [vmem:[%s0 + $0x8] sm:$0xf]
  %v72 = vld [vmem:[%s0 + $0xc] sm:$0xff]
  %v73 = vld [vmem:[%s0 + $0x14] sm:$0xf]
  %v74 = vld [vmem:[%s0 + $0x18] sm:$0xff]
  %v75 = vld [vmem:[%s0 + $0x20] sm:$0xf]
  %v76 = vld [vmem:[%s0 + $0x24] sm:$0xff]
  %v77 = vld [vmem:[%s0 + $0x2c] sm:$0xf]
  %v78 = vld [vmem:[%s0 + $0x30] sm:$0xff]
  %v79 = vld [vmem:[%s0 + $0x38] sm:$0xf]
  %v80 = vld [vmem:[%s0 + $0x3c] sm:$0xff]
  %v81 = vld [vmem:[%s0 + $0x44] sm:$0xf]
  %v82 = vld [vmem:[%s0 + $0x48] sm:$0xff]
  %v83 = vld [vmem:[%s0 + $0x50] sm:$0xf]
  %v84 = vld [vmem:[%s0 + $0x54] sm:$0xff]
  %v85 = vld [vmem:[%s0 + $0x5c] sm:$0xf]
  %v86 = vunpack.c.l.bf16 %v70
  %v87 = vunpack.c.h.bf16 %v70
  %v88 = vunpack.c.l.bf16 %v71
  %v89 = vunpack.c.l.bf16 %v72
  %v90 = vunpack.c.h.bf16 %v72
  %v91 = vunpack.c.l.bf16 %v73
  %v92 = vunpack.c.l.bf16 %v74
  %v93 = vunpack.c.h.bf16 %v74
  %v94 = vunpack.c.l.bf16 %v75
  %v95 = vunpack.c.l.bf16 %v76
  %v96 = vunpack.c.h.bf16 %v76
  %v97 = vunpack.c.l.bf16 %v77
  %v98 = vunpack.c.l.bf16 %v78
  %v99 = vunpack.c.h.bf16 %v78
  %v100 = vunpack.c.l.bf16 %v79
  %v101 = vunpack.c.l.bf16 %v80
  %v102 = vunpack.c.h.bf16 %v80
  %v103 = vunpack.c.l.bf16 %v81
  %v104 = vunpack.c.l.bf16 %v82
  %v105 = vunpack.c.h.bf16 %v82
  %v106 = vunpack.c.l.bf16 %v83
  %v107 = vunpack.c.l.bf16 %v84
  %v108 = vunpack.c.h.bf16 %v84
  %v109 = vunpack.c.l.bf16 %v85
  %111 = vset.pattern.permute.xlu0 0
  %112 = vperm.xlu0 %111, %v55
  %v113 = vpop.permute.xlu0 %112
  %116 = vset.pattern.permute.xlu0 0
  %117 = vperm.xlu0 %116, %v57
  %v118 = vpop.permute.xlu0 %117
  %121 = vset.pattern.permute.xlu0 0
  %122 = vperm.xlu0 %121, %v59
  %v123 = vpop.permute.xlu0 %122
  %126 = vset.pattern.permute.xlu0 0
  %127 = vperm.xlu0 %126, %v61
  %v128 = vpop.permute.xlu0 %127
  %131 = vset.pattern.permute.xlu0 0
  %132 = vperm.xlu0 %131, %v63
  %v133 = vpop.permute.xlu0 %132
  %136 = vset.pattern.permute.xlu0 0
  %137 = vperm.xlu0 %136, %v65
  %v138 = vpop.permute.xlu0 %137
  %141 = vset.pattern.permute.xlu0 0
  %142 = vperm.xlu0 %141, %v67
  %v143 = vpop.permute.xlu0 %142
  %146 = vset.pattern.permute.xlu0 0
  %147 = vperm.xlu0 %146, %v69
  %v148 = vpop.permute.xlu0 %147
  %v150 = vmul.f32 %v86, %v113
  %v151 = vmul.f32 %v87, %v113
  %v152 = vmul.f32 %v88, %v113
  %v153 = vmul.f32 %v89, %v118
  %v154 = vmul.f32 %v90, %v118
  %v155 = vmul.f32 %v91, %v118
  %v156 = vmul.f32 %v92, %v123
  %v157 = vmul.f32 %v93, %v123
  %v158 = vmul.f32 %v94, %v123
  %v159 = vmul.f32 %v95, %v128
  %v160 = vmul.f32 %v96, %v128
  %v161 = vmul.f32 %v97, %v128
  %v162 = vmul.f32 %v98, %v133
  %v163 = vmul.f32 %v99, %v133
  %v164 = vmul.f32 %v100, %v133
  %v165 = vmul.f32 %v101, %v138
  %v166 = vmul.f32 %v102, %v138
  %v167 = vmul.f32 %v103, %v138
  %v168 = vmul.f32 %v104, %v143
  %v169 = vmul.f32 %v105, %v143
  %v170 = vmul.f32 %v106, %v143
  %v171 = vmul.f32 %v107, %v148
  %v172 = vmul.f32 %v108, %v148
  %v173 = vmul.f32 %v109, %v148
  %v174 = vld [vmem:[%s2] sm:$0xff]
  %v175 = vld [vmem:[%s2 + $0x8] sm:$0xf]
  %v176 = vld [vmem:[%s2 + $0xc] sm:$0xff]
  %v177 = vld [vmem:[%s2 + $0x14] sm:$0xf]
  %v178 = vld [vmem:[%s2 + $0x18] sm:$0xff]
  %v179 = vld [vmem:[%s2 + $0x20] sm:$0xf]
  %v180 = vld [vmem:[%s2 + $0x24] sm:$0xff]
  %v181 = vld [vmem:[%s2 + $0x2c] sm:$0xf]
  %v182 = vld [vmem:[%s2 + $0x30] sm:$0xff]
  %v183 = vld [vmem:[%s2 + $0x38] sm:$0xf]
  %v184 = vld [vmem:[%s2 + $0x3c] sm:$0xff]
  %v185 = vld [vmem:[%s2 + $0x44] sm:$0xf]
  %v186 = vld [vmem:[%s2 + $0x48] sm:$0xff]
  %v187 = vld [vmem:[%s2 + $0x50] sm:$0xf]
  %v188 = vld [vmem:[%s2 + $0x54] sm:$0xff]
  %v189 = vld [vmem:[%s2 + $0x5c] sm:$0xf]
  %v190 = vunpack.c.l.bf16 %v174
  %v191 = vunpack.c.h.bf16 %v174
  %v192 = vunpack.c.l.bf16 %v175
  %v193 = vunpack.c.l.bf16 %v176
  %v194 = vunpack.c.h.bf16 %v176
  %v195 = vunpack.c.l.bf16 %v177
  %v196 = vunpack.c.l.bf16 %v178
  %v197 = vunpack.c.h.bf16 %v178
  %v198 = vunpack.c.l.bf16 %v179
  %v199 = vunpack.c.l.bf16 %v180
  %v200 = vunpack.c.h.bf16 %v180
  %v201 = vunpack.c.l.bf16 %v181
  %v202 = vunpack.c.l.bf16 %v182
  %v203 = vunpack.c.h.bf16 %v182
  %v204 = vunpack.c.l.bf16 %v183
  %v205 = vunpack.c.l.bf16 %v184
  %v206 = vunpack.c.h.bf16 %v184
  %v207 = vunpack.c.l.bf16 %v185
  %v208 = vunpack.c.l.bf16 %v186
  %v209 = vunpack.c.h.bf16 %v186
  %v210 = vunpack.c.l.bf16 %v187
  %v211 = vunpack.c.l.bf16 %v188
  %v212 = vunpack.c.h.bf16 %v188
  %v213 = vunpack.c.l.bf16 %v189
  %v214 = vadd.f32 %v150, %v190
  %v215 = vadd.f32 %v151, %v191
  %v216 = vadd.f32 %v152, %v192
  %v217 = vadd.f32 %v153, %v193
  %v218 = vadd.f32 %v154, %v194
  %v219 = vadd.f32 %v155, %v195
  %v220 = vadd.f32 %v156, %v196
  %v221 = vadd.f32 %v157, %v197
  %v222 = vadd.f32 %v158, %v198
  %v223 = vadd.f32 %v159, %v199
  %v224 = vadd.f32 %v160, %v200
  %v225 = vadd.f32 %v161, %v201
  %v226 = vadd.f32 %v162, %v202
  %v227 = vadd.f32 %v163, %v203
  %v228 = vadd.f32 %v164, %v204
  %v229 = vadd.f32 %v165, %v205
  %v230 = vadd.f32 %v166, %v206
  %v231 = vadd.f32 %v167, %v207
  %v232 = vadd.f32 %v168, %v208
  %v233 = vadd.f32 %v169, %v209
  %v234 = vadd.f32 %v170, %v210
  %v235 = vadd.f32 %v171, %v211
  %v236 = vadd.f32 %v172, %v212
  %v237 = vadd.f32 %v173, %v213
  %v238 = vpack.c.bf16 %v217, %v214
  %v239 = vpack.c.bf16 %v218, %v215
  %v240 = vpack.c.bf16 %v219, %v216
  %v241 = vpack.c.bf16 %v223, %v220
  %v242 = vpack.c.bf16 %v224, %v221
  %v243 = vpack.c.bf16 %v225, %v222
  %v244 = vpack.c.bf16 %v229, %v226
  %v245 = vpack.c.bf16 %v230, %v227
  %v246 = vpack.c.bf16 %v231, %v228
  %v247 = vpack.c.bf16 %v235, %v232
  %v248 = vpack.c.bf16 %v236, %v233
  %v249 = vpack.c.bf16 %v237, %v234
  %v262 = vunpack.c.l.b16 %v238
  %v263 = vunpack.c.l.b16 %v239
  %v264 = vunpack.c.l.b16 %v240
  %v265 = vunpack.c.h.b16 %v238
  %v266 = vunpack.c.h.b16 %v239
  %v267 = vunpack.c.h.b16 %v240
  %v268 = vunpack.c.l.b16 %v241
  %v269 = vunpack.c.l.b16 %v242
  %v270 = vunpack.c.l.b16 %v243
  %v271 = vunpack.c.h.b16 %v241
  %v272 = vunpack.c.h.b16 %v242
  %v273 = vunpack.c.h.b16 %v243
  %v274 = vunpack.c.l.b16 %v244
  %v275 = vunpack.c.l.b16 %v245
  %v276 = vunpack.c.l.b16 %v246
  %v277 = vunpack.c.h.b16 %v244
  %v278 = vunpack.c.h.b16 %v245
  %v279 = vunpack.c.h.b16 %v246
  %v280 = vunpack.c.l.b16 %v247
  %v281 = vunpack.c.l.b16 %v248
  %v282 = vunpack.c.l.b16 %v249
  %v283 = vunpack.c.h.b16 %v247
  %v284 = vunpack.c.h.b16 %v248
  %v285 = vunpack.c.h.b16 %v249
  %v286 = vpack.c.b16 %v263, %v262
  %v287 = vpack.c.b16 %v264, %v264
  %v288 = vpack.c.b16 %v266, %v265
  %v289 = vpack.c.b16 %v267, %v267
  %v290 = vpack.c.b16 %v269, %v268
  %v291 = vpack.c.b16 %v270, %v270
  %v292 = vpack.c.b16 %v272, %v271
  %v293 = vpack.c.b16 %v273, %v273
  %v294 = vpack.c.b16 %v275, %v274
  %v295 = vpack.c.b16 %v276, %v276
  %v296 = vpack.c.b16 %v278, %v277
  %v297 = vpack.c.b16 %v279, %v279
  %v298 = vpack.c.b16 %v281, %v280
  %v299 = vpack.c.b16 %v282, %v282
  %v300 = vpack.c.b16 %v284, %v283
  %v301 = vpack.c.b16 %v285, %v285
  %318 = vst [vmem:[%s3] sm:$0xff] %v286
  %vm319 = vcmask 306176
  %320 = vst.msk [vmem:[%s3 + $0x8] sm:$0xf] %vm319, %v287
  %321 = vst [vmem:[%s3 + $0xc] sm:$0xff] %v288
  %322 = vst.msk [vmem:[%s3 + $0x14] sm:$0xf] %vm319, %v289
  %323 = vst [vmem:[%s3 + $0x18] sm:$0xff] %v290
  %324 = vst.msk [vmem:[%s3 + $0x20] sm:$0xf] %vm319, %v291
  %325 = vst [vmem:[%s3 + $0x24] sm:$0xff] %v292
  %326 = vst.msk [vmem:[%s3 + $0x2c] sm:$0xf] %vm319, %v293
  %327 = vst [vmem:[%s3 + $0x30] sm:$0xff] %v294
  %328 = vst.msk [vmem:[%s3 + $0x38] sm:$0xf] %vm319, %v295
  %329 = vst [vmem:[%s3 + $0x3c] sm:$0xff] %v296
  %330 = vst.msk [vmem:[%s3 + $0x44] sm:$0xf] %vm319, %v297
  %331 = vst [vmem:[%s3 + $0x48] sm:$0xff] %v298
  %332 = vst.msk [vmem:[%s3 + $0x50] sm:$0xf] %vm319, %v299
  %333 = vst [vmem:[%s3 + $0x54] sm:$0xff] %v300
  %334 = vst.msk [vmem:[%s3 + $0x5c] sm:$0xf] %vm319, %v301
  // Predicated region
  $region14: #{s3kai_resnet_forward.18} parent=0 // pred_check
    _
  $region15: #{s3kai_resnet_forward.18} parent=0 // pred_check_branch
    %336 = sbr.rel (0) target = $region17
  $region16: #{s3kai_resnet_forward.18} parent=0 // pred_region
    _
  $region17: #{s3kai_resnet_forward.18} parent=0 // pred_fallthru
    _
  // Predicated region
  $region18: #{s3kai_resnet_forward.18} parent=0 // pred_check
    _
  $region19: #{s3kai_resnet_forward.18} parent=0 // pred_check_branch
    %338 = sbr.rel (0) target = $region21
  $region20: #{s3kai_resnet_forward.18} parent=0 // pred_region
    _
  $region21: #{s3kai_resnet_forward.18} parent=0 // pred_fallthru
    _

// kernel: s3kai_resnet_forward.22
$region0: #{s3kai_resnet_forward.22}
  #allocation0 [shape = 'u32[]', space=smem, size = 0x4, offset = 0x4, fixed_abs, tag = 'smem constant byte address 0x4 - core index']
  #allocation1 [shape = 'u32[144,128]{1,0:T(1,128)}', space=vmem, size = 0x12000, scoped, tag = 'internal scratch']
  %s0 = inlined_call_operand.vmem [shape: bf16[128,48], index: 0, kind: input, shape index: {}]
  %s1 = inlined_call_operand.vmem [shape: bf16[48,512], index: 1, kind: input, shape index: {}]
  %s2 = inlined_call_operand.vmem [shape: f32[128,1], index: 2, kind: input, shape index: {}]
  %s3 = inlined_call_operand.vmem [shape: bf16[128,512], index: 3, kind: output, shape index: {}]
  %s4 = sld [smem:[#allocation0]]
  $region22: #{s3kai_resnet_forward.22} parent=0
    _
  %s6 = ssub.s32 1, %s4
  %s7 = scalar_select 0, %s6, %s4
  // Predicated region
  $region2: #{s3kai_resnet_forward.22} parent=0 // pred_check
    _
  $region3: #{s3kai_resnet_forward.22} parent=0 // pred_check_branch
    %9 = sbr.rel (0) target = $region5
  $region4: #{s3kai_resnet_forward.22} parent=0 // pred_region
    _
  $region5: #{s3kai_resnet_forward.22} parent=0 // pred_fallthru
    _
  // Predicated region
  $region6: #{s3kai_resnet_forward.22} parent=0 // pred_check
    _
  $region7: #{s3kai_resnet_forward.22} parent=0 // pred_check_branch
    %11 = sbr.rel (0) target = $region9
  $region8: #{s3kai_resnet_forward.22} parent=0 // pred_region
    _
  $region9: #{s3kai_resnet_forward.22} parent=0 // pred_fallthru
    _
  // Predicated region
  $region10: #{s3kai_resnet_forward.22} parent=0 // pred_check
    _
  $region11: #{s3kai_resnet_forward.22} parent=0 // pred_check_branch
    %13 = sbr.rel (0) target = $region13
  $region12: #{s3kai_resnet_forward.22} parent=0 // pred_region
    _
  $region13: #{s3kai_resnet_forward.22} parent=0 // pred_fallthru
    _
  %v15 = vld [vmem:[%s0] sm:$0xf]
  %v16 = vld [vmem:[%s0 + $0x4] sm:$0xf]
  %v17 = vld [vmem:[%s0 + $0x8] sm:$0xf]
  %v18 = vld [vmem:[%s0 + $0xc] sm:$0xf]
  %v19 = vld [vmem:[%s0 + $0x10] sm:$0xf]
  %v20 = vld [vmem:[%s0 + $0x14] sm:$0xf]
  %v21 = vld [vmem:[%s0 + $0x18] sm:$0xf]
  %v22 = vld [vmem:[%s0 + $0x1c] sm:$0xf]
  %v23 = vld [vmem:[%s0 + $0x20] sm:$0xf]
  %v24 = vld [vmem:[%s0 + $0x24] sm:$0xf]
  %v25 = vld [vmem:[%s0 + $0x28] sm:$0xf]
  %v26 = vld [vmem:[%s0 + $0x2c] sm:$0xf]
  %v27 = vld [vmem:[%s0 + $0x30] sm:$0xf]
  %v28 = vld [vmem:[%s0 + $0x34] sm:$0xf]
  %v29 = vld [vmem:[%s0 + $0x38] sm:$0xf]
  %v30 = vld [vmem:[%s0 + $0x3c] sm:$0xf]
  %v31 = vld [vmem:[%s1] sm:$0xff]
  %v32 = vld [vmem:[%s1 + $0x8] sm:$0xff]
  %v33 = vld [vmem:[%s1 + $0x10] sm:$0xff]
  %v34 = vld [vmem:[%s1 + $0x18] sm:$0xff]
  %v35 = vld [vmem:[%s1 + $0x20] sm:$0xff]
  %v36 = vld [vmem:[%s1 + $0x28] sm:$0xff]
  %v37 = vld [vmem:[%s1 + $0x30] sm:$0xff]
  %v38 = vld [vmem:[%s1 + $0x38] sm:$0xff]
  %v39 = vld [vmem:[%s1 + $0x40] sm:$0xff]
  %v40 = vld [vmem:[%s1 + $0x48] sm:$0xff]
  %v41 = vld [vmem:[%s1 + $0x50] sm:$0xff]
  %v42 = vld [vmem:[%s1 + $0x58] sm:$0xff]
  %v43 = vld [vmem:[%s2] sm:$0xff]
  %v44 = vld [vmem:[%s2 + $0x8] sm:$0xff]
  %v45 = vld [vmem:[%s2 + $0x10] sm:$0xff]
  %v46 = vld [vmem:[%s2 + $0x18] sm:$0xff]
  %v47 = vld [vmem:[%s2 + $0x20] sm:$0xff]
  %v48 = vld [vmem:[%s2 + $0x28] sm:$0xff]
  %v49 = vld [vmem:[%s2 + $0x30] sm:$0xff]
  %v50 = vld [vmem:[%s2 + $0x38] sm:$0xff]
  %v51 = vld [vmem:[%s2 + $0x40] sm:$0xff]
  %v52 = vld [vmem:[%s2 + $0x48] sm:$0xff]
  %v53 = vld [vmem:[%s2 + $0x50] sm:$0xff]
  %v54 = vld [vmem:[%s2 + $0x58] sm:$0xff]
  %v55 = vld [vmem:[%s2 + $0x60] sm:$0xff]
  %v56 = vld [vmem:[%s2 + $0x68] sm:$0xff]
  %v57 = vld [vmem:[%s2 + $0x70] sm:$0xff]
  %v58 = vld [vmem:[%s2 + $0x78] sm:$0xff]
  %60 = vset.pattern.permute.xlu0 0
  %61 = vperm.xlu0 %60, %v43
  %v62 = vpop.permute.xlu0 %61
  %65 = vset.pattern.permute.xlu0 0
  %66 = vperm.xlu0 %65, %v44
  %v67 = vpop.permute.xlu0 %66
  %70 = vset.pattern.permute.xlu0 0
  %71 = vperm.xlu0 %70, %v45
  %v72 = vpop.permute.xlu0 %71
  %75 = vset.pattern.permute.xlu0 0
  %76 = vperm.xlu0 %75, %v46
  %v77 = vpop.permute.xlu0 %76
  %80 = vset.pattern.permute.xlu0 0
  %81 = vperm.xlu0 %80, %v47
  %v82 = vpop.permute.xlu0 %81
  %85 = vset.pattern.permute.xlu0 0
  %86 = vperm.xlu0 %85, %v48
  %v87 = vpop.permute.xlu0 %86
  %90 = vset.pattern.permute.xlu0 0
  %91 = vperm.xlu0 %90, %v49
  %v92 = vpop.permute.xlu0 %91
  %95 = vset.pattern.permute.xlu0 0
  %96 = vperm.xlu0 %95, %v50
  %v97 = vpop.permute.xlu0 %96
  %100 = vset.pattern.permute.xlu0 0
  %101 = vperm.xlu0 %100, %v51
  %v102 = vpop.permute.xlu0 %101
  %105 = vset.pattern.permute.xlu0 0
  %106 = vperm.xlu0 %105, %v52
  %v107 = vpop.permute.xlu0 %106
  %110 = vset.pattern.permute.xlu0 0
  %111 = vperm.xlu0 %110, %v53
  %v112 = vpop.permute.xlu0 %111
  %115 = vset.pattern.permute.xlu0 0
  %116 = vperm.xlu0 %115, %v54
  %v117 = vpop.permute.xlu0 %116
  %120 = vset.pattern.permute.xlu0 0
  %121 = vperm.xlu0 %120, %v55
  %v122 = vpop.permute.xlu0 %121
  %125 = vset.pattern.permute.xlu0 0
  %126 = vperm.xlu0 %125, %v56
  %v127 = vpop.permute.xlu0 %126
  %130 = vset.pattern.permute.xlu0 0
  %131 = vperm.xlu0 %130, %v57
  %v132 = vpop.permute.xlu0 %131
  %135 = vset.pattern.permute.xlu0 0
  %136 = vperm.xlu0 %135, %v58
  %v137 = vpop.permute.xlu0 %136
  %v155 = vunpack.c.l.b16 %v15
  %v156 = vunpack.c.l.b16 %v16
  %v157 = vunpack.c.l.b16 %v17
  %v158 = vunpack.c.l.b16 %v18
  %v159 = vunpack.c.l.b16 %v19
  %v160 = vunpack.c.l.b16 %v20
  %v161 = vunpack.c.l.b16 %v21
  %v162 = vunpack.c.l.b16 %v22
  %v163 = vunpack.c.l.b16 %v23
  %v164 = vunpack.c.l.b16 %v24
  %v165 = vunpack.c.l.b16 %v25
  %v166 = vunpack.c.l.b16 %v26
  %v167 = vunpack.c.l.b16 %v27
  %v168 = vunpack.c.l.b16 %v28
  %v169 = vunpack.c.l.b16 %v29
  %v170 = vunpack.c.l.b16 %v30
  %v171 = vpack.c.b16 %v156, %v155
  %v172 = vpack.c.b16 %v158, %v157
  %v173 = vpack.c.b16 %v160, %v159
  %v174 = vpack.c.b16 %v162, %v161
  %v175 = vpack.c.b16 %v164, %v163
  %v176 = vpack.c.b16 %v166, %v165
  %v177 = vpack.c.b16 %v168, %v167
  %v178 = vpack.c.b16 %v170, %v169
  %v191 = vunpack.c.l.b16 %v31
  %v192 = vunpack.c.h.b16 %v31
  %v193 = vunpack.c.l.b16 %v32
  %v194 = vunpack.c.h.b16 %v32
  %v195 = vunpack.c.l.b16 %v33
  %v196 = vunpack.c.h.b16 %v33
  %v197 = vunpack.c.l.b16 %v34
  %v198 = vunpack.c.h.b16 %v34
  %v199 = vunpack.c.l.b16 %v35
  %v200 = vunpack.c.h.b16 %v35
  %v201 = vunpack.c.l.b16 %v36
  %v202 = vunpack.c.h.b16 %v36
  %v203 = vunpack.c.l.b16 %v37
  %v204 = vunpack.c.h.b16 %v37
  %v205 = vunpack.c.l.b16 %v38
  %v206 = vunpack.c.h.b16 %v38
  %v207 = vunpack.c.l.b16 %v39
  %v208 = vunpack.c.h.b16 %v39
  %v209 = vunpack.c.l.b16 %v40
  %v210 = vunpack.c.h.b16 %v40
  %v211 = vunpack.c.l.b16 %v41
  %v212 = vunpack.c.h.b16 %v41
  %v213 = vunpack.c.l.b16 %v42
  %v214 = vunpack.c.h.b16 %v42
  %v215 = vpack.c.b16 %v195, %v191
  %v216 = vpack.c.b16 %v196, %v192
  %v217 = vpack.c.b16 %v197, %v193
  %v218 = vpack.c.b16 %v198, %v194
  %v219 = vpack.c.b16 %v203, %v199
  %v220 = vpack.c.b16 %v204, %v200
  %v221 = vpack.c.b16 %v205, %v201
  %v222 = vpack.c.b16 %v206, %v202
  %v223 = vpack.c.b16 %v211, %v207
  %v224 = vpack.c.b16 %v212, %v208
  %v225 = vpack.c.b16 %v213, %v209
  %v226 = vpack.c.b16 %v214, %v210
  %vm239 = vcmask 392192
  %v241 = vsel %vm239, %v171, 0
  %v244 = vsel %vm239, %v172, 0
  %v247 = vsel %vm239, %v173, 0
  %v250 = vsel %vm239, %v174, 0
  %v253 = vsel %vm239, %v175, 0
  %v256 = vsel %vm239, %v176, 0
  %v259 = vsel %vm239, %v177, 0
  %v262 = vsel %vm239, %v178, 0
  %264 = vmatprep.subr.bf16.mxu0 %v216
  %265 = vmatpush1.bf16.msra.mxu0 %v215
  %266 = vmatprep.subr.bf16.mxu0 %v220
  %267 = vmatpush1.bf16.msra.mxu0 %v219
  %268 = vmatprep.subr.bf16.mxu0 %v224
  %269 = vmatpush1.bf16.msra.mxu0 %v223
  %270 = vmatprep.subr.bf16.mxu0 0
  %271 = vmatpush1.bf16.msra.mxu0 0
  %272 = vmatprep.subr.bf16.mxu0 0
  %273 = vmatpush1.bf16.msra.mxu0 0
  %274 = vmatprep.subr.bf16.mxu0 0
  %275 = vmatpush1.bf16.msra.mxu0 0
  %276 = vmatprep.subr.bf16.mxu0 0
  %277 = vmatpush1.bf16.msra.mxu0 0
  %278 = vmatprep.subr.bf16.mxu0 0
  %279 = vmatpush1.bf16.msra.mxu0 0
  %280 = vmatprep.subr.bf16.mxu0 0
  %281 = vmatpush1.bf16.msra.mxu0 0
  %282 = vmatprep.subr.bf16.mxu0 0
  %283 = vmatpush1.bf16.msra.mxu0 0
  %284 = vmatprep.subr.bf16.mxu0 0
  %285 = vmatpush1.bf16.msra.mxu0 0
  %286 = vmatprep.subr.bf16.mxu0 0
  %287 = vmatpush1.bf16.msra.mxu0 0
  %288 = vmatprep.subr.bf16.mxu0 0
  %289 = vmatpush1.bf16.msra.mxu0 0
  %290 = vmatprep.subr.bf16.mxu0 0
  %291 = vmatpush1.bf16.msra.mxu0 0
  %292 = vmatprep.subr.bf16.mxu0 0
  %293 = vmatpush1.bf16.msra.mxu0 0
  %294 = vmatprep.subr.bf16.mxu0 0
  %295 = vmatpush1.bf16.msra.mxu0 0
  %296 = vmatprep.mubr.bf16.mxu0 0
  %297 = vmatmul.mubr.bf16.gmra.mrb[0].mxu0 %v241
  %v298 = vpop.f32.mrb[0].mxu0
  %v299 = vadd.f32 %v62, %v298
  %v300 = vpop.f32.mrb[0].mxu0
  %v301 = vadd.f32 %v62, %v300
  %v302 = vpop.f32.mrb[0].mxu0
  %v303 = vadd.f32 %v67, %v302
  %v304 = vpop.f32.mrb[0].mxu0
  %v305 = vadd.f32 %v67, %v304
  %306 = vmatprep.mubr.bf16.mxu0 0
  %307 = vmatmul.mubr.bf16.gmra.mrb[0].mxu0 %v244
  %v308 = vpop.f32.mrb[0].mxu0
  %v309 = vadd.f32 %v72, %v308
  %v310 = vpop.f32.mrb[0].mxu0
  %v311 = vadd.f32 %v72, %v310
  %v312 = vpop.f32.mrb[0].mxu0
  %v313 = vadd.f32 %v77, %v312
  %v314 = vpop.f32.mrb[0].mxu0
  %v315 = vadd.f32 %v77, %v314
  %316 = vmatprep.mubr.bf16.mxu0 0
  %317 = vmatmul.mubr.bf16.gmra.mrb[0].mxu0 %v247
  %v318 = vpop.f32.mrb[0].mxu0
  %v319 = vadd.f32 %v82, %v318
  %v320 = vpop.f32.mrb[0].mxu0
  %v321 = vadd.f32 %v82, %v320
  %v322 = vpop.f32.mrb[0].mxu0
  %v323 = vadd.f32 %v87, %v322
  %v324 = vpop.f32.mrb[0].mxu0
  %v325 = vadd.f32 %v87, %v324
  %326 = vmatprep.mubr.bf16.mxu0 0
  %327 = vmatmul.mubr.bf16.gmra.mrb[0].mxu0 %v250
  %v328 = vpop.f32.mrb[0].mxu0
  %v329 = vadd.f32 %v92, %v328
  %v330 = vpop.f32.mrb[0].mxu0
  %v331 = vadd.f32 %v92, %v330
  %v332 = vpop.f32.mrb[0].mxu0
  %v333 = vadd.f32 %v97, %v332
  %v334 = vpop.f32.mrb[0].mxu0
  %v335 = vadd.f32 %v97, %v334
  %336 = vmatprep.mubr.bf16.mxu0 0
  %337 = vmatmul.mubr.bf16.gmra.mrb[0].mxu0 %v253
  %v338 = vpop.f32.mrb[0].mxu0
  %v339 = vadd.f32 %v102, %v338
  %v340 = vpop.f32.mrb[0].mxu0
  %v341 = vadd.f32 %v102, %v340
  %v342 = vpop.f32.mrb[0].mxu0
  %v343 = vadd.f32 %v107, %v342
  %v344 = vpop.f32.mrb[0].mxu0
  %v345 = vadd.f32 %v107, %v344
  %346 = vmatprep.mubr.bf16.mxu0 0
  %347 = vmatmul.mubr.bf16.gmra.mrb[0].mxu0 %v256
  %v348 = vpop.f32.mrb[0].mxu0
  %v349 = vadd.f32 %v112, %v348
  %v350 = vpop.f32.mrb[0].mxu0
  %v351 = vadd.f32 %v112, %v350
  %v352 = vpop.f32.mrb[0].mxu0
  %v353 = vadd.f32 %v117, %v352
  %v354 = vpop.f32.mrb[0].mxu0
  %v355 = vadd.f32 %v117, %v354
  %356 = vmatprep.mubr.bf16.mxu0 0
  %357 = vmatmul.mubr.bf16.gmra.mrb[0].mxu0 %v259
  %v358 = vpop.f32.mrb[0].mxu0
  %v359 = vadd.f32 %v122, %v358
  %v360 = vpop.f32.mrb[0].mxu0
  %v361 = vadd.f32 %v122, %v360
  %v362 = vpop.f32.mrb[0].mxu0
  %v363 = vadd.f32 %v127, %v362
  %v364 = vpop.f32.mrb[0].mxu0
  %v365 = vadd.f32 %v127, %v364
  %366 = vmatprep.mubr.bf16.mxu0 0
  %367 = vmatmul.mubr.bf16.gmra.mrb[0].mxu0 %v262
  %v368 = vpop.f32.mrb[0].mxu0
  %v369 = vadd.f32 %v132, %v368
  %v370 = vpop.f32.mrb[0].mxu0
  %v371 = vadd.f32 %v132, %v370
  %v372 = vpop.f32.mrb[0].mxu0
  %v373 = vadd.f32 %v137, %v372
  %v374 = vpop.f32.mrb[0].mxu0
  %v375 = vadd.f32 %v137, %v374
  %376 = vdwg.mxu0
  %377 = vmatprep.subr.bf16.mxu0 %v218
  %378 = vmatpush1.bf16.msra.mxu0 %v217
  %379 = vmatprep.subr.bf16.mxu0 %v222
  %380 = vmatpush1.bf16.msra.mxu0 %v221
  %381 = vmatprep.subr.bf16.mxu0 %v226
  %382 = vmatpush1.bf16.msra.mxu0 %v225
  %383 = vmatprep.subr.bf16.mxu0 0
  %384 = vmatpush1.bf16.msra.mxu0 0
  %385 = vmatprep.subr.bf16.mxu0 0
  %386 = vmatpush1.bf16.msra.mxu0 0
  %387 = vmatprep.subr.bf16.mxu0 0
  %388 = vmatpush1.bf16.msra.mxu0 0
  %389 = vmatprep.subr.bf16.mxu0 0
  %390 = vmatpush1.bf16.msra.mxu0 0
  %391 = vmatprep.subr.bf16.mxu0 0
  %392 = vmatpush1.bf16.msra.mxu0 0
  %393 = vmatprep.subr.bf16.mxu0 0
  %394 = vmatpush1.bf16.msra.mxu0 0
  %395 = vmatprep.subr.bf16.mxu0 0
  %396 = vmatpush1.bf16.msra.mxu0 0
  %397 = vmatprep.subr.bf16.mxu0 0
  %398 = vmatpush1.bf16.msra.mxu0 0
  %399 = vmatprep.subr.bf16.mxu0 0
  %400 = vmatpush1.bf16.msra.mxu0 0
  %401 = vmatprep.subr.bf16.mxu0 0
  %402 = vmatpush1.bf16.msra.mxu0 0
  %403 = vmatprep.subr.bf16.mxu0 0
  %404 = vmatpush1.bf16.msra.mxu0 0
  %405 = vmatprep.subr.bf16.mxu0 0
  %406 = vmatpush1.bf16.msra.mxu0 0
  %407 = vmatprep.subr.bf16.mxu0 0
  %408 = vmatpush1.bf16.msra.mxu0 0
  %409 = vmatprep.mubr.bf16.mxu0 0
  %410 = vmatmul.mubr.bf16.gmra.mrb[0].mxu0 %v241
  %v411 = vpop.f32.mrb[0].mxu0
  %v412 = vadd.f32 %v62, %v411
  %v413 = vpop.f32.mrb[0].mxu0
  %v414 = vadd.f32 %v62, %v413
  %v415 = vpop.f32.mrb[0].mxu0
  %v416 = vadd.f32 %v67, %v415
  %v417 = vpop.f32.mrb[0].mxu0
  %v418 = vadd.f32 %v67, %v417
  %419 = vmatprep.mubr.bf16.mxu0 0
  %420 = vmatmul.mubr.bf16.gmra.mrb[0].mxu0 %v244
  %v421 = vpop.f32.mrb[0].mxu0
  %v422 = vadd.f32 %v72, %v421
  %v423 = vpop.f32.mrb[0].mxu0
  %v424 = vadd.f32 %v72, %v423
  %v425 = vpop.f32.mrb[0].mxu0
  %v426 = vadd.f32 %v77, %v425
  %v427 = vpop.f32.mrb[0].mxu0
  %v428 = vadd.f32 %v77, %v427
  %429 = vmatprep.mubr.bf16.mxu0 0
  %430 = vmatmul.mubr.bf16.gmra.mrb[0].mxu0 %v247
  %v431 = vpop.f32.mrb[0].mxu0
  %v432 = vadd.f32 %v82, %v431
  %v433 = vpop.f32.mrb[0].mxu0
  %v434 = vadd.f32 %v82, %v433
  %v435 = vpop.f32.mrb[0].mxu0
  %v436 = vadd.f32 %v87, %v435
  %v437 = vpop.f32.mrb[0].mxu0
  %v438 = vadd.f32 %v87, %v437
  %439 = vmatprep.mubr.bf16.mxu0 0
  %440 = vmatmul.mubr.bf16.gmra.mrb[0].mxu0 %v250
  %v441 = vpop.f32.mrb[0].mxu0
  %v442 = vadd.f32 %v92, %v441
  %v443 = vpop.f32.mrb[0].mxu0
  %v444 = vadd.f32 %v92, %v443
  %v445 = vpop.f32.mrb[0].mxu0
  %v446 = vadd.f32 %v97, %v445
  %v447 = vpop.f32.mrb[0].mxu0
  %v448 = vadd.f32 %v97, %v447
  %449 = vmatprep.mubr.bf16.mxu0 0
  %450 = vmatmul.mubr.bf16.gmra.mrb[0].mxu0 %v253
  %v451 = vpop.f32.mrb[0].mxu0
  %v452 = vadd.f32 %v102, %v451
  %v453 = vpop.f32.mrb[0].mxu0
  %v454 = vadd.f32 %v102, %v453
  %v455 = vpop.f32.mrb[0].mxu0
  %v456 = vadd.f32 %v107, %v455
  %v457 = vpop.f32.mrb[0].mxu0
  %v458 = vadd.f32 %v107, %v457
  %459 = vmatprep.mubr.bf16.mxu0 0
  %460 = vmatmul.mubr.bf16.gmra.mrb[0].mxu0 %v256
  %v461 = vpop.f32.mrb[0].mxu0
  %v462 = vadd.f32 %v112, %v461
  %v463 = vpop.f32.mrb[0].mxu0
  %v464 = vadd.f32 %v112, %v463
  %v465 = vpop.f32.mrb[0].mxu0
  %v466 = vadd.f32 %v117, %v465
  %v467 = vpop.f32.mrb[0].mxu0
  %v468 = vadd.f32 %v117, %v467
  %469 = vmatprep.mubr.bf16.mxu0 0
  %470 = vmatmul.mubr.bf16.gmra.mrb[0].mxu0 %v259
  %v471 = vpop.f32.mrb[0].mxu0
  %v472 = vadd.f32 %v122, %v471
  %v473 = vpop.f32.mrb[0].mxu0
  %v474 = vadd.f32 %v122, %v473
  %v475 = vpop.f32.mrb[0].mxu0
  %v476 = vadd.f32 %v127, %v475
  %v477 = vpop.f32.mrb[0].mxu0
  %v478 = vadd.f32 %v127, %v477
  %479 = vmatprep.mubr.bf16.mxu0 0
  %480 = vmatmul.mubr.bf16.gmra.mrb[0].mxu0 %v262
  %v481 = vpop.f32.mrb[0].mxu0
  %v482 = vadd.f32 %v132, %v481
  %v483 = vpop.f32.mrb[0].mxu0
  %v484 = vadd.f32 %v132, %v483
  %v485 = vpop.f32.mrb[0].mxu0
  %v486 = vadd.f32 %v137, %v485
  %v487 = vpop.f32.mrb[0].mxu0
  %v488 = vadd.f32 %v137, %v487
  %489 = vdwg.mxu0
  %v490 = vmax.f32 %v299, 0.0
  %v491 = vmax.f32 %v301, 0.0
  %v492 = vmax.f32 %v412, 0.0
  %v493 = vmax.f32 %v414, 0.0
  %v494 = vmax.f32 %v303, 0.0
  %v495 = vmax.f32 %v305, 0.0
  %v496 = vmax.f32 %v416, 0.0
  %v497 = vmax.f32 %v418, 0.0
  %v498 = vmax.f32 %v309, 0.0
  %v499 = vmax.f32 %v311, 0.0
  %v500 = vmax.f32 %v422, 0.0
  %v501 = vmax.f32 %v424, 0.0
  %v502 = vmax.f32 %v313, 0.0
  %v503 = vmax.f32 %v315, 0.0
  %v504 = vmax.f32 %v426, 0.0
  %v505 = vmax.f32 %v428, 0.0
  %v506 = vmax.f32 %v319, 0.0
  %v507 = vmax.f32 %v321, 0.0
  %v508 = vmax.f32 %v432, 0.0
  %v509 = vmax.f32 %v434, 0.0
  %v510 = vmax.f32 %v323, 0.0
  %v511 = vmax.f32 %v325, 0.0
  %v512 = vmax.f32 %v436, 0.0
  %v513 = vmax.f32 %v438, 0.0
  %v514 = vmax.f32 %v329, 0.0
  %v515 = vmax.f32 %v331, 0.0
  %v516 = vmax.f32 %v442, 0.0
  %v517 = vmax.f32 %v444, 0.0
  %v518 = vmax.f32 %v333, 0.0
  %v519 = vmax.f32 %v335, 0.0
  %v520 = vmax.f32 %v446, 0.0
  %v521 = vmax.f32 %v448, 0.0
  %v522 = vmax.f32 %v339, 0.0
  %v523 = vmax.f32 %v341, 0.0
  %v524 = vmax.f32 %v452, 0.0
  %v525 = vmax.f32 %v454, 0.0
  %v526 = vmax.f32 %v343, 0.0
  %v527 = vmax.f32 %v345, 0.0
  %v528 = vmax.f32 %v456, 0.0
  %v529 = vmax.f32 %v458, 0.0
  %v530 = vmax.f32 %v349, 0.0
  %v531 = vmax.f32 %v351, 0.0
  %v532 = vmax.f32 %v462, 0.0
  %v533 = vmax.f32 %v464, 0.0
  %v534 = vmax.f32 %v353, 0.0
  %v535 = vmax.f32 %v355, 0.0
  %v536 = vmax.f32 %v466, 0.0
  %v537 = vmax.f32 %v468, 0.0
  %v538 = vmax.f32 %v359, 0.0
  %v539 = vmax.f32 %v361, 0.0
  %v540 = vmax.f32 %v472, 0.0
  %v541 = vmax.f32 %v474, 0.0
  %v542 = vmax.f32 %v363, 0.0
  %v543 = vmax.f32 %v365, 0.0
  %v544 = vmax.f32 %v476, 0.0
  %v545 = vmax.f32 %v478, 0.0
  %v546 = vmax.f32 %v369, 0.0
  %v547 = vmax.f32 %v371, 0.0
  %v548 = vmax.f32 %v482, 0.0
  %v549 = vmax.f32 %v484, 0.0
  %v550 = vmax.f32 %v373, 0.0
  %v551 = vmax.f32 %v375, 0.0
  %v552 = vmax.f32 %v486, 0.0
  %v553 = vmax.f32 %v488, 0.0
  %v554 = vpack.c.bf16 %v494, %v490
  %v555 = vpack.c.bf16 %v495, %v491
  %v556 = vpack.c.bf16 %v496, %v492
  %v557 = vpack.c.bf16 %v497, %v493
  %v558 = vpack.c.bf16 %v502, %v498
  %v559 = vpack.c.bf16 %v503, %v499
  %v560 = vpack.c.bf16 %v504, %v500
  %v561 = vpack.c.bf16 %v505, %v501
  %v562 = vpack.c.bf16 %v510, %v506
  %v563 = vpack.c.bf16 %v511, %v507
  %v564 = vpack.c.bf16 %v512, %v508
  %v565 = vpack.c.bf16 %v513, %v509
  %v566 = vpack.c.bf16 %v518, %v514
  %v567 = vpack.c.bf16 %v519, %v515
  %v568 = vpack.c.bf16 %v520, %v516
  %v569 = vpack.c.bf16 %v521, %v517
  %v570 = vpack.c.bf16 %v526, %v522
  %v571 = vpack.c.bf16 %v527, %v523
  %v572 = vpack.c.bf16 %v528, %v524
  %v573 = vpack.c.bf16 %v529, %v525
  %v574 = vpack.c.bf16 %v534, %v530
  %v575 = vpack.c.bf16 %v535, %v531
  %v576 = vpack.c.bf16 %v536, %v532
  %v577 = vpack.c.bf16 %v537, %v533
  %v578 = vpack.c.bf16 %v542, %v538
  %v579 = vpack.c.bf16 %v543, %v539
  %v580 = vpack.c.bf16 %v544, %v540
  %v581 = vpack.c.bf16 %v545, %v541
  %v582 = vpack.c.bf16 %v550, %v546
  %v583 = vpack.c.bf16 %v551, %v547
  %v584 = vpack.c.bf16 %v552, %v548
  %v585 = vpack.c.bf16 %v553, %v549
  %v618 = vunpack.c.l.b16 %v554
  %v619 = vunpack.c.l.b16 %v555
  %v620 = vunpack.c.l.b16 %v556
  %v621 = vunpack.c.l.b16 %v557
  %v622 = vunpack.c.h.b16 %v554
  %v623 = vunpack.c.h.b16 %v555
  %v624 = vunpack.c.h.b16 %v556
  %v625 = vunpack.c.h.b16 %v557
  %v626 = vunpack.c.l.b16 %v558
  %v627 = vunpack.c.l.b16 %v559
  %v628 = vunpack.c.l.b16 %v560
  %v629 = vunpack.c.l.b16 %v561
  %v630 = vunpack.c.h.b16 %v558
  %v631 = vunpack.c.h.b16 %v559
  %v632 = vunpack.c.h.b16 %v560
  %v633 = vunpack.c.h.b16 %v561
  %v634 = vunpack.c.l.b16 %v562
  %v635 = vunpack.c.l.b16 %v563
  %v636 = vunpack.c.l.b16 %v564
  %v637 = vunpack.c.l.b16 %v565
  %v638 = vunpack.c.h.b16 %v562
  %v639 = vunpack.c.h.b16 %v563
  %v640 = vunpack.c.h.b16 %v564
  %v641 = vunpack.c.h.b16 %v565
  %v642 = vunpack.c.l.b16 %v566
  %v643 = vunpack.c.l.b16 %v567
  %v644 = vunpack.c.l.b16 %v568
  %v645 = vunpack.c.l.b16 %v569
  %v646 = vunpack.c.h.b16 %v566
  %v647 = vunpack.c.h.b16 %v567
  %v648 = vunpack.c.h.b16 %v568
  %v649 = vunpack.c.h.b16 %v569
  %v650 = vunpack.c.l.b16 %v570
  %v651 = vunpack.c.l.b16 %v571
  %v652 = vunpack.c.l.b16 %v572
  %v653 = vunpack.c.l.b16 %v573
  %v654 = vunpack.c.h.b16 %v570
  %v655 = vunpack.c.h.b16 %v571
  %v656 = vunpack.c.h.b16 %v572
  %v657 = vunpack.c.h.b16 %v573
  %v658 = vunpack.c.l.b16 %v574
  %v659 = vunpack.c.l.b16 %v575
  %v660 = vunpack.c.l.b16 %v576
  %v661 = vunpack.c.l.b16 %v577
  %v662 = vunpack.c.h.b16 %v574
  %v663 = vunpack.c.h.b16 %v575
  %v664 = vunpack.c.h.b16 %v576
  %v665 = vunpack.c.h.b16 %v577
  %v666 = vunpack.c.l.b16 %v578
  %v667 = vunpack.c.l.b16 %v579
  %v668 = vunpack.c.l.b16 %v580
  %v669 = vunpack.c.l.b16 %v581
  %v670 = vunpack.c.h.b16 %v578
  %v671 = vunpack.c.h.b16 %v579
  %v672 = vunpack.c.h.b16 %v580
  %v673 = vunpack.c.h.b16 %v581
  %v674 = vunpack.c.l.b16 %v582
  %v675 = vunpack.c.l.b16 %v583
  %v676 = vunpack.c.l.b16 %v584
  %v677 = vunpack.c.l.b16 %v585
  %v678 = vunpack.c.h.b16 %v582
  %v679 = vunpack.c.h.b16 %v583
  %v680 = vunpack.c.h.b16 %v584
  %v681 = vunpack.c.h.b16 %v585
  %v682 = vpack.c.b16 %v619, %v618
  %v683 = vpack.c.b16 %v621, %v620
  %v684 = vpack.c.b16 %v623, %v622
  %v685 = vpack.c.b16 %v625, %v624
  %v686 = vpack.c.b16 %v627, %v626
  %v687 = vpack.c.b16 %v629, %v628
  %v688 = vpack.c.b16 %v631, %v630
  %v689 = vpack.c.b16 %v633, %v632
  %v690 = vpack.c.b16 %v635, %v634
  %v691 = vpack.c.b16 %v637, %v636
  %v692 = vpack.c.b16 %v639, %v638
  %v693 = vpack.c.b16 %v641, %v640
  %v694 = vpack.c.b16 %v643, %v642
  %v695 = vpack.c.b16 %v645, %v644
  %v696 = vpack.c.b16 %v647, %v646
  %v697 = vpack.c.b16 %v649, %v648
  %v698 = vpack.c.b16 %v651, %v650
  %v699 = vpack.c.b16 %v653, %v652
  %v700 = vpack.c.b16 %v655, %v654
  %v701 = vpack.c.b16 %v657, %v656
  %v702 = vpack.c.b16 %v659, %v658
  %v703 = vpack.c.b16 %v661, %v660
  %v704 = vpack.c.b16 %v663, %v662
  %v705 = vpack.c.b16 %v665, %v664
  %v706 = vpack.c.b16 %v667, %v666
  %v707 = vpack.c.b16 %v669, %v668
  %v708 = vpack.c.b16 %v671, %v670
  %v709 = vpack.c.b16 %v673, %v672
  %v710 = vpack.c.b16 %v675, %v674
  %v711 = vpack.c.b16 %v677, %v676
  %v712 = vpack.c.b16 %v679, %v678
  %v713 = vpack.c.b16 %v681, %v680
  %746 = vst [vmem:[%s3] sm:$0xff] %v682
  %747 = vst [vmem:[%s3 + $0x8] sm:$0xff] %v683
  %748 = vst [vmem:[%s3 + $0x10] sm:$0xff] %v684
  %749 = vst [vmem:[%s3 + $0x18] sm:$0xff] %v685
  %750 = vst [vmem:[%s3 + $0x20] sm:$0xff] %v686
  %751 = vst [vmem:[%s3 + $0x28] sm:$0xff] %v687
  %752 = vst [vmem:[%s3 + $0x30] sm:$0xff] %v688
  %753 = vst [vmem:[%s3 + $0x38] sm:$0xff] %v689
  %754 = vst [vmem:[%s3 + $0x40] sm:$0xff] %v690
  %755 = vst [vmem:[%s3 + $0x48] sm:$0xff] %v691
  %756 = vst [vmem:[%s3 + $0x50] sm:$0xff] %v692
  %757 = vst [vmem:[%s3 + $0x58] sm:$0xff] %v693
  %758 = vst [vmem:[%s3 + $0x60] sm:$0xff] %v694
  %759 = vst [vmem:[%s3 + $0x68] sm:$0xff] %v695
  %760 = vst [vmem:[%s3 + $0x70] sm:$0xff] %v696
  %761 = vst [vmem:[%s3 + $0x78] sm:$0xff] %v697
  %762 = vst [vmem:[%s3 + $0x80] sm:$0xff] %v698
  %763 = vst [vmem:[%s3 + $0x88] sm:$0xff] %v699
  %764 = vst [vmem:[%s3 + $0x90] sm:$0xff] %v700
  %765 = vst [vmem:[%s3 + $0x98] sm:$0xff] %v701
  %766 = vst [vmem:[%s3 + $0xa0] sm:$0xff] %v702
  %767 = vst [vmem:[%s3 + $0xa8] sm:$0xff] %v703
  %768 = vst [vmem:[%s3 + $0xb0] sm:$0xff] %v704
  %769 = vst [vmem:[%s3 + $0xb8] sm:$0xff] %v705
  %770 = vst [vmem:[%s3 + $0xc0] sm:$0xff] %v706
  %771 = vst [vmem:[%s3 + $0xc8] sm:$0xff] %v707
  %772 = vst [vmem:[%s3 + $0xd0] sm:$0xff] %v708
  %773 = vst [vmem:[%s3 + $0xd8] sm:$0xff] %v709
  %774 = vst [vmem:[%s3 + $0xe0] sm:$0xff] %v710
  %775 = vst [vmem:[%s3 + $0xe8] sm:$0xff] %v711
  %776 = vst [vmem:[%s3 + $0xf0] sm:$0xff] %v712
  %777 = vst [vmem:[%s3 + $0xf8] sm:$0xff] %v713
  // Predicated region
  $region14: #{s3kai_resnet_forward.22} parent=0 // pred_check
    _
  $region15: #{s3kai_resnet_forward.22} parent=0 // pred_check_branch
    %779 = sbr.rel (0) target = $region17
  $region16: #{s3kai_resnet_forward.22} parent=0 // pred_region
    _
  $region17: #{s3kai_resnet_forward.22} parent=0 // pred_fallthru
    _
  // Predicated region
  $region18: #{s3kai_resnet_forward.22} parent=0 // pred_check
    _
  $region19: #{s3kai_resnet_forward.22} parent=0 // pred_check_branch
    %781 = sbr.rel (0) target = $region21
  $region20: #{s3kai_resnet_forward.22} parent=0 // pred_region
    _
  $region21: #{s3kai_resnet_forward.22} parent=0 // pred_fallthru
    _

// kernel: s3kai_resnet_forward.23
$region0: #{s3kai_resnet_forward.23}
  #allocation0 [shape = 'u32[]', space=smem, size = 0x4, offset = 0x4, fixed_abs, tag = 'smem constant byte address 0x4 - core index']
  #allocation1 [shape = 'u32[144,128]{1,0:T(1,128)}', space=vmem, size = 0x12000, scoped, tag = 'internal scratch']
  %s0 = inlined_call_operand.vmem [shape: bf16[16,1152], index: 0, kind: input, shape index: {}]
  %s1 = inlined_call_operand.vmem [shape: bf16[1152,256], index: 1, kind: input, shape index: {}]
  %s2 = inlined_call_operand.vmem [shape: f32[16,1], index: 2, kind: input, shape index: {}]
  %s3 = inlined_call_operand.vmem [shape: bf16[16,256], index: 3, kind: output, shape index: {}]
  %s4 = sld [smem:[#allocation0]]
  $region22: #{s3kai_resnet_forward.23} parent=0
    _
  %s6 = ssub.s32 1, %s4
  %s7 = scalar_select 0, %s6, %s4
  // Predicated region
  $region2: #{s3kai_resnet_forward.23} parent=0 // pred_check
    _
  $region3: #{s3kai_resnet_forward.23} parent=0 // pred_check_branch
    %9 = sbr.rel (0) target = $region5
  $region4: #{s3kai_resnet_forward.23} parent=0 // pred_region
    _
  $region5: #{s3kai_resnet_forward.23} parent=0 // pred_fallthru
    _
  // Predicated region
  $region6: #{s3kai_resnet_forward.23} parent=0 // pred_check
    _
  $region7: #{s3kai_resnet_forward.23} parent=0 // pred_check_branch
    %11 = sbr.rel (0) target = $region9
  $region8: #{s3kai_resnet_forward.23} parent=0 // pred_region
    _
  $region9: #{s3kai_resnet_forward.23} parent=0 // pred_fallthru
    _
  // Predicated region
  $region10: #{s3kai_resnet_forward.23} parent=0 // pred_check
    _
  $region11: #{s3kai_resnet_forward.23} parent=0 // pred_check_branch
    %13 = sbr.rel (0) target = $region13
  $region12: #{s3kai_resnet_forward.23} parent=0 // pred_region
    _
  $region13: #{s3kai_resnet_forward.23} parent=0 // pred_fallthru
    _
  %v15 = vld [vmem:[%s0] sm:$0xff]
  %v16 = vld [vmem:[%s0 + $0x8] sm:$0xff]
  %v17 = vld [vmem:[%s0 + $0x10] sm:$0xff]
  %v18 = vld [vmem:[%s0 + $0x18] sm:$0xff]
  %v19 = vld [vmem:[%s0 + $0x20] sm:$0xf]
  %v20 = vld [vmem:[%s0 + $0x24] sm:$0xff]
  %v21 = vld [vmem:[%s0 + $0x2c] sm:$0xff]
  %v22 = vld [vmem:[%s0 + $0x34] sm:$0xff]
  %v23 = vld [vmem:[%s0 + $0x3c] sm:$0xff]
  %v24 = vld [vmem:[%s0 + $0x44] sm:$0xf]
  %v25 = vld [vmem:[%s1] sm:$0xff]
  %v26 = vld [vmem:[%s1 + $0x8] sm:$0xff]
  %v27 = vld [vmem:[%s1 + $0x10] sm:$0xff]
  %v28 = vld [vmem:[%s1 + $0x18] sm:$0xff]
  %v29 = vld [vmem:[%s1 + $0x20] sm:$0xff]
  %v30 = vld [vmem:[%s1 + $0x28] sm:$0xff]
  %v31 = vld [vmem:[%s1 + $0x30] sm:$0xff]
  %v32 = vld [vmem:[%s1 + $0x38] sm:$0xff]
  %v33 = vld [vmem:[%s1 + $0x40] sm:$0xff]
  %v34 = vld [vmem:[%s1 + $0x48] sm:$0xff]
  %v35 = vld [vmem:[%s1 + $0x50] sm:$0xff]
  %v36 = vld [vmem:[%s1 + $0x58] sm:$0xff]
  %v37 = vld [vmem:[%s1 + $0x60] sm:$0xff]
  %v38 = vld [vmem:[%s1 + $0x68] sm:$0xff]
  %v39 = vld [vmem:[%s1 + $0x70] sm:$0xff]
  %v40 = vld [vmem:[%s1 + $0x78] sm:$0xff]
  %v41 = vld [vmem:[%s1 + $0x80] sm:$0xff]
  %v42 = vld [vmem:[%s1 + $0x88] sm:$0xff]
  %v43 = vld [vmem:[%s1 + $0x90] sm:$0xff]
  %v44 = vld [vmem:[%s1 + $0x98] sm:$0xff]
  %v45 = vld [vmem:[%s1 + $0xa0] sm:$0xff]
  %v46 = vld [vmem:[%s1 + $0xa8] sm:$0xff]
  %v47 = vld [vmem:[%s1 + $0xb0] sm:$0xff]
  %v48 = vld [vmem:[%s1 + $0xb8] sm:$0xff]
  %v49 = vld [vmem:[%s1 + $0xc0] sm:$0xff]
  %v50 = vld [vmem:[%s1 + $0xc8] sm:$0xff]
  %v51 = vld [vmem:[%s1 + $0xd0] sm:$0xff]
  %v52 = vld [vmem:[%s1 + $0xd8] sm:$0xff]
  %v53 = vld [vmem:[%s1 + $0xe0] sm:$0xff]
  %v54 = vld [vmem:[%s1 + $0xe8] sm:$0xff]
  %v55 = vld [vmem:[%s1 + $0xf0] sm:$0xff]
  %v56 = vld [vmem:[%s1 + $0xf8] sm:$0xff]
  %v57 = vld [vmem:[%s1 + $0x100] sm:$0xff]
  %v58 = vld [vmem:[%s1 + $0x108] sm:$0xff]
  %v59 = vld [vmem:[%s1 + $0x110] sm:$0xff]
  %v60 = vld [vmem:[%s1 + $0x118] sm:$0xff]
  %v61 = vld [vmem:[%s1 + $0x120] sm:$0xff]
  %v62 = vld [vmem:[%s1 + $0x128] sm:$0xff]
  %v63 = vld [vmem:[%s1 + $0x130] sm:$0xff]
  %v64 = vld [vmem:[%s1 + $0x138] sm:$0xff]
  %v65 = vld [vmem:[%s1 + $0x140] sm:$0xff]
  %v66 = vld [vmem:[%s1 + $0x148] sm:$0xff]
  %v67 = vld [vmem:[%s1 + $0x150] sm:$0xff]
  %v68 = vld [vmem:[%s1 + $0x158] sm:$0xff]
  %v69 = vld [vmem:[%s1 + $0x160] sm:$0xff]
  %v70 = vld [vmem:[%s1 + $0x168] sm:$0xff]
  %v71 = vld [vmem:[%s1 + $0x170] sm:$0xff]
  %v72 = vld [vmem:[%s1 + $0x178] sm:$0xff]
  %v73 = vld [vmem:[%s1 + $0x180] sm:$0xff]
  %v74 = vld [vmem:[%s1 + $0x188] sm:$0xff]
  %v75 = vld [vmem:[%s1 + $0x190] sm:$0xff]
  %v76 = vld [vmem:[%s1 + $0x198] sm:$0xff]
  %v77 = vld [vmem:[%s1 + $0x1a0] sm:$0xff]
  %v78 = vld [vmem:[%s1 + $0x1a8] sm:$0xff]
  %v79 = vld [vmem:[%s1 + $0x1b0] sm:$0xff]
  %v80 = vld [vmem:[%s1 + $0x1b8] sm:$0xff]
  %v81 = vld [vmem:[%s1 + $0x1c0] sm:$0xff]
  %v82 = vld [vmem:[%s1 + $0x1c8] sm:$0xff]
  %v83 = vld [vmem:[%s1 + $0x1d0] sm:$0xff]
  %v84 = vld [vmem:[%s1 + $0x1d8] sm:$0xff]
  %v85 = vld [vmem:[%s1 + $0x1e0] sm:$0xff]
  %v86 = vld [vmem:[%s1 + $0x1e8] sm:$0xff]
  %v87 = vld [vmem:[%s1 + $0x1f0] sm:$0xff]
  %v88 = vld [vmem:[%s1 + $0x1f8] sm:$0xff]
  %v89 = vld [vmem:[%s1 + $0x200] sm:$0xff]
  %v90 = vld [vmem:[%s1 + $0x208] sm:$0xff]
  %v91 = vld [vmem:[%s1 + $0x210] sm:$0xff]
  %v92 = vld [vmem:[%s1 + $0x218] sm:$0xff]
  %v93 = vld [vmem:[%s1 + $0x220] sm:$0xff]
  %v94 = vld [vmem:[%s1 + $0x228] sm:$0xff]
  %v95 = vld [vmem:[%s1 + $0x230] sm:$0xff]
  %v96 = vld [vmem:[%s1 + $0x238] sm:$0xff]
  %v97 = vld [vmem:[%s1 + $0x240] sm:$0xff]
  %v98 = vld [vmem:[%s1 + $0x248] sm:$0xff]
  %v99 = vld [vmem:[%s1 + $0x250] sm:$0xff]
  %v100 = vld [vmem:[%s1 + $0x258] sm:$0xff]
  %v101 = vld [vmem:[%s1 + $0x260] sm:$0xff]
  %v102 = vld [vmem:[%s1 + $0x268] sm:$0xff]
  %v103 = vld [vmem:[%s1 + $0x270] sm:$0xff]
  %v104 = vld [vmem:[%s1 + $0x278] sm:$0xff]
  %v105 = vld [vmem:[%s1 + $0x280] sm:$0xff]
  %v106 = vld [vmem:[%s1 + $0x288] sm:$0xff]
  %v107 = vld [vmem:[%s1 + $0x290] sm:$0xff]
  %v108 = vld [vmem:[%s1 + $0x298] sm:$0xff]
  %v109 = vld [vmem:[%s1 + $0x2a0] sm:$0xff]
  %v110 = vld [vmem:[%s1 + $0x2a8] sm:$0xff]
  %v111 = vld [vmem:[%s1 + $0x2b0] sm:$0xff]
  %v112 = vld [vmem:[%s1 + $0x2b8] sm:$0xff]
  %v113 = vld [vmem:[%s1 + $0x2c0] sm:$0xff]
  %v114 = vld [vmem:[%s1 + $0x2c8] sm:$0xff]
  %v115 = vld [vmem:[%s1 + $0x2d0] sm:$0xff]
  %v116 = vld [vmem:[%s1 + $0x2d8] sm:$0xff]
  %v117 = vld [vmem:[%s1 + $0x2e0] sm:$0xff]
  %v118 = vld [vmem:[%s1 + $0x2e8] sm:$0xff]
  %v119 = vld [vmem:[%s1 + $0x2f0] sm:$0xff]
  %v120 = vld [vmem:[%s1 + $0x2f8] sm:$0xff]
  %v121 = vld [vmem:[%s1 + $0x300] sm:$0xff]
  %v122 = vld [vmem:[%s1 + $0x308] sm:$0xff]
  %v123 = vld [vmem:[%s1 + $0x310] sm:$0xff]
  %v124 = vld [vmem:[%s1 + $0x318] sm:$0xff]
  %v125 = vld [vmem:[%s1 + $0x320] sm:$0xff]
  %v126 = vld [vmem:[%s1 + $0x328] sm:$0xff]
  %v127 = vld [vmem:[%s1 + $0x330] sm:$0xff]
  %v128 = vld [vmem:[%s1 + $0x338] sm:$0xff]
  %v129 = vld [vmem:[%s1 + $0x340] sm:$0xff]
  %v130 = vld [vmem:[%s1 + $0x348] sm:$0xff]
  %v131 = vld [vmem:[%s1 + $0x350] sm:$0xff]
  %v132 = vld [vmem:[%s1 + $0x358] sm:$0xff]
  %v133 = vld [vmem:[%s1 + $0x360] sm:$0xff]
  %v134 = vld [vmem:[%s1 + $0x368] sm:$0xff]
  %v135 = vld [vmem:[%s1 + $0x370] sm:$0xff]
  %v136 = vld [vmem:[%s1 + $0x378] sm:$0xff]
  %v137 = vld [vmem:[%s1 + $0x380] sm:$0xff]
  %v138 = vld [vmem:[%s1 + $0x388] sm:$0xff]
  %v139 = vld [vmem:[%s1 + $0x390] sm:$0xff]
  %v140 = vld [vmem:[%s1 + $0x398] sm:$0xff]
  %v141 = vld [vmem:[%s1 + $0x3a0] sm:$0xff]
  %v142 = vld [vmem:[%s1 + $0x3a8] sm:$0xff]
  %v143 = vld [vmem:[%s1 + $0x3b0] sm:$0xff]
  %v144 = vld [vmem:[%s1 + $0x3b8] sm:$0xff]
  %v145 = vld [vmem:[%s1 + $0x3c0] sm:$0xff]
  %v146 = vld [vmem:[%s1 + $0x3c8] sm:$0xff]
  %v147 = vld [vmem:[%s1 + $0x3d0] sm:$0xff]
  %v148 = vld [vmem:[%s1 + $0x3d8] sm:$0xff]
  %v149 = vld [vmem:[%s1 + $0x3e0] sm:$0xff]
  %v150 = vld [vmem:[%s1 + $0x3e8] sm:$0xff]
  %v151 = vld [vmem:[%s1 + $0x3f0] sm:$0xff]
  %v152 = vld [vmem:[%s1 + $0x3f8] sm:$0xff]
  %v153 = vld [vmem:[%s1 + $0x400] sm:$0xff]
  %v154 = vld [vmem:[%s1 + $0x408] sm:$0xff]
  %v155 = vld [vmem:[%s1 + $0x410] sm:$0xff]
  %v156 = vld [vmem:[%s1 + $0x418] sm:$0xff]
  %v157 = vld [vmem:[%s1 + $0x420] sm:$0xff]
  %v158 = vld [vmem:[%s1 + $0x428] sm:$0xff]
  %v159 = vld [vmem:[%s1 + $0x430] sm:$0xff]
  %v160 = vld [vmem:[%s1 + $0x438] sm:$0xff]
  %v161 = vld [vmem:[%s1 + $0x440] sm:$0xff]
  %v162 = vld [vmem:[%s1 + $0x448] sm:$0xff]
  %v163 = vld [vmem:[%s1 + $0x450] sm:$0xff]
  %v164 = vld [vmem:[%s1 + $0x458] sm:$0xff]
  %v165 = vld [vmem:[%s1 + $0x460] sm:$0xff]
  %v166 = vld [vmem:[%s1 + $0x468] sm:$0xff]
  %v167 = vld [vmem:[%s1 + $0x470] sm:$0xff]
  %v168 = vld [vmem:[%s1 + $0x478] sm:$0xff]
  %v169 = vld [vmem:[%s2] sm:$0xff]
  %v170 = vld [vmem:[%s2 + $0x8] sm:$0xff]
  %172 = vset.pattern.permute.xlu0 0
  %173 = vperm.xlu0 %172, %v169
  %v174 = vpop.permute.xlu0 %173
  %177 = vset.pattern.permute.xlu0 0
  %178 = vperm.xlu0 %177, %v170
  %v179 = vpop.permute.xlu0 %178
  %v191 = vunpack.c.l.b16 %v15
  %v192 = vunpack.c.h.b16 %v15
  %v193 = vunpack.c.l.b16 %v16
  %v194 = vunpack.c.h.b16 %v16
  %v195 = vunpack.c.l.b16 %v17
  %v196 = vunpack.c.h.b16 %v17
  %v197 = vunpack.c.l.b16 %v18
  %v198 = vunpack.c.h.b16 %v18
  %v199 = vunpack.c.l.b16 %v19
  %v200 = vunpack.c.l.b16 %v20
  %v201 = vunpack.c.h.b16 %v20
  %v202 = vunpack.c.l.b16 %v21
  %v203 = vunpack.c.h.b16 %v21
  %v204 = vunpack.c.l.b16 %v22
  %v205 = vunpack.c.h.b16 %v22
  %v206 = vunpack.c.l.b16 %v23
  %v207 = vunpack.c.h.b16 %v23
  %v208 = vunpack.c.l.b16 %v24
  %v209 = vpack.c.b16 %v200, %v191
  %v210 = vpack.c.b16 %v201, %v192
  %v211 = vpack.c.b16 %v202, %v193
  %v212 = vpack.c.b16 %v203, %v194
  %v213 = vpack.c.b16 %v204, %v195
  %v214 = vpack.c.b16 %v205, %v196
  %v215 = vpack.c.b16 %v206, %v197
  %v216 = vpack.c.b16 %v207, %v198
  %v217 = vpack.c.b16 %v208, %v199
  %v371 = vunpack.c.l.b16 %v25
  %v372 = vunpack.c.h.b16 %v25
  %v373 = vunpack.c.l.b16 %v26
  %v374 = vunpack.c.h.b16 %v26
  %v375 = vunpack.c.l.b16 %v27
  %v376 = vunpack.c.h.b16 %v27
  %v377 = vunpack.c.l.b16 %v28
  %v378 = vunpack.c.h.b16 %v28
  %v379 = vunpack.c.l.b16 %v29
  %v380 = vunpack.c.h.b16 %v29
  %v381 = vunpack.c.l.b16 %v30
  %v382 = vunpack.c.h.b16 %v30
  %v383 = vunpack.c.l.b16 %v31
  %v384 = vunpack.c.h.b16 %v31
  %v385 = vunpack.c.l.b16 %v32
  %v386 = vunpack.c.h.b16 %v32
  %v387 = vunpack.c.l.b16 %v33
  %v388 = vunpack.c.h.b16 %v33
  %v389 = vunpack.c.l.b16 %v34
  %v390 = vunpack.c.h.b16 %v34
  %v391 = vunpack.c.l.b16 %v35
  %v392 = vunpack.c.h.b16 %v35
  %v393 = vunpack.c.l.b16 %v36
  %v394 = vunpack.c.h.b16 %v36
  %v395 = vunpack.c.l.b16 %v37
  %v396 = vunpack.c.h.b16 %v37
  %v397 = vunpack.c.l.b16 %v38
  %v398 = vunpack.c.h.b16 %v38
  %v399 = vunpack.c.l.b16 %v39
  %v400 = vunpack.c.h.b16 %v39
  %v401 = vunpack.c.l.b16 %v40
  %v402 = vunpack.c.h.b16 %v40
  %v403 = vunpack.c.l.b16 %v41
  %v404 = vunpack.c.h.b16 %v41
  %v405 = vunpack.c.l.b16 %v42
  %v406 = vunpack.c.h.b16 %v42
  %v407 = vunpack.c.l.b16 %v43
  %v408 = vunpack.c.h.b16 %v43
  %v409 = vunpack.c.l.b16 %v44
  %v410 = vunpack.c.h.b16 %v44
  %v411 = vunpack.c.l.b16 %v45
  %v412 = vunpack.c.h.b16 %v45
  %v413 = vunpack.c.l.b16 %v46
  %v414 = vunpack.c.h.b16 %v46
  %v415 = vunpack.c.l.b16 %v47
  %v416 = vunpack.c.h.b16 %v47
  %v417 = vunpack.c.l.b16 %v48
  %v418 = vunpack.c.h.b16 %v48
  %v419 = vunpack.c.l.b16 %v49
  %v420 = vunpack.c.h.b16 %v49
  %v421 = vunpack.c.l.b16 %v50
  %v422 = vunpack.c.h.b16 %v50
  %v423 = vunpack.c.l.b16 %v51
  %v424 = vunpack.c.h.b16 %v51
  %v425 = vunpack.c.l.b16 %v52
  %v426 = vunpack.c.h.b16 %v52
  %v427 = vunpack.c.l.b16 %v53
  %v428 = vunpack.c.h.b16 %v53
  %v429 = vunpack.c.l.b16 %v54
  %v430 = vunpack.c.h.b16 %v54
  %v431 = vunpack.c.l.b16 %v55
  %v432 = vunpack.c.h.b16 %v55
  %v433 = vunpack.c.l.b16 %v56
  %v434 = vunpack.c.h.b16 %v56
  %v435 = vunpack.c.l.b16 %v57
  %v436 = vunpack.c.h.b16 %v57
  %v437 = vunpack.c.l.b16 %v58
  %v438 = vunpack.c.h.b16 %v58
  %v439 = vunpack.c.l.b16 %v59
  %v440 = vunpack.c.h.b16 %v59
  %v441 = vunpack.c.l.b16 %v60
  %v442 = vunpack.c.h.b16 %v60
  %v443 = vunpack.c.l.b16 %v61
  %v444 = vunpack.c.h.b16 %v61
  %v445 = vunpack.c.l.b16 %v62
  %v446 = vunpack.c.h.b16 %v62
  %v447 = vunpack.c.l.b16 %v63
  %v448 = vunpack.c.h.b16 %v63
  %v449 = vunpack.c.l.b16 %v64
  %v450 = vunpack.c.h.b16 %v64
  %v451 = vunpack.c.l.b16 %v65
  %v452 = vunpack.c.h.b16 %v65
  %v453 = vunpack.c.l.b16 %v66
  %v454 = vunpack.c.h.b16 %v66
  %v455 = vunpack.c.l.b16 %v67
  %v456 = vunpack.c.h.b16 %v67
  %v457 = vunpack.c.l.b16 %v68
  %v458 = vunpack.c.h.b16 %v68
  %v459 = vunpack.c.l.b16 %v69
  %v460 = vunpack.c.h.b16 %v69
  %v461 = vunpack.c.l.b16 %v70
  %v462 = vunpack.c.h.b16 %v70
  %v463 = vunpack.c.l.b16 %v71
  %v464 = vunpack.c.h.b16 %v71
  %v465 = vunpack.c.l.b16 %v72
  %v466 = vunpack.c.h.b16 %v72
  %v467 = vunpack.c.l.b16 %v73
  %v468 = vunpack.c.h.b16 %v73
  %v469 = vunpack.c.l.b16 %v74
  %v470 = vunpack.c.h.b16 %v74
  %v471 = vunpack.c.l.b16 %v75
  %v472 = vunpack.c.h.b16 %v75
  %v473 = vunpack.c.l.b16 %v76
  %v474 = vunpack.c.h.b16 %v76
  %v475 = vunpack.c.l.b16 %v77
  %v476 = vunpack.c.h.b16 %v77
  %v477 = vunpack.c.l.b16 %v78
  %v478 = vunpack.c.h.b16 %v78
  %v479 = vunpack.c.l.b16 %v79
  %v480 = vunpack.c.h.b16 %v79
  %v481 = vunpack.c.l.b16 %v80
  %v482 = vunpack.c.h.b16 %v80
  %v483 = vunpack.c.l.b16 %v81
  %v484 = vunpack.c.h.b16 %v81
  %v485 = vunpack.c.l.b16 %v82
  %v486 = vunpack.c.h.b16 %v82
  %v487 = vunpack.c.l.b16 %v83
  %v488 = vunpack.c.h.b16 %v83
  %v489 = vunpack.c.l.b16 %v84
  %v490 = vunpack.c.h.b16 %v84
  %v491 = vunpack.c.l.b16 %v85
  %v492 = vunpack.c.h.b16 %v85
  %v493 = vunpack.c.l.b16 %v86
  %v494 = vunpack.c.h.b16 %v86
  %v495 = vunpack.c.l.b16 %v87
  %v496 = vunpack.c.h.b16 %v87
  %v497 = vunpack.c.l.b16 %v88
  %v498 = vunpack.c.h.b16 %v88
  %v499 = vunpack.c.l.b16 %v89
  %v500 = vunpack.c.h.b16 %v89
  %v501 = vunpack.c.l.b16 %v90
  %v502 = vunpack.c.h.b16 %v90
  %v503 = vunpack.c.l.b16 %v91
  %v504 = vunpack.c.h.b16 %v91
  %v505 = vunpack.c.l.b16 %v92
  %v506 = vunpack.c.h.b16 %v92
  %v507 = vunpack.c.l.b16 %v93
  %v508 = vunpack.c.h.b16 %v93
  %v509 = vunpack.c.l.b16 %v94
  %v510 = vunpack.c.h.b16 %v94
  %v511 = vunpack.c.l.b16 %v95
  %v512 = vunpack.c.h.b16 %v95
  %v513 = vunpack.c.l.b16 %v96
  %v514 = vunpack.c.h.b16 %v96
  %v515 = vunpack.c.l.b16 %v97
  %v516 = vunpack.c.h.b16 %v97
  %v517 = vunpack.c.l.b16 %v98
  %v518 = vunpack.c.h.b16 %v98
  %v519 = vunpack.c.l.b16 %v99
  %v520 = vunpack.c.h.b16 %v99
  %v521 = vunpack.c.l.b16 %v100
  %v522 = vunpack.c.h.b16 %v100
  %v523 = vunpack.c.l.b16 %v101
  %v524 = vunpack.c.h.b16 %v101
  %v525 = vunpack.c.l.b16 %v102
  %v526 = vunpack.c.h.b16 %v102
  %v527 = vunpack.c.l.b16 %v103
  %v528 = vunpack.c.h.b16 %v103
  %v529 = vunpack.c.l.b16 %v104
  %v530 = vunpack.c.h.b16 %v104
  %v531 = vunpack.c.l.b16 %v105
  %v532 = vunpack.c.h.b16 %v105
  %v533 = vunpack.c.l.b16 %v106
  %v534 = vunpack.c.h.b16 %v106
  %v535 = vunpack.c.l.b16 %v107
  %v536 = vunpack.c.h.b16 %v107
  %v537 = vunpack.c.l.b16 %v108
  %v538 = vunpack.c.h.b16 %v108
  %v539 = vunpack.c.l.b16 %v109
  %v540 = vunpack.c.h.b16 %v109
  %v541 = vunpack.c.l.b16 %v110
  %v542 = vunpack.c.h.b16 %v110
  %v543 = vunpack.c.l.b16 %v111
  %v544 = vunpack.c.h.b16 %v111
  %v545 = vunpack.c.l.b16 %v112
  %v546 = vunpack.c.h.b16 %v112
  %v547 = vunpack.c.l.b16 %v113
  %v548 = vunpack.c.h.b16 %v113
  %v549 = vunpack.c.l.b16 %v114
  %v550 = vunpack.c.h.b16 %v114
  %v551 = vunpack.c.l.b16 %v115
  %v552 = vunpack.c.h.b16 %v115
  %v553 = vunpack.c.l.b16 %v116
  %v554 = vunpack.c.h.b16 %v116
  %v555 = vunpack.c.l.b16 %v117
  %v556 = vunpack.c.h.b16 %v117
  %v557 = vunpack.c.l.b16 %v118
  %v558 = vunpack.c.h.b16 %v118
  %v559 = vunpack.c.l.b16 %v119
  %v560 = vunpack.c.h.b16 %v119
  %v561 = vunpack.c.l.b16 %v120
  %v562 = vunpack.c.h.b16 %v120
  %v563 = vunpack.c.l.b16 %v121
  %v564 = vunpack.c.h.b16 %v121
  %v565 = vunpack.c.l.b16 %v122
  %v566 = vunpack.c.h.b16 %v122
  %v567 = vunpack.c.l.b16 %v123
  %v568 = vunpack.c.h.b16 %v123
  %v569 = vunpack.c.l.b16 %v124
  %v570 = vunpack.c.h.b16 %v124
  %v571 = vunpack.c.l.b16 %v125
  %v572 = vunpack.c.h.b16 %v125
  %v573 = vunpack.c.l.b16 %v126
  %v574 = vunpack.c.h.b16 %v126
  %v575 = vunpack.c.l.b16 %v127
  %v576 = vunpack.c.h.b16 %v127
  %v577 = vunpack.c.l.b16 %v128
  %v578 = vunpack.c.h.b16 %v128
  %v579 = vunpack.c.l.b16 %v129
  %v580 = vunpack.c.h.b16 %v129
  %v581 = vunpack.c.l.b16 %v130
  %v582 = vunpack.c.h.b16 %v130
  %v583 = vunpack.c.l.b16 %v131
  %v584 = vunpack.c.h.b16 %v131
  %v585 = vunpack.c.l.b16 %v132
  %v586 = vunpack.c.h.b16 %v132
  %v587 = vunpack.c.l.b16 %v133
  %v588 = vunpack.c.h.b16 %v133
  %v589 = vunpack.c.l.b16 %v134
  %v590 = vunpack.c.h.b16 %v134
  %v591 = vunpack.c.l.b16 %v135
  %v592 = vunpack.c.h.b16 %v135
  %v593 = vunpack.c.l.b16 %v136
  %v594 = vunpack.c.h.b16 %v136
  %v595 = vunpack.c.l.b16 %v137
  %v596 = vunpack.c.h.b16 %v137
  %v597 = vunpack.c.l.b16 %v138
  %v598 = vunpack.c.h.b16 %v138
  %v599 = vunpack.c.l.b16 %v139
  %v600 = vunpack.c.h.b16 %v139
  %v601 = vunpack.c.l.b16 %v140
  %v602 = vunpack.c.h.b16 %v140
  %v603 = vunpack.c.l.b16 %v141
  %v604 = vunpack.c.h.b16 %v141
  %v605 = vunpack.c.l.b16 %v142
  %v606 = vunpack.c.h.b16 %v142
  %v607 = vunpack.c.l.b16 %v143
  %v608 = vunpack.c.h.b16 %v143
  %v609 = vunpack.c.l.b16 %v144
  %v610 = vunpack.c.h.b16 %v144
  %v611 = vunpack.c.l.b16 %v145
  %v612 = vunpack.c.h.b16 %v145
  %v613 = vunpack.c.l.b16 %v146
  %v614 = vunpack.c.h.b16 %v146
  %v615 = vunpack.c.l.b16 %v147
  %v616 = vunpack.c.h.b16 %v147
  %v617 = vunpack.c.l.b16 %v148
  %v618 = vunpack.c.h.b16 %v148
  %v619 = vunpack.c.l.b16 %v149
  %v620 = vunpack.c.h.b16 %v149
  %v621 = vunpack.c.l.b16 %v150
  %v622 = vunpack.c.h.b16 %v150
  %v623 = vunpack.c.l.b16 %v151
  %v624 = vunpack.c.h.b16 %v151
  %v625 = vunpack.c.l.b16 %v152
  %v626 = vunpack.c.h.b16 %v152
  %v627 = vunpack.c.l.b16 %v153
  %v628 = vunpack.c.h.b16 %v153
  %v629 = vunpack.c.l.b16 %v154
  %v630 = vunpack.c.h.b16 %v154
  %v631 = vunpack.c.l.b16 %v155
  %v632 = vunpack.c.h.b16 %v155
  %v633 = vunpack.c.l.b16 %v156
  %v634 = vunpack.c.h.b16 %v156
  %v635 = vunpack.c.l.b16 %v157
  %v636 = vunpack.c.h.b16 %v157
  %v637 = vunpack.c.l.b16 %v158
  %v638 = vunpack.c.h.b16 %v158
  %v639 = vunpack.c.l.b16 %v159
  %v640 = vunpack.c.h.b16 %v159
  %v641 = vunpack.c.l.b16 %v160
  %v642 = vunpack.c.h.b16 %v160
  %v643 = vunpack.c.l.b16 %v161
  %v644 = vunpack.c.h.b16 %v161
  %v645 = vunpack.c.l.b16 %v162
  %v646 = vunpack.c.h.b16 %v162
  %v647 = vunpack.c.l.b16 %v163
  %v648 = vunpack.c.h.b16 %v163
  %v649 = vunpack.c.l.b16 %v164
  %v650 = vunpack.c.h.b16 %v164
  %v651 = vunpack.c.l.b16 %v165
  %v652 = vunpack.c.h.b16 %v165
  %v653 = vunpack.c.l.b16 %v166
  %v654 = vunpack.c.h.b16 %v166
  %v655 = vunpack.c.l.b16 %v167
  %v656 = vunpack.c.h.b16 %v167
  %v657 = vunpack.c.l.b16 %v168
  %v658 = vunpack.c.h.b16 %v168
  %v659 = vpack.c.b16 %v373, %v371
  %v660 = vpack.c.b16 %v374, %v372
  %v661 = vpack.c.b16 %v377, %v375
  %v662 = vpack.c.b16 %v378, %v376
  %v663 = vpack.c.b16 %v381, %v379
  %v664 = vpack.c.b16 %v382, %v380
  %v665 = vpack.c.b16 %v385, %v383
  %v666 = vpack.c.b16 %v386, %v384
  %v667 = vpack.c.b16 %v389, %v387
  %v668 = vpack.c.b16 %v390, %v388
  %v669 = vpack.c.b16 %v393, %v391
  %v670 = vpack.c.b16 %v394, %v392
  %v671 = vpack.c.b16 %v397, %v395
  %v672 = vpack.c.b16 %v398, %v396
  %v673 = vpack.c.b16 %v401, %v399
  %v674 = vpack.c.b16 %v402, %v400
  %v675 = vpack.c.b16 %v405, %v403
  %v676 = vpack.c.b16 %v406, %v404
  %v677 = vpack.c.b16 %v409, %v407
  %v678 = vpack.c.b16 %v410, %v408
  %v679 = vpack.c.b16 %v413, %v411
  %v680 = vpack.c.b16 %v414, %v412
  %v681 = vpack.c.b16 %v417, %v415
  %v682 = vpack.c.b16 %v418, %v416
  %v683 = vpack.c.b16 %v421, %v419
  %v684 = vpack.c.b16 %v422, %v420
  %v685 = vpack.c.b16 %v425, %v423
  %v686 = vpack.c.b16 %v426, %v424
  %v687 = vpack.c.b16 %v429, %v427
  %v688 = vpack.c.b16 %v430, %v428
  %v689 = vpack.c.b16 %v433, %v431
  %v690 = vpack.c.b16 %v434, %v432
  %v691 = vpack.c.b16 %v437, %v435
  %v692 = vpack.c.b16 %v438, %v436
  %v693 = vpack.c.b16 %v441, %v439
  %v694 = vpack.c.b16 %v442, %v440
  %v695 = vpack.c.b16 %v445, %v443
  %v696 = vpack.c.b16 %v446, %v444
  %v697 = vpack.c.b16 %v449, %v447
  %v698 = vpack.c.b16 %v450, %v448
  %v699 = vpack.c.b16 %v453, %v451
  %v700 = vpack.c.b16 %v454, %v452
  %v701 = vpack.c.b16 %v457, %v455
  %v702 = vpack.c.b16 %v458, %v456
  %v703 = vpack.c.b16 %v461, %v459
  %v704 = vpack.c.b16 %v462, %v460
  %v705 = vpack.c.b16 %v465, %v463
  %v706 = vpack.c.b16 %v466, %v464
  %v707 = vpack.c.b16 %v469, %v467
  %v708 = vpack.c.b16 %v470, %v468
  %v709 = vpack.c.b16 %v473, %v471
  %v710 = vpack.c.b16 %v474, %v472
  %v711 = vpack.c.b16 %v477, %v475
  %v712 = vpack.c.b16 %v478, %v476
  %v713 = vpack.c.b16 %v481, %v479
  %v714 = vpack.c.b16 %v482, %v480
  %v715 = vpack.c.b16 %v485, %v483
  %v716 = vpack.c.b16 %v486, %v484
  %v717 = vpack.c.b16 %v489, %v487
  %v718 = vpack.c.b16 %v490, %v488
  %v719 = vpack.c.b16 %v493, %v491
  %v720 = vpack.c.b16 %v494, %v492
  %v721 = vpack.c.b16 %v497, %v495
  %v722 = vpack.c.b16 %v498, %v496
  %v723 = vpack.c.b16 %v501, %v499
  %v724 = vpack.c.b16 %v502, %v500
  %v725 = vpack.c.b16 %v505, %v503
  %v726 = vpack.c.b16 %v506, %v504
  %v727 = vpack.c.b16 %v509, %v507
  %v728 = vpack.c.b16 %v510, %v508
  %v729 = vpack.c.b16 %v513, %v511
  %v730 = vpack.c.b16 %v514, %v512
  %v731 = vpack.c.b16 %v517, %v515
  %v732 = vpack.c.b16 %v518, %v516
  %v733 = vpack.c.b16 %v521, %v519
  %v734 = vpack.c.b16 %v522, %v520
  %v735 = vpack.c.b16 %v525, %v523
  %v736 = vpack.c.b16 %v526, %v524
  %v737 = vpack.c.b16 %v529, %v527
  %v738 = vpack.c.b16 %v530, %v528
  %v739 = vpack.c.b16 %v533, %v531
  %v740 = vpack.c.b16 %v534, %v532
  %v741 = vpack.c.b16 %v537, %v535
  %v742 = vpack.c.b16 %v538, %v536
  %v743 = vpack.c.b16 %v541, %v539
  %v744 = vpack.c.b16 %v542, %v540
  %v745 = vpack.c.b16 %v545, %v543
  %v746 = vpack.c.b16 %v546, %v544
  %v747 = vpack.c.b16 %v549, %v547
  %v748 = vpack.c.b16 %v550, %v548
  %v749 = vpack.c.b16 %v553, %v551
  %v750 = vpack.c.b16 %v554, %v552
  %v751 = vpack.c.b16 %v557, %v555
  %v752 = vpack.c.b16 %v558, %v556
  %v753 = vpack.c.b16 %v561, %v559
  %v754 = vpack.c.b16 %v562, %v560
  %v755 = vpack.c.b16 %v565, %v563
  %v756 = vpack.c.b16 %v566, %v564
  %v757 = vpack.c.b16 %v569, %v567
  %v758 = vpack.c.b16 %v570, %v568
  %v759 = vpack.c.b16 %v573, %v571
  %v760 = vpack.c.b16 %v574, %v572
  %v761 = vpack.c.b16 %v577, %v575
  %v762 = vpack.c.b16 %v578, %v576
  %v763 = vpack.c.b16 %v581, %v579
  %v764 = vpack.c.b16 %v582, %v580
  %v765 = vpack.c.b16 %v585, %v583
  %v766 = vpack.c.b16 %v586, %v584
  %v767 = vpack.c.b16 %v589, %v587
  %v768 = vpack.c.b16 %v590, %v588
  %v769 = vpack.c.b16 %v593, %v591
  %v770 = vpack.c.b16 %v594, %v592
  %v771 = vpack.c.b16 %v597, %v595
  %v772 = vpack.c.b16 %v598, %v596
  %v773 = vpack.c.b16 %v601, %v599
  %v774 = vpack.c.b16 %v602, %v600
  %v775 = vpack.c.b16 %v605, %v603
  %v776 = vpack.c.b16 %v606, %v604
  %v777 = vpack.c.b16 %v609, %v607
  %v778 = vpack.c.b16 %v610, %v608
  %v779 = vpack.c.b16 %v613, %v611
  %v780 = vpack.c.b16 %v614, %v612
  %v781 = vpack.c.b16 %v617, %v615
  %v782 = vpack.c.b16 %v618, %v616
  %v783 = vpack.c.b16 %v621, %v619
  %v784 = vpack.c.b16 %v622, %v620
  %v785 = vpack.c.b16 %v625, %v623
  %v786 = vpack.c.b16 %v626, %v624
  %v787 = vpack.c.b16 %v629, %v627
  %v788 = vpack.c.b16 %v630, %v628
  %v789 = vpack.c.b16 %v633, %v631
  %v790 = vpack.c.b16 %v634, %v632
  %v791 = vpack.c.b16 %v637, %v635
  %v792 = vpack.c.b16 %v638, %v636
  %v793 = vpack.c.b16 %v641, %v639
  %v794 = vpack.c.b16 %v642, %v640
  %v795 = vpack.c.b16 %v645, %v643
  %v796 = vpack.c.b16 %v646, %v644
  %v797 = vpack.c.b16 %v649, %v647
  %v798 = vpack.c.b16 %v650, %v648
  %v799 = vpack.c.b16 %v653, %v651
  %v800 = vpack.c.b16 %v654, %v652
  %v801 = vpack.c.b16 %v657, %v655
  %v802 = vpack.c.b16 %v658, %v656
  %947 = vmatprep.subr.bf16.mxu0 %v660
  %948 = vmatpush1.bf16.msra.mxu0 %v659
  %949 = vmatprep.subr.bf16.mxu0 %v662
  %950 = vmatpush1.bf16.msra.mxu0 %v661
  %951 = vmatprep.subr.bf16.mxu0 %v664
  %952 = vmatpush1.bf16.msra.mxu0 %v663
  %953 = vmatprep.subr.bf16.mxu0 %v666
  %954 = vmatpush1.bf16.msra.mxu0 %v665
  %955 = vmatprep.subr.bf16.mxu0 %v668
  %956 = vmatpush1.bf16.msra.mxu0 %v667
  %957 = vmatprep.subr.bf16.mxu0 %v670
  %958 = vmatpush1.bf16.msra.mxu0 %v669
  %959 = vmatprep.subr.bf16.mxu0 %v672
  %960 = vmatpush1.bf16.msra.mxu0 %v671
  %961 = vmatprep.subr.bf16.mxu0 %v674
  %962 = vmatpush1.bf16.msra.mxu0 %v673
  %963 = vmatprep.subr.bf16.mxu0 %v676
  %964 = vmatpush1.bf16.msra.mxu0 %v675
  %965 = vmatprep.subr.bf16.mxu0 %v678
  %966 = vmatpush1.bf16.msra.mxu0 %v677
  %967 = vmatprep.subr.bf16.mxu0 %v680
  %968 = vmatpush1.bf16.msra.mxu0 %v679
  %969 = vmatprep.subr.bf16.mxu0 %v682
  %970 = vmatpush1.bf16.msra.mxu0 %v681
  %971 = vmatprep.subr.bf16.mxu0 %v684
  %972 = vmatpush1.bf16.msra.mxu0 %v683
  %973 = vmatprep.subr.bf16.mxu0 %v686
  %974 = vmatpush1.bf16.msra.mxu0 %v685
  %975 = vmatprep.subr.bf16.mxu0 %v688
  %976 = vmatpush1.bf16.msra.mxu0 %v687
  %977 = vmatprep.subr.bf16.mxu0 %v690
  %978 = vmatpush1.bf16.msra.mxu0 %v689
  %979 = vmatprep.mubr.bf16.mxu0 %v210
  %980 = vmatmul.mubr.bf16.gmra.mrb[0].mxu0 %v209
  %v981 = vpop.f32.mrb[0].mxu0
  %v982 = vadd.f32 %v174, %v981
  %v983 = vpop.f32.mrb[0].mxu0
  %v984 = vadd.f32 %v174, %v983
  %v985 = vpop.f32.mrb[0].mxu0
  %v986 = vadd.f32 %v179, %v985
  %v987 = vpop.f32.mrb[0].mxu0
  %v988 = vadd.f32 %v179, %v987
  %989 = vdwg.mxu0
  %990 = vmatprep.subr.bf16.mxu0 %v692
  %991 = vmatpush1.bf16.msra.mxu0 %v691
  %992 = vmatprep.subr.bf16.mxu0 %v694
  %993 = vmatpush1.bf16.msra.mxu0 %v693
  %994 = vmatprep.subr.bf16.mxu0 %v696
  %995 = vmatpush1.bf16.msra.mxu0 %v695
  %996 = vmatprep.subr.bf16.mxu0 %v698
  %997 = vmatpush1.bf16.msra.mxu0 %v697
  %998 = vmatprep.subr.bf16.mxu0 %v700
  %999 = vmatpush1.bf16.msra.mxu0 %v699
  %1000 = vmatprep.subr.bf16.mxu0 %v702
  %1001 = vmatpush1.bf16.msra.mxu0 %v701
  %1002 = vmatprep.subr.bf16.mxu0 %v704
  %1003 = vmatpush1.bf16.msra.mxu0 %v703
  %1004 = vmatprep.subr.bf16.mxu0 %v706
  %1005 = vmatpush1.bf16.msra.mxu0 %v705
  %1006 = vmatprep.subr.bf16.mxu0 %v708
  %1007 = vmatpush1.bf16.msra.mxu0 %v707
  %1008 = vmatprep.subr.bf16.mxu0 %v710
  %1009 = vmatpush1.bf16.msra.mxu0 %v709
  %1010 = vmatprep.subr.bf16.mxu0 %v712
  %1011 = vmatpush1.bf16.msra.mxu0 %v711
  %1012 = vmatprep.subr.bf16.mxu0 %v714
  %1013 = vmatpush1.bf16.msra.mxu0 %v713
  %1014 = vmatprep.subr.bf16.mxu0 %v716
  %1015 = vmatpush1.bf16.msra.mxu0 %v715
  %1016 = vmatprep.subr.bf16.mxu0 %v718
  %1017 = vmatpush1.bf16.msra.mxu0 %v717
  %1018 = vmatprep.subr.bf16.mxu0 %v720
  %1019 = vmatpush1.bf16.msra.mxu0 %v719
  %1020 = vmatprep.subr.bf16.mxu0 %v722
  %1021 = vmatpush1.bf16.msra.mxu0 %v721
  %1022 = vmatprep.mubr.bf16.mxu0 %v212
  %1023 = vmatmul.mubr.bf16.gmra.mrb[0].mxu0 %v211
  %v1024 = vpop.f32.mrb[0].mxu0
  %v1025 = vadd.f32 %v982, %v1024
  %v1026 = vpop.f32.mrb[0].mxu0
  %v1027 = vadd.f32 %v984, %v1026
  %v1028 = vpop.f32.mrb[0].mxu0
  %v1029 = vadd.f32 %v986, %v1028
  %v1030 = vpop.f32.mrb[0].mxu0
  %v1031 = vadd.f32 %v988, %v1030
  %1032 = vdwg.mxu0
  %1033 = vmatprep.subr.bf16.mxu0 %v724
  %1034 = vmatpush1.bf16.msra.mxu0 %v723
  %1035 = vmatprep.subr.bf16.mxu0 %v726
  %1036 = vmatpush1.bf16.msra.mxu0 %v725
  %1037 = vmatprep.subr.bf16.mxu0 %v728
  %1038 = vmatpush1.bf16.msra.mxu0 %v727
  %1039 = vmatprep.subr.bf16.mxu0 %v730
  %1040 = vmatpush1.bf16.msra.mxu0 %v729
  %1041 = vmatprep.subr.bf16.mxu0 %v732
  %1042 = vmatpush1.bf16.msra.mxu0 %v731
  %1043 = vmatprep.subr.bf16.mxu0 %v734
  %1044 = vmatpush1.bf16.msra.mxu0 %v733
  %1045 = vmatprep.subr.bf16.mxu0 %v736
  %1046 = vmatpush1.bf16.msra.mxu0 %v735
  %1047 = vmatprep.subr.bf16.mxu0 %v738
  %1048 = vmatpush1.bf16.msra.mxu0 %v737
  %1049 = vmatprep.subr.bf16.mxu0 %v740
  %1050 = vmatpush1.bf16.msra.mxu0 %v739
  %1051 = vmatprep.subr.bf16.mxu0 %v742
  %1052 = vmatpush1.bf16.msra.mxu0 %v741
  %1053 = vmatprep.subr.bf16.mxu0 %v744
  %1054 = vmatpush1.bf16.msra.mxu0 %v743
  %1055 = vmatprep.subr.bf16.mxu0 %v746
  %1056 = vmatpush1.bf16.msra.mxu0 %v745
  %1057 = vmatprep.subr.bf16.mxu0 %v748
  %1058 = vmatpush1.bf16.msra.mxu0 %v747
  %1059 = vmatprep.subr.bf16.mxu0 %v750
  %1060 = vmatpush1.bf16.msra.mxu0 %v749
  %1061 = vmatprep.subr.bf16.mxu0 %v752
  %1062 = vmatpush1.bf16.msra.mxu0 %v751
  %1063 = vmatprep.subr.bf16.mxu0 %v754
  %1064 = vmatpush1.bf16.msra.mxu0 %v753
  %1065 = vmatprep.mubr.bf16.mxu0 %v214
  %1066 = vmatmul.mubr.bf16.gmra.mrb[0].mxu0 %v213
  %v1067 = vpop.f32.mrb[0].mxu0
  %v1068 = vadd.f32 %v1025, %v1067
  %v1069 = vpop.f32.mrb[0].mxu0
  %v1070 = vadd.f32 %v1027, %v1069
  %v1071 = vpop.f32.mrb[0].mxu0
  %v1072 = vadd.f32 %v1029, %v1071
  %v1073 = vpop.f32.mrb[0].mxu0
  %v1074 = vadd.f32 %v1031, %v1073
  %1075 = vdwg.mxu0
  %1076 = vmatprep.subr.bf16.mxu0 %v756
  %1077 = vmatpush1.bf16.msra.mxu0 %v755
  %1078 = vmatprep.subr.bf16.mxu0 %v758
  %1079 = vmatpush1.bf16.msra.mxu0 %v757
  %1080 = vmatprep.subr.bf16.mxu0 %v760
  %1081 = vmatpush1.bf16.msra.mxu0 %v759
  %1082 = vmatprep.subr.bf16.mxu0 %v762
  %1083 = vmatpush1.bf16.msra.mxu0 %v761
  %1084 = vmatprep.subr.bf16.mxu0 %v764
  %1085 = vmatpush1.bf16.msra.mxu0 %v763
  %1086 = vmatprep.subr.bf16.mxu0 %v766
  %1087 = vmatpush1.bf16.msra.mxu0 %v765
  %1088 = vmatprep.subr.bf16.mxu0 %v768
  %1089 = vmatpush1.bf16.msra.mxu0 %v767
  %1090 = vmatprep.subr.bf16.mxu0 %v770
  %1091 = vmatpush1.bf16.msra.mxu0 %v769
  %1092 = vmatprep.subr.bf16.mxu0 %v772
  %1093 = vmatpush1.bf16.msra.mxu0 %v771
  %1094 = vmatprep.subr.bf16.mxu0 %v774
  %1095 = vmatpush1.bf16.msra.mxu0 %v773
  %1096 = vmatprep.subr.bf16.mxu0 %v776
  %1097 = vmatpush1.bf16.msra.mxu0 %v775
  %1098 = vmatprep.subr.bf16.mxu0 %v778
  %1099 = vmatpush1.bf16.msra.mxu0 %v777
  %1100 = vmatprep.subr.bf16.mxu0 %v780
  %1101 = vmatpush1.bf16.msra.mxu0 %v779
  %1102 = vmatprep.subr.bf16.mxu0 %v782
  %1103 = vmatpush1.bf16.msra.mxu0 %v781
  %1104 = vmatprep.subr.bf16.mxu0 %v784
  %1105 = vmatpush1.bf16.msra.mxu0 %v783
  %1106 = vmatprep.subr.bf16.mxu0 %v786
  %1107 = vmatpush1.bf16.msra.mxu0 %v785
  %1108 = vmatprep.mubr.bf16.mxu0 %v216
  %1109 = vmatmul.mubr.bf16.gmra.mrb[0].mxu0 %v215
  %v1110 = vpop.f32.mrb[0].mxu0
  %v1111 = vadd.f32 %v1068, %v1110
  %v1112 = vpop.f32.mrb[0].mxu0
  %v1113 = vadd.f32 %v1070, %v1112
  %v1114 = vpop.f32.mrb[0].mxu0
  %v1115 = vadd.f32 %v1072, %v1114
  %v1116 = vpop.f32.mrb[0].mxu0
  %v1117 = vadd.f32 %v1074, %v1116
  %1118 = vdwg.mxu0
  %1119 = vmatprep.subr.bf16.mxu0 %v788
  %1120 = vmatpush1.bf16.msra.mxu0 %v787
  %1121 = vmatprep.subr.bf16.mxu0 %v790
  %1122 = vmatpush1.bf16.msra.mxu0 %v789
  %1123 = vmatprep.subr.bf16.mxu0 %v792
  %1124 = vmatpush1.bf16.msra.mxu0 %v791
  %1125 = vmatprep.subr.bf16.mxu0 %v794
  %1126 = vmatpush1.bf16.msra.mxu0 %v793
  %1127 = vmatprep.subr.bf16.mxu0 %v796
  %1128 = vmatpush1.bf16.msra.mxu0 %v795
  %1129 = vmatprep.subr.bf16.mxu0 %v798
  %1130 = vmatpush1.bf16.msra.mxu0 %v797
  %1131 = vmatprep.subr.bf16.mxu0 %v800
  %1132 = vmatpush1.bf16.msra.mxu0 %v799
  %1133 = vmatprep.subr.bf16.mxu0 %v802
  %1134 = vmatpush1.bf16.msra.mxu0 %v801
  %1135 = vmatprep.subr.bf16.mxu0 0
  %1136 = vmatpush1.bf16.msra.mxu0 0
  %1137 = vmatprep.subr.bf16.mxu0 0
  %1138 = vmatpush1.bf16.msra.mxu0 0
  %1139 = vmatprep.subr.bf16.mxu0 0
  %1140 = vmatpush1.bf16.msra.mxu0 0
  %1141 = vmatprep.subr.bf16.mxu0 0
  %1142 = vmatpush1.bf16.msra.mxu0 0
  %1143 = vmatprep.subr.bf16.mxu0 0
  %1144 = vmatpush1.bf16.msra.mxu0 0
  %1145 = vmatprep.subr.bf16.mxu0 0
  %1146 = vmatpush1.bf16.msra.mxu0 0
  %1147 = vmatprep.subr.bf16.mxu0 0
  %1148 = vmatpush1.bf16.msra.mxu0 0
  %1149 = vmatprep.subr.bf16.mxu0 0
  %1150 = vmatpush1.bf16.msra.mxu0 0
  %1151 = vmatprep.mubr.bf16.mxu0 0
  %1152 = vmatmul.mubr.bf16.gmra.mrb[0].mxu0 %v217
  %v1153 = vpop.f32.mrb[0].mxu0
  %v1154 = vadd.f32 %v1111, %v1153
  %v1155 = vpop.f32.mrb[0].mxu0
  %v1156 = vadd.f32 %v1113, %v1155
  %v1157 = vpop.f32.mrb[0].mxu0
  %v1158 = vadd.f32 %v1115, %v1157
  %v1159 = vpop.f32.mrb[0].mxu0
  %v1160 = vadd.f32 %v1117, %v1159
  %1161 = vdwg.mxu0
  %v1162 = vmax.f32 %v1154, 0.0
  %v1163 = vmax.f32 %v1156, 0.0
  %v1164 = vmax.f32 %v1158, 0.0
  %v1165 = vmax.f32 %v1160, 0.0
  %v1166 = vpack.c.bf16 %v1164, %v1162
  %v1167 = vpack.c.bf16 %v1165, %v1163
  %v1170 = vunpack.c.l.b16 %v1166
  %v1171 = vunpack.c.l.b16 %v1167
  %v1172 = vunpack.c.h.b16 %v1166
  %v1173 = vunpack.c.h.b16 %v1167
  %v1174 = vpack.c.b16 %v1171, %v1170
  %v1175 = vpack.c.b16 %v1173, %v1172
  %1178 = vst [vmem:[%s3] sm:$0xff] %v1174
  %1179 = vst [vmem:[%s3 + $0x8] sm:$0xff] %v1175
  // Predicated region
  $region14: #{s3kai_resnet_forward.23} parent=0 // pred_check
    _
  $region15: #{s3kai_resnet_forward.23} parent=0 // pred_check_branch
    %1181 = sbr.rel (0) target = $region17
  $region16: #{s3kai_resnet_forward.23} parent=0 // pred_region
    _
  $region17: #{s3kai_resnet_forward.23} parent=0 // pred_fallthru
    _
  // Predicated region
  $region18: #{s3kai_resnet_forward.23} parent=0 // pred_check
    _
  $region19: #{s3kai_resnet_forward.23} parent=0 // pred_check_branch
    %1183 = sbr.rel (0) target = $region21
  $region20: #{s3kai_resnet_forward.23} parent=0 // pred_region
    _
  $region21: #{s3kai_resnet_forward.23} parent=0 // pred_fallthru
    _

// kernel: s3kai_resnet_forward.24
$region0: #{s3kai_resnet_forward.24}
  #allocation0 [shape = 'u32[]', space=smem, size = 0x4, offset = 0x4, fixed_abs, tag = 'smem constant byte address 0x4 - core index']
  #allocation1 [shape = 'u32[144,128]{1,0:T(1,128)}', space=vmem, size = 0x12000, scoped, tag = 'internal scratch']
  %s0 = inlined_call_operand.vmem [shape: bf16[16,80], index: 0, kind: input, shape index: {}]
  %s1 = inlined_call_operand.vmem [shape: bf16[80,256], index: 1, kind: input, shape index: {}]
  %s2 = inlined_call_operand.vmem [shape: f32[16,1], index: 2, kind: input, shape index: {}]
  %s3 = inlined_call_operand.vmem [shape: f32[16,1], index: 3, kind: input, shape index: {}]
  %s4 = inlined_call_operand.vmem [shape: f32[16,1], index: 4, kind: input, shape index: {}]
  %s5 = inlined_call_operand.vmem [shape: bf16[16,256], index: 5, kind: output, shape index: {}]
  %s6 = sld [smem:[#allocation0]]
  $region30: #{s3kai_resnet_forward.24} parent=0
    _
  %s8 = ssub.s32 1, %s6
  %s9 = scalar_select 0, %s8, %s6
  // Predicated region
  $region2: #{s3kai_resnet_forward.24} parent=0 // pred_check
    _
  $region3: #{s3kai_resnet_forward.24} parent=0 // pred_check_branch
    %11 = sbr.rel (0) target = $region5
  $region4: #{s3kai_resnet_forward.24} parent=0 // pred_region
    _
  $region5: #{s3kai_resnet_forward.24} parent=0 // pred_fallthru
    _
  // Predicated region
  $region6: #{s3kai_resnet_forward.24} parent=0 // pred_check
    _
  $region7: #{s3kai_resnet_forward.24} parent=0 // pred_check_branch
    %13 = sbr.rel (0) target = $region9
  $region8: #{s3kai_resnet_forward.24} parent=0 // pred_region
    _
  $region9: #{s3kai_resnet_forward.24} parent=0 // pred_fallthru
    _
  // Predicated region
  $region10: #{s3kai_resnet_forward.24} parent=0 // pred_check
    _
  $region11: #{s3kai_resnet_forward.24} parent=0 // pred_check_branch
    %15 = sbr.rel (0) target = $region13
  $region12: #{s3kai_resnet_forward.24} parent=0 // pred_region
    _
  $region13: #{s3kai_resnet_forward.24} parent=0 // pred_fallthru
    _
  // Predicated region
  $region14: #{s3kai_resnet_forward.24} parent=0 // pred_check
    _
  $region15: #{s3kai_resnet_forward.24} parent=0 // pred_check_branch
    %17 = sbr.rel (0) target = $region17
  $region16: #{s3kai_resnet_forward.24} parent=0 // pred_region
    _
  $region17: #{s3kai_resnet_forward.24} parent=0 // pred_fallthru
    _
  // Predicated region
  $region18: #{s3kai_resnet_forward.24} parent=0 // pred_check
    _
  $region19: #{s3kai_resnet_forward.24} parent=0 // pred_check_branch
    %19 = sbr.rel (0) target = $region21
  $region20: #{s3kai_resnet_forward.24} parent=0 // pred_region
    _
  $region21: #{s3kai_resnet_forward.24} parent=0 // pred_fallthru
    _
  %v21 = vld [vmem:[%s0] sm:$0xf]
  %v22 = vld [vmem:[%s0 + $0x4] sm:$0xf]
  %v23 = vld [vmem:[%s1] sm:$0xff]
  %v24 = vld [vmem:[%s1 + $0x8] sm:$0xff]
  %v25 = vld [vmem:[%s1 + $0x10] sm:$0xff]
  %v26 = vld [vmem:[%s1 + $0x18] sm:$0xff]
  %v27 = vld [vmem:[%s1 + $0x20] sm:$0xff]
  %v28 = vld [vmem:[%s1 + $0x28] sm:$0xff]
  %v29 = vld [vmem:[%s1 + $0x30] sm:$0xff]
  %v30 = vld [vmem:[%s1 + $0x38] sm:$0xff]
  %v31 = vld [vmem:[%s1 + $0x40] sm:$0xff]
  %v32 = vld [vmem:[%s1 + $0x48] sm:$0xff]
  %v33 = vld [vmem:[%s2] sm:$0xff]
  %v34 = vld [vmem:[%s2 + $0x8] sm:$0xff]
  %36 = vset.pattern.permute.xlu0 0
  %37 = vperm.xlu0 %36, %v33
  %v38 = vpop.permute.xlu0 %37
  %41 = vset.pattern.permute.xlu0 0
  %42 = vperm.xlu0 %41, %v34
  %v43 = vpop.permute.xlu0 %42
  %v47 = vunpack.c.l.b16 %v21
  %v48 = vunpack.c.l.b16 %v22
  %v49 = vpack.c.b16 %v48, %v47
  %v60 = vunpack.c.l.b16 %v23
  %v61 = vunpack.c.h.b16 %v23
  %v62 = vunpack.c.l.b16 %v24
  %v63 = vunpack.c.h.b16 %v24
  %v64 = vunpack.c.l.b16 %v25
  %v65 = vunpack.c.h.b16 %v25
  %v66 = vunpack.c.l.b16 %v26
  %v67 = vunpack.c.h.b16 %v26
  %v68 = vunpack.c.l.b16 %v27
  %v69 = vunpack.c.h.b16 %v27
  %v70 = vunpack.c.l.b16 %v28
  %v71 = vunpack.c.h.b16 %v28
  %v72 = vunpack.c.l.b16 %v29
  %v73 = vunpack.c.h.b16 %v29
  %v74 = vunpack.c.l.b16 %v30
  %v75 = vunpack.c.h.b16 %v30
  %v76 = vunpack.c.l.b16 %v31
  %v77 = vunpack.c.h.b16 %v31
  %v78 = vunpack.c.l.b16 %v32
  %v79 = vunpack.c.h.b16 %v32
  %v80 = vpack.c.b16 %v62, %v60
  %v81 = vpack.c.b16 %v63, %v61
  %v82 = vpack.c.b16 %v66, %v64
  %v83 = vpack.c.b16 %v67, %v65
  %v84 = vpack.c.b16 %v70, %v68
  %v85 = vpack.c.b16 %v71, %v69
  %v86 = vpack.c.b16 %v74, %v72
  %v87 = vpack.c.b16 %v75, %v73
  %v88 = vpack.c.b16 %v78, %v76
  %v89 = vpack.c.b16 %v79, %v77
  %vm100 = vcmask 654336
  %v102 = vsel %vm100, %v49, 0
  %104 = vmatprep.subr.bf16.mxu0 %v81
  %105 = vmatpush1.bf16.msra.mxu0 %v80
  %106 = vmatprep.subr.bf16.mxu0 %v83
  %107 = vmatpush1.bf16.msra.mxu0 %v82
  %108 = vmatprep.subr.bf16.mxu0 %v85
  %109 = vmatpush1.bf16.msra.mxu0 %v84
  %110 = vmatprep.subr.bf16.mxu0 %v87
  %111 = vmatpush1.bf16.msra.mxu0 %v86
  %112 = vmatprep.subr.bf16.mxu0 %v89
  %113 = vmatpush1.bf16.msra.mxu0 %v88
  %114 = vmatprep.subr.bf16.mxu0 0
  %115 = vmatpush1.bf16.msra.mxu0 0
  %116 = vmatprep.subr.bf16.mxu0 0
  %117 = vmatpush1.bf16.msra.mxu0 0
  %118 = vmatprep.subr.bf16.mxu0 0
  %119 = vmatpush1.bf16.msra.mxu0 0
  %120 = vmatprep.subr.bf16.mxu0 0
  %121 = vmatpush1.bf16.msra.mxu0 0
  %122 = vmatprep.subr.bf16.mxu0 0
  %123 = vmatpush1.bf16.msra.mxu0 0
  %124 = vmatprep.subr.bf16.mxu0 0
  %125 = vmatpush1.bf16.msra.mxu0 0
  %126 = vmatprep.subr.bf16.mxu0 0
  %127 = vmatpush1.bf16.msra.mxu0 0
  %128 = vmatprep.subr.bf16.mxu0 0
  %129 = vmatpush1.bf16.msra.mxu0 0
  %130 = vmatprep.subr.bf16.mxu0 0
  %131 = vmatpush1.bf16.msra.mxu0 0
  %132 = vmatprep.subr.bf16.mxu0 0
  %133 = vmatpush1.bf16.msra.mxu0 0
  %134 = vmatprep.subr.bf16.mxu0 0
  %135 = vmatpush1.bf16.msra.mxu0 0
  %136 = vmatprep.mubr.bf16.mxu0 0
  %137 = vmatmul.mubr.bf16.gmra.mrb[0].mxu0 %v102
  %v138 = vpop.f32.mrb[0].mxu0
  %v139 = vadd.f32 %v38, %v138
  %v140 = vpop.f32.mrb[0].mxu0
  %v141 = vadd.f32 %v38, %v140
  %v142 = vpop.f32.mrb[0].mxu0
  %v143 = vadd.f32 %v43, %v142
  %v144 = vpop.f32.mrb[0].mxu0
  %v145 = vadd.f32 %v43, %v144
  %146 = vdwg.mxu0
  %v147 = vmax.f32 %v139, 0.0
  %v148 = vmax.f32 %v141, 0.0
  %v149 = vmax.f32 %v143, 0.0
  %v150 = vmax.f32 %v145, 0.0
  %v151 = vld [vmem:[%s3] sm:$0xff]
  %v152 = vld [vmem:[%s3 + $0x8] sm:$0xff]
  %154 = vset.pattern.permute.xlu0 0
  %155 = vperm.xlu0 %154, %v151
  %v156 = vpop.permute.xlu0 %155
  %159 = vset.pattern.permute.xlu0 0
  %160 = vperm.xlu0 %159, %v152
  %v161 = vpop.permute.xlu0 %160
  %v163 = vmul.f32 %v147, %v156
  %v164 = vmul.f32 %v148, %v156
  %v165 = vmul.f32 %v149, %v161
  %v166 = vmul.f32 %v150, %v161
  %v167 = vld [vmem:[%s4] sm:$0xff]
  %v168 = vld [vmem:[%s4 + $0x8] sm:$0xff]
  %170 = vset.pattern.permute.xlu0 0
  %171 = vperm.xlu0 %170, %v167
  %v172 = vpop.permute.xlu0 %171
  %175 = vset.pattern.permute.xlu0 0
  %176 = vperm.xlu0 %175, %v168
  %v177 = vpop.permute.xlu0 %176
  %v179 = vadd.f32 %v163, %v172
  %v180 = vadd.f32 %v164, %v172
  %v181 = vadd.f32 %v165, %v177
  %v182 = vadd.f32 %v166, %v177
  %v183 = vmax.f32 %v179, 0.0
  %v184 = vmax.f32 %v180, 0.0
  %v185 = vmax.f32 %v181, 0.0
  %v186 = vmax.f32 %v182, 0.0
  %v187 = vpack.c.bf16 %v185, %v183
  %v188 = vpack.c.bf16 %v186, %v184
  %v191 = vunpack.c.l.b16 %v187
  %v192 = vunpack.c.l.b16 %v188
  %v193 = vunpack.c.h.b16 %v187
  %v194 = vunpack.c.h.b16 %v188
  %v195 = vpack.c.b16 %v192, %v191
  %v196 = vpack.c.b16 %v194, %v193
  %199 = vst [vmem:[%s5] sm:$0xff] %v195
  %200 = vst [vmem:[%s5 + $0x8] sm:$0xff] %v196
  // Predicated region
  $region22: #{s3kai_resnet_forward.24} parent=0 // pred_check
    _
  $region23: #{s3kai_resnet_forward.24} parent=0 // pred_check_branch
    %202 = sbr.rel (0) target = $region25
  $region24: #{s3kai_resnet_forward.24} parent=0 // pred_region
    _
  $region25: #{s3kai_resnet_forward.24} parent=0 // pred_fallthru
    _
  // Predicated region
  $region26: #{s3kai_resnet_forward.24} parent=0 // pred_check
    _
  $region27: #{s3kai_resnet_forward.24} parent=0 // pred_check_branch
    %204 = sbr.rel (0) target = $region29
  $region28: #{s3kai_resnet_forward.24} parent=0 // pred_region
    _
  $region29: #{s3kai_resnet_forward.24} parent=0 // pred_fallthru
    _

// kernel: s3kai_resnet_forward.25
$region0: #{s3kai_resnet_forward.25}
  #allocation0 [shape = 'u32[]', space=smem, size = 0x4, offset = 0x4, fixed_abs, tag = 'smem constant byte address 0x4 - core index']
  #allocation1 [shape = 'u32[144,128]{1,0:T(1,128)}', space=vmem, size = 0x12000, scoped, tag = 'internal scratch']
  %s0 = inlined_call_operand.vmem [shape: bf16[16,80], index: 0, kind: input, shape index: {}]
  %s1 = inlined_call_operand.vmem [shape: bf16[80,256], index: 1, kind: input, shape index: {}]
  %s2 = inlined_call_operand.vmem [shape: f32[16,1], index: 2, kind: input, shape index: {}]
  %s3 = inlined_call_operand.vmem [shape: bf16[16,256], index: 3, kind: output, shape index: {}]
  %s4 = sld [smem:[#allocation0]]
  $region22: #{s3kai_resnet_forward.25} parent=0
    _
  %s6 = ssub.s32 1, %s4
  %s7 = scalar_select 0, %s6, %s4
  // Predicated region
  $region2: #{s3kai_resnet_forward.25} parent=0 // pred_check
    _
  $region3: #{s3kai_resnet_forward.25} parent=0 // pred_check_branch
    %9 = sbr.rel (0) target = $region5
  $region4: #{s3kai_resnet_forward.25} parent=0 // pred_region
    _
  $region5: #{s3kai_resnet_forward.25} parent=0 // pred_fallthru
    _
  // Predicated region
  $region6: #{s3kai_resnet_forward.25} parent=0 // pred_check
    _
  $region7: #{s3kai_resnet_forward.25} parent=0 // pred_check_branch
    %11 = sbr.rel (0) target = $region9
  $region8: #{s3kai_resnet_forward.25} parent=0 // pred_region
    _
  $region9: #{s3kai_resnet_forward.25} parent=0 // pred_fallthru
    _
  // Predicated region
  $region10: #{s3kai_resnet_forward.25} parent=0 // pred_check
    _
  $region11: #{s3kai_resnet_forward.25} parent=0 // pred_check_branch
    %13 = sbr.rel (0) target = $region13
  $region12: #{s3kai_resnet_forward.25} parent=0 // pred_region
    _
  $region13: #{s3kai_resnet_forward.25} parent=0 // pred_fallthru
    _
  %v15 = vld [vmem:[%s0] sm:$0xf]
  %v16 = vld [vmem:[%s0 + $0x4] sm:$0xf]
  %v17 = vld [vmem:[%s1] sm:$0xff]
  %v18 = vld [vmem:[%s1 + $0x8] sm:$0xff]
  %v19 = vld [vmem:[%s1 + $0x10] sm:$0xff]
  %v20 = vld [vmem:[%s1 + $0x18] sm:$0xff]
  %v21 = vld [vmem:[%s1 + $0x20] sm:$0xff]
  %v22 = vld [vmem:[%s1 + $0x28] sm:$0xff]
  %v23 = vld [vmem:[%s1 + $0x30] sm:$0xff]
  %v24 = vld [vmem:[%s1 + $0x38] sm:$0xff]
  %v25 = vld [vmem:[%s1 + $0x40] sm:$0xff]
  %v26 = vld [vmem:[%s1 + $0x48] sm:$0xff]
  %v27 = vld [vmem:[%s2] sm:$0xff]
  %v28 = vld [vmem:[%s2 + $0x8] sm:$0xff]
  %30 = vset.pattern.permute.xlu0 0
  %31 = vperm.xlu0 %30, %v27
  %v32 = vpop.permute.xlu0 %31
  %35 = vset.pattern.permute.xlu0 0
  %36 = vperm.xlu0 %35, %v28
  %v37 = vpop.permute.xlu0 %36
  %v41 = vunpack.c.l.b16 %v15
  %v42 = vunpack.c.l.b16 %v16
  %v43 = vpack.c.b16 %v42, %v41
  %v54 = vunpack.c.l.b16 %v17
  %v55 = vunpack.c.h.b16 %v17
  %v56 = vunpack.c.l.b16 %v18
  %v57 = vunpack.c.h.b16 %v18
  %v58 = vunpack.c.l.b16 %v19
  %v59 = vunpack.c.h.b16 %v19
  %v60 = vunpack.c.l.b16 %v20
  %v61 = vunpack.c.h.b16 %v20
  %v62 = vunpack.c.l.b16 %v21
  %v63 = vunpack.c.h.b16 %v21
  %v64 = vunpack.c.l.b16 %v22
  %v65 = vunpack.c.h.b16 %v22
  %v66 = vunpack.c.l.b16 %v23
  %v67 = vunpack.c.h.b16 %v23
  %v68 = vunpack.c.l.b16 %v24
  %v69 = vunpack.c.h.b16 %v24
  %v70 = vunpack.c.l.b16 %v25
  %v71 = vunpack.c.h.b16 %v25
  %v72 = vunpack.c.l.b16 %v26
  %v73 = vunpack.c.h.b16 %v26
  %v74 = vpack.c.b16 %v56, %v54
  %v75 = vpack.c.b16 %v57, %v55
  %v76 = vpack.c.b16 %v60, %v58
  %v77 = vpack.c.b16 %v61, %v59
  %v78 = vpack.c.b16 %v64, %v62
  %v79 = vpack.c.b16 %v65, %v63
  %v80 = vpack.c.b16 %v68, %v66
  %v81 = vpack.c.b16 %v69, %v67
  %v82 = vpack.c.b16 %v72, %v70
  %v83 = vpack.c.b16 %v73, %v71
  %vm94 = vcmask 654336
  %v96 = vsel %vm94, %v43, 0
  %98 = vmatprep.subr.bf16.mxu0 %v75
  %99 = vmatpush1.bf16.msra.mxu0 %v74
  %100 = vmatprep.subr.bf16.mxu0 %v77
  %101 = vmatpush1.bf16.msra.mxu0 %v76
  %102 = vmatprep.subr.bf16.mxu0 %v79
  %103 = vmatpush1.bf16.msra.mxu0 %v78
  %104 = vmatprep.subr.bf16.mxu0 %v81
  %105 = vmatpush1.bf16.msra.mxu0 %v80
  %106 = vmatprep.subr.bf16.mxu0 %v83
  %107 = vmatpush1.bf16.msra.mxu0 %v82
  %108 = vmatprep.subr.bf16.mxu0 0
  %109 = vmatpush1.bf16.msra.mxu0 0
  %110 = vmatprep.subr.bf16.mxu0 0
  %111 = vmatpush1.bf16.msra.mxu0 0
  %112 = vmatprep.subr.bf16.mxu0 0
  %113 = vmatpush1.bf16.msra.mxu0 0
  %114 = vmatprep.subr.bf16.mxu0 0
  %115 = vmatpush1.bf16.msra.mxu0 0
  %116 = vmatprep.subr.bf16.mxu0 0
  %117 = vmatpush1.bf16.msra.mxu0 0
  %118 = vmatprep.subr.bf16.mxu0 0
  %119 = vmatpush1.bf16.msra.mxu0 0
  %120 = vmatprep.subr.bf16.mxu0 0
  %121 = vmatpush1.bf16.msra.mxu0 0
  %122 = vmatprep.subr.bf16.mxu0 0
  %123 = vmatpush1.bf16.msra.mxu0 0
  %124 = vmatprep.subr.bf16.mxu0 0
  %125 = vmatpush1.bf16.msra.mxu0 0
  %126 = vmatprep.subr.bf16.mxu0 0
  %127 = vmatpush1.bf16.msra.mxu0 0
  %128 = vmatprep.subr.bf16.mxu0 0
  %129 = vmatpush1.bf16.msra.mxu0 0
  %130 = vmatprep.mubr.bf16.mxu0 0
  %131 = vmatmul.mubr.bf16.gmra.mrb[0].mxu0 %v96
  %v132 = vpop.f32.mrb[0].mxu0
  %v133 = vadd.f32 %v32, %v132
  %v134 = vpop.f32.mrb[0].mxu0
  %v135 = vadd.f32 %v32, %v134
  %v136 = vpop.f32.mrb[0].mxu0
  %v137 = vadd.f32 %v37, %v136
  %v138 = vpop.f32.mrb[0].mxu0
  %v139 = vadd.f32 %v37, %v138
  %140 = vdwg.mxu0
  %v141 = vpack.c.bf16 %v137, %v133
  %v142 = vpack.c.bf16 %v139, %v135
  %v145 = vunpack.c.l.b16 %v141
  %v146 = vunpack.c.l.b16 %v142
  %v147 = vunpack.c.h.b16 %v141
  %v148 = vunpack.c.h.b16 %v142
  %v149 = vpack.c.b16 %v146, %v145
  %v150 = vpack.c.b16 %v148, %v147
  %153 = vst [vmem:[%s3] sm:$0xff] %v149
  %154 = vst [vmem:[%s3 + $0x8] sm:$0xff] %v150
  // Predicated region
  $region14: #{s3kai_resnet_forward.25} parent=0 // pred_check
    _
  $region15: #{s3kai_resnet_forward.25} parent=0 // pred_check_branch
    %156 = sbr.rel (0) target = $region17
  $region16: #{s3kai_resnet_forward.25} parent=0 // pred_region
    _
  $region17: #{s3kai_resnet_forward.25} parent=0 // pred_fallthru
    _
  // Predicated region
  $region18: #{s3kai_resnet_forward.25} parent=0 // pred_check
    _
  $region19: #{s3kai_resnet_forward.25} parent=0 // pred_check_branch
    %158 = sbr.rel (0) target = $region21
  $region20: #{s3kai_resnet_forward.25} parent=0 // pred_region
    _
  $region21: #{s3kai_resnet_forward.25} parent=0 // pred_fallthru
    _

// kernel: s3kai_resnet_forward.26
$region0: #{s3kai_resnet_forward.26}
  #allocation0 [shape = 'u32[]', space=smem, size = 0x4, offset = 0x4, fixed_abs, tag = 'smem constant byte address 0x4 - core index']
  #allocation1 [shape = 'u32[144,128]{1,0:T(1,128)}', space=vmem, size = 0x12000, scoped, tag = 'internal scratch']
  %s0 = inlined_call_operand.vmem [shape: bf16[64,25], index: 0, kind: input, shape index: {}]
  %s1 = inlined_call_operand.vmem [shape: f32[64,1], index: 1, kind: input, shape index: {}]
  %s2 = inlined_call_operand.vmem [shape: bf16[64,25], index: 2, kind: input, shape index: {}]
  %s3 = inlined_call_operand.vmem [shape: bf16[64,25], index: 3, kind: output, shape index: {}]
  %s4 = sld [smem:[#allocation0]]
  $region22: #{s3kai_resnet_forward.26} parent=0
    _
  %s6 = ssub.s32 1, %s4
  %s7 = scalar_select 0, %s6, %s4
  // Predicated region
  $region2: #{s3kai_resnet_forward.26} parent=0 // pred_check
    _
  $region3: #{s3kai_resnet_forward.26} parent=0 // pred_check_branch
    %9 = sbr.rel (0) target = $region5
  $region4: #{s3kai_resnet_forward.26} parent=0 // pred_region
    _
  $region5: #{s3kai_resnet_forward.26} parent=0 // pred_fallthru
    _
  // Predicated region
  $region6: #{s3kai_resnet_forward.26} parent=0 // pred_check
    _
  $region7: #{s3kai_resnet_forward.26} parent=0 // pred_check_branch
    %11 = sbr.rel (0) target = $region9
  $region8: #{s3kai_resnet_forward.26} parent=0 // pred_region
    _
  $region9: #{s3kai_resnet_forward.26} parent=0 // pred_fallthru
    _
  // Predicated region
  $region10: #{s3kai_resnet_forward.26} parent=0 // pred_check
    _
  $region11: #{s3kai_resnet_forward.26} parent=0 // pred_check_branch
    %13 = sbr.rel (0) target = $region13
  $region12: #{s3kai_resnet_forward.26} parent=0 // pred_region
    _
  $region13: #{s3kai_resnet_forward.26} parent=0 // pred_fallthru
    _
  %v14 = vld [vmem:[%s1] sm:$0xff]
  %v15 = vld [vmem:[%s1 + $0x8] sm:$0xff]
  %v16 = vld [vmem:[%s1 + $0x10] sm:$0xff]
  %v17 = vld [vmem:[%s1 + $0x18] sm:$0xff]
  %v18 = vld [vmem:[%s1 + $0x20] sm:$0xff]
  %v19 = vld [vmem:[%s1 + $0x28] sm:$0xff]
  %v20 = vld [vmem:[%s1 + $0x30] sm:$0xff]
  %v21 = vld [vmem:[%s1 + $0x38] sm:$0xff]
  %v22 = vxor.u32 %v14, 2147483648
  %v23 = vxor.u32 %v15, 2147483648
  %v24 = vxor.u32 %v16, 2147483648
  %v25 = vxor.u32 %v17, 2147483648
  %v26 = vxor.u32 %v18, 2147483648
  %v27 = vxor.u32 %v19, 2147483648
  %v28 = vxor.u32 %v20, 2147483648
  %v29 = vxor.u32 %v21, 2147483648
  %v30 = vmul.f32 %v22, 1.442695
  %v31 = vpow.pop %v30
  %v32 = vmul.f32 %v23, 1.442695
  %v33 = vpow.pop %v32
  %v34 = vmul.f32 %v24, 1.442695
  %v35 = vpow.pop %v34
  %v36 = vmul.f32 %v25, 1.442695
  %v37 = vpow.pop %v36
  %v38 = vmul.f32 %v26, 1.442695
  %v39 = vpow.pop %v38
  %v40 = vmul.f32 %v27, 1.442695
  %v41 = vpow.pop %v40
  %v42 = vmul.f32 %v28, 1.442695
  %v43 = vpow.pop %v42
  %v44 = vmul.f32 %v29, 1.442695
  %v45 = vpow.pop %v44
  %v46 = vadd.f32 %v31, 1.0
  %v47 = vadd.f32 %v33, 1.0
  %v48 = vadd.f32 %v35, 1.0
  %v49 = vadd.f32 %v37, 1.0
  %v50 = vadd.f32 %v39, 1.0
  %v51 = vadd.f32 %v41, 1.0
  %v52 = vadd.f32 %v43, 1.0
  %v53 = vadd.f32 %v45, 1.0
  %v54 = vrcp.pop %v46
  %v55 = vmul.f32 1.0, %v54
  %v56 = vrcp.pop %v47
  %v57 = vmul.f32 1.0, %v56
  %v58 = vrcp.pop %v48
  %v59 = vmul.f32 1.0, %v58
  %v60 = vrcp.pop %v49
  %v61 = vmul.f32 1.0, %v60
  %v62 = vrcp.pop %v50
  %v63 = vmul.f32 1.0, %v62
  %v64 = vrcp.pop %v51
  %v65 = vmul.f32 1.0, %v64
  %v66 = vrcp.pop %v52
  %v67 = vmul.f32 1.0, %v66
  %v68 = vrcp.pop %v53
  %v69 = vmul.f32 1.0, %v68
  %v70 = vld [vmem:[%s0] sm:$0xf]
  %v71 = vld [vmem:[%s0 + $0x4] sm:$0xf]
  %v72 = vld [vmem:[%s0 + $0x8] sm:$0xf]
  %v73 = vld [vmem:[%s0 + $0xc] sm:$0xf]
  %v74 = vld [vmem:[%s0 + $0x10] sm:$0xf]
  %v75 = vld [vmem:[%s0 + $0x14] sm:$0xf]
  %v76 = vld [vmem:[%s0 + $0x18] sm:$0xf]
  %v77 = vld [vmem:[%s0 + $0x1c] sm:$0xf]
  %v78 = vunpack.c.l.bf16 %v70
  %v79 = vunpack.c.l.bf16 %v71
  %v80 = vunpack.c.l.bf16 %v72
  %v81 = vunpack.c.l.bf16 %v73
  %v82 = vunpack.c.l.bf16 %v74
  %v83 = vunpack.c.l.bf16 %v75
  %v84 = vunpack.c.l.bf16 %v76
  %v85 = vunpack.c.l.bf16 %v77
  %87 = vset.pattern.permute.xlu0 0
  %88 = vperm.xlu0 %87, %v55
  %v89 = vpop.permute.xlu0 %88
  %92 = vset.pattern.permute.xlu0 0
  %93 = vperm.xlu0 %92, %v57
  %v94 = vpop.permute.xlu0 %93
  %97 = vset.pattern.permute.xlu0 0
  %98 = vperm.xlu0 %97, %v59
  %v99 = vpop.permute.xlu0 %98
  %102 = vset.pattern.permute.xlu0 0
  %103 = vperm.xlu0 %102, %v61
  %v104 = vpop.permute.xlu0 %103
  %107 = vset.pattern.permute.xlu0 0
  %108 = vperm.xlu0 %107, %v63
  %v109 = vpop.permute.xlu0 %108
  %112 = vset.pattern.permute.xlu0 0
  %113 = vperm.xlu0 %112, %v65
  %v114 = vpop.permute.xlu0 %113
  %117 = vset.pattern.permute.xlu0 0
  %118 = vperm.xlu0 %117, %v67
  %v119 = vpop.permute.xlu0 %118
  %122 = vset.pattern.permute.xlu0 0
  %123 = vperm.xlu0 %122, %v69
  %v124 = vpop.permute.xlu0 %123
  %v126 = vmul.f32 %v78, %v89
  %v127 = vmul.f32 %v79, %v94
  %v128 = vmul.f32 %v80, %v99
  %v129 = vmul.f32 %v81, %v104
  %v130 = vmul.f32 %v82, %v109
  %v131 = vmul.f32 %v83, %v114
  %v132 = vmul.f32 %v84, %v119
  %v133 = vmul.f32 %v85, %v124
  %v134 = vld [vmem:[%s2] sm:$0xf]
  %v135 = vld [vmem:[%s2 + $0x4] sm:$0xf]
  %v136 = vld [vmem:[%s2 + $0x8] sm:$0xf]
  %v137 = vld [vmem:[%s2 + $0xc] sm:$0xf]
  %v138 = vld [vmem:[%s2 + $0x10] sm:$0xf]
  %v139 = vld [vmem:[%s2 + $0x14] sm:$0xf]
  %v140 = vld [vmem:[%s2 + $0x18] sm:$0xf]
  %v141 = vld [vmem:[%s2 + $0x1c] sm:$0xf]
  %v142 = vunpack.c.l.bf16 %v134
  %v143 = vunpack.c.l.bf16 %v135
  %v144 = vunpack.c.l.bf16 %v136
  %v145 = vunpack.c.l.bf16 %v137
  %v146 = vunpack.c.l.bf16 %v138
  %v147 = vunpack.c.l.bf16 %v139
  %v148 = vunpack.c.l.bf16 %v140
  %v149 = vunpack.c.l.bf16 %v141
  %v150 = vadd.f32 %v126, %v142
  %v151 = vadd.f32 %v127, %v143
  %v152 = vadd.f32 %v128, %v144
  %v153 = vadd.f32 %v129, %v145
  %v154 = vadd.f32 %v130, %v146
  %v155 = vadd.f32 %v131, %v147
  %v156 = vadd.f32 %v132, %v148
  %v157 = vadd.f32 %v133, %v149
  %v158 = vpack.c.bf16 %v151, %v150
  %v159 = vpack.c.bf16 %v153, %v152
  %v160 = vpack.c.bf16 %v155, %v154
  %v161 = vpack.c.bf16 %v157, %v156
  %v166 = vunpack.c.l.b16 %v158
  %v167 = vunpack.c.h.b16 %v158
  %v168 = vunpack.c.l.b16 %v159
  %v169 = vunpack.c.h.b16 %v159
  %v170 = vunpack.c.l.b16 %v160
  %v171 = vunpack.c.h.b16 %v160
  %v172 = vunpack.c.l.b16 %v161
  %v173 = vunpack.c.h.b16 %v161
  %v174 = vpack.c.b16 %v166, %v166
  %v175 = vpack.c.b16 %v167, %v167
  %v176 = vpack.c.b16 %v168, %v168
  %v177 = vpack.c.b16 %v169, %v169
  %v178 = vpack.c.b16 %v170, %v170
  %v179 = vpack.c.b16 %v171, %v171
  %v180 = vpack.c.b16 %v172, %v172
  %v181 = vpack.c.b16 %v173, %v173
  %vm190 = vcmask 199680
  %191 = vst.msk [vmem:[%s3] sm:$0xf] %vm190, %v174
  %192 = vst.msk [vmem:[%s3 + $0x4] sm:$0xf] %vm190, %v175
  %193 = vst.msk [vmem:[%s3 + $0x8] sm:$0xf] %vm190, %v176
  %194 = vst.msk [vmem:[%s3 + $0xc] sm:$0xf] %vm190, %v177
  %195 = vst.msk [vmem:[%s3 + $0x10] sm:$0xf] %vm190, %v178
  %196 = vst.msk [vmem:[%s3 + $0x14] sm:$0xf] %vm190, %v179
  %197 = vst.msk [vmem:[%s3 + $0x18] sm:$0xf] %vm190, %v180
  %198 = vst.msk [vmem:[%s3 + $0x1c] sm:$0xf] %vm190, %v181
  // Predicated region
  $region14: #{s3kai_resnet_forward.26} parent=0 // pred_check
    _
  $region15: #{s3kai_resnet_forward.26} parent=0 // pred_check_branch
    %200 = sbr.rel (0) target = $region17
  $region16: #{s3kai_resnet_forward.26} parent=0 // pred_region
    _
  $region17: #{s3kai_resnet_forward.26} parent=0 // pred_fallthru
    _
  // Predicated region
  $region18: #{s3kai_resnet_forward.26} parent=0 // pred_check
    _
  $region19: #{s3kai_resnet_forward.26} parent=0 // pred_check_branch
    %202 = sbr.rel (0) target = $region21
  $region20: #{s3kai_resnet_forward.26} parent=0 // pred_region
    _
  $region21: #{s3kai_resnet_forward.26} parent=0 // pred_fallthru
    _

// kernel: s3kai_resnet_forward.29
$region0: #{s3kai_resnet_forward.29}
  #allocation0 [shape = 'u32[]', space=smem, size = 0x4, offset = 0x4, fixed_abs, tag = 'smem constant byte address 0x4 - core index']
  #allocation1 [shape = 'u32[144,128]{1,0:T(1,128)}', space=vmem, size = 0x12000, scoped, tag = 'internal scratch']
  %s0 = inlined_call_operand.vmem [shape: bf16[64,25], index: 0, kind: input, shape index: {}]
  %s1 = inlined_call_operand.vmem [shape: f32[64,1], index: 1, kind: input, shape index: {}]
  %s2 = inlined_call_operand.vmem [shape: bf16[64,25], index: 2, kind: input, shape index: {}]
  %s3 = inlined_call_operand.vmem [shape: f32[64,1], index: 3, kind: input, shape index: {}]
  %s4 = inlined_call_operand.vmem [shape: f32[64,1], index: 4, kind: input, shape index: {}]
  %s5 = inlined_call_operand.vmem [shape: bf16[64,25], index: 5, kind: output, shape index: {}]
  %s6 = sld [smem:[#allocation0]]
  $region30: #{s3kai_resnet_forward.29} parent=0
    _
  %s8 = ssub.s32 1, %s6
  %s9 = scalar_select 0, %s8, %s6
  // Predicated region
  $region2: #{s3kai_resnet_forward.29} parent=0 // pred_check
    _
  $region3: #{s3kai_resnet_forward.29} parent=0 // pred_check_branch
    %11 = sbr.rel (0) target = $region5
  $region4: #{s3kai_resnet_forward.29} parent=0 // pred_region
    _
  $region5: #{s3kai_resnet_forward.29} parent=0 // pred_fallthru
    _
  // Predicated region
  $region6: #{s3kai_resnet_forward.29} parent=0 // pred_check
    _
  $region7: #{s3kai_resnet_forward.29} parent=0 // pred_check_branch
    %13 = sbr.rel (0) target = $region9
  $region8: #{s3kai_resnet_forward.29} parent=0 // pred_region
    _
  $region9: #{s3kai_resnet_forward.29} parent=0 // pred_fallthru
    _
  // Predicated region
  $region10: #{s3kai_resnet_forward.29} parent=0 // pred_check
    _
  $region11: #{s3kai_resnet_forward.29} parent=0 // pred_check_branch
    %15 = sbr.rel (0) target = $region13
  $region12: #{s3kai_resnet_forward.29} parent=0 // pred_region
    _
  $region13: #{s3kai_resnet_forward.29} parent=0 // pred_fallthru
    _
  // Predicated region
  $region14: #{s3kai_resnet_forward.29} parent=0 // pred_check
    _
  $region15: #{s3kai_resnet_forward.29} parent=0 // pred_check_branch
    %17 = sbr.rel (0) target = $region17
  $region16: #{s3kai_resnet_forward.29} parent=0 // pred_region
    _
  $region17: #{s3kai_resnet_forward.29} parent=0 // pred_fallthru
    _
  // Predicated region
  $region18: #{s3kai_resnet_forward.29} parent=0 // pred_check
    _
  $region19: #{s3kai_resnet_forward.29} parent=0 // pred_check_branch
    %19 = sbr.rel (0) target = $region21
  $region20: #{s3kai_resnet_forward.29} parent=0 // pred_region
    _
  $region21: #{s3kai_resnet_forward.29} parent=0 // pred_fallthru
    _
  %v20 = vld [vmem:[%s1] sm:$0xff]
  %v21 = vld [vmem:[%s1 + $0x8] sm:$0xff]
  %v22 = vld [vmem:[%s1 + $0x10] sm:$0xff]
  %v23 = vld [vmem:[%s1 + $0x18] sm:$0xff]
  %v24 = vld [vmem:[%s1 + $0x20] sm:$0xff]
  %v25 = vld [vmem:[%s1 + $0x28] sm:$0xff]
  %v26 = vld [vmem:[%s1 + $0x30] sm:$0xff]
  %v27 = vld [vmem:[%s1 + $0x38] sm:$0xff]
  %v28 = vxor.u32 %v20, 2147483648
  %v29 = vxor.u32 %v21, 2147483648
  %v30 = vxor.u32 %v22, 2147483648
  %v31 = vxor.u32 %v23, 2147483648
  %v32 = vxor.u32 %v24, 2147483648
  %v33 = vxor.u32 %v25, 2147483648
  %v34 = vxor.u32 %v26, 2147483648
  %v35 = vxor.u32 %v27, 2147483648
  %v36 = vmul.f32 %v28, 1.442695
  %v37 = vpow.pop %v36
  %v38 = vmul.f32 %v29, 1.442695
  %v39 = vpow.pop %v38
  %v40 = vmul.f32 %v30, 1.442695
  %v41 = vpow.pop %v40
  %v42 = vmul.f32 %v31, 1.442695
  %v43 = vpow.pop %v42
  %v44 = vmul.f32 %v32, 1.442695
  %v45 = vpow.pop %v44
  %v46 = vmul.f32 %v33, 1.442695
  %v47 = vpow.pop %v46
  %v48 = vmul.f32 %v34, 1.442695
  %v49 = vpow.pop %v48
  %v50 = vmul.f32 %v35, 1.442695
  %v51 = vpow.pop %v50
  %v52 = vadd.f32 %v37, 1.0
  %v53 = vadd.f32 %v39, 1.0
  %v54 = vadd.f32 %v41, 1.0
  %v55 = vadd.f32 %v43, 1.0
  %v56 = vadd.f32 %v45, 1.0
  %v57 = vadd.f32 %v47, 1.0
  %v58 = vadd.f32 %v49, 1.0
  %v59 = vadd.f32 %v51, 1.0
  %v60 = vrcp.pop %v52
  %v61 = vmul.f32 1.0, %v60
  %v62 = vrcp.pop %v53
  %v63 = vmul.f32 1.0, %v62
  %v64 = vrcp.pop %v54
  %v65 = vmul.f32 1.0, %v64
  %v66 = vrcp.pop %v55
  %v67 = vmul.f32 1.0, %v66
  %v68 = vrcp.pop %v56
  %v69 = vmul.f32 1.0, %v68
  %v70 = vrcp.pop %v57
  %v71 = vmul.f32 1.0, %v70
  %v72 = vrcp.pop %v58
  %v73 = vmul.f32 1.0, %v72
  %v74 = vrcp.pop %v59
  %v75 = vmul.f32 1.0, %v74
  %v76 = vld [vmem:[%s0] sm:$0xf]
  %v77 = vld [vmem:[%s0 + $0x4] sm:$0xf]
  %v78 = vld [vmem:[%s0 + $0x8] sm:$0xf]
  %v79 = vld [vmem:[%s0 + $0xc] sm:$0xf]
  %v80 = vld [vmem:[%s0 + $0x10] sm:$0xf]
  %v81 = vld [vmem:[%s0 + $0x14] sm:$0xf]
  %v82 = vld [vmem:[%s0 + $0x18] sm:$0xf]
  %v83 = vld [vmem:[%s0 + $0x1c] sm:$0xf]
  %v84 = vunpack.c.l.bf16 %v76
  %v85 = vunpack.c.l.bf16 %v77
  %v86 = vunpack.c.l.bf16 %v78
  %v87 = vunpack.c.l.bf16 %v79
  %v88 = vunpack.c.l.bf16 %v80
  %v89 = vunpack.c.l.bf16 %v81
  %v90 = vunpack.c.l.bf16 %v82
  %v91 = vunpack.c.l.bf16 %v83
  %93 = vset.pattern.permute.xlu0 0
  %94 = vperm.xlu0 %93, %v61
  %v95 = vpop.permute.xlu0 %94
  %98 = vset.pattern.permute.xlu0 0
  %99 = vperm.xlu0 %98, %v63
  %v100 = vpop.permute.xlu0 %99
  %103 = vset.pattern.permute.xlu0 0
  %104 = vperm.xlu0 %103, %v65
  %v105 = vpop.permute.xlu0 %104
  %108 = vset.pattern.permute.xlu0 0
  %109 = vperm.xlu0 %108, %v67
  %v110 = vpop.permute.xlu0 %109
  %113 = vset.pattern.permute.xlu0 0
  %114 = vperm.xlu0 %113, %v69
  %v115 = vpop.permute.xlu0 %114
  %118 = vset.pattern.permute.xlu0 0
  %119 = vperm.xlu0 %118, %v71
  %v120 = vpop.permute.xlu0 %119
  %123 = vset.pattern.permute.xlu0 0
  %124 = vperm.xlu0 %123, %v73
  %v125 = vpop.permute.xlu0 %124
  %128 = vset.pattern.permute.xlu0 0
  %129 = vperm.xlu0 %128, %v75
  %v130 = vpop.permute.xlu0 %129
  %v132 = vmul.f32 %v84, %v95
  %v133 = vmul.f32 %v85, %v100
  %v134 = vmul.f32 %v86, %v105
  %v135 = vmul.f32 %v87, %v110
  %v136 = vmul.f32 %v88, %v115
  %v137 = vmul.f32 %v89, %v120
  %v138 = vmul.f32 %v90, %v125
  %v139 = vmul.f32 %v91, %v130
  %v140 = vld [vmem:[%s2] sm:$0xf]
  %v141 = vld [vmem:[%s2 + $0x4] sm:$0xf]
  %v142 = vld [vmem:[%s2 + $0x8] sm:$0xf]
  %v143 = vld [vmem:[%s2 + $0xc] sm:$0xf]
  %v144 = vld [vmem:[%s2 + $0x10] sm:$0xf]
  %v145 = vld [vmem:[%s2 + $0x14] sm:$0xf]
  %v146 = vld [vmem:[%s2 + $0x18] sm:$0xf]
  %v147 = vld [vmem:[%s2 + $0x1c] sm:$0xf]
  %v148 = vunpack.c.l.bf16 %v140
  %v149 = vunpack.c.l.bf16 %v141
  %v150 = vunpack.c.l.bf16 %v142
  %v151 = vunpack.c.l.bf16 %v143
  %v152 = vunpack.c.l.bf16 %v144
  %v153 = vunpack.c.l.bf16 %v145
  %v154 = vunpack.c.l.bf16 %v146
  %v155 = vunpack.c.l.bf16 %v147
  %v156 = vadd.f32 %v132, %v148
  %v157 = vadd.f32 %v133, %v149
  %v158 = vadd.f32 %v134, %v150
  %v159 = vadd.f32 %v135, %v151
  %v160 = vadd.f32 %v136, %v152
  %v161 = vadd.f32 %v137, %v153
  %v162 = vadd.f32 %v138, %v154
  %v163 = vadd.f32 %v139, %v155
  %v164 = vld [vmem:[%s3] sm:$0xff]
  %v165 = vld [vmem:[%s3 + $0x8] sm:$0xff]
  %v166 = vld [vmem:[%s3 + $0x10] sm:$0xff]
  %v167 = vld [vmem:[%s3 + $0x18] sm:$0xff]
  %v168 = vld [vmem:[%s3 + $0x20] sm:$0xff]
  %v169 = vld [vmem:[%s3 + $0x28] sm:$0xff]
  %v170 = vld [vmem:[%s3 + $0x30] sm:$0xff]
  %v171 = vld [vmem:[%s3 + $0x38] sm:$0xff]
  %173 = vset.pattern.permute.xlu0 0
  %174 = vperm.xlu0 %173, %v164
  %v175 = vpop.permute.xlu0 %174
  %178 = vset.pattern.permute.xlu0 0
  %179 = vperm.xlu0 %178, %v165
  %v180 = vpop.permute.xlu0 %179
  %183 = vset.pattern.permute.xlu0 0
  %184 = vperm.xlu0 %183, %v166
  %v185 = vpop.permute.xlu0 %184
  %188 = vset.pattern.permute.xlu0 0
  %189 = vperm.xlu0 %188, %v167
  %v190 = vpop.permute.xlu0 %189
  %193 = vset.pattern.permute.xlu0 0
  %194 = vperm.xlu0 %193, %v168
  %v195 = vpop.permute.xlu0 %194
  %198 = vset.pattern.permute.xlu0 0
  %199 = vperm.xlu0 %198, %v169
  %v200 = vpop.permute.xlu0 %199
  %203 = vset.pattern.permute.xlu0 0
  %204 = vperm.xlu0 %203, %v170
  %v205 = vpop.permute.xlu0 %204
  %208 = vset.pattern.permute.xlu0 0
  %209 = vperm.xlu0 %208, %v171
  %v210 = vpop.permute.xlu0 %209
  %v212 = vmul.f32 %v156, %v175
  %v213 = vmul.f32 %v157, %v180
  %v214 = vmul.f32 %v158, %v185
  %v215 = vmul.f32 %v159, %v190
  %v216 = vmul.f32 %v160, %v195
  %v217 = vmul.f32 %v161, %v200
  %v218 = vmul.f32 %v162, %v205
  %v219 = vmul.f32 %v163, %v210
  %v220 = vld [vmem:[%s4] sm:$0xff]
  %v221 = vld [vmem:[%s4 + $0x8] sm:$0xff]
  %v222 = vld [vmem:[%s4 + $0x10] sm:$0xff]
  %v223 = vld [vmem:[%s4 + $0x18] sm:$0xff]
  %v224 = vld [vmem:[%s4 + $0x20] sm:$0xff]
  %v225 = vld [vmem:[%s4 + $0x28] sm:$0xff]
  %v226 = vld [vmem:[%s4 + $0x30] sm:$0xff]
  %v227 = vld [vmem:[%s4 + $0x38] sm:$0xff]
  %229 = vset.pattern.permute.xlu0 0
  %230 = vperm.xlu0 %229, %v220
  %v231 = vpop.permute.xlu0 %230
  %234 = vset.pattern.permute.xlu0 0
  %235 = vperm.xlu0 %234, %v221
  %v236 = vpop.permute.xlu0 %235
  %239 = vset.pattern.permute.xlu0 0
  %240 = vperm.xlu0 %239, %v222
  %v241 = vpop.permute.xlu0 %240
  %244 = vset.pattern.permute.xlu0 0
  %245 = vperm.xlu0 %244, %v223
  %v246 = vpop.permute.xlu0 %245
  %249 = vset.pattern.permute.xlu0 0
  %250 = vperm.xlu0 %249, %v224
  %v251 = vpop.permute.xlu0 %250
  %254 = vset.pattern.permute.xlu0 0
  %255 = vperm.xlu0 %254, %v225
  %v256 = vpop.permute.xlu0 %255
  %259 = vset.pattern.permute.xlu0 0
  %260 = vperm.xlu0 %259, %v226
  %v261 = vpop.permute.xlu0 %260
  %264 = vset.pattern.permute.xlu0 0
  %265 = vperm.xlu0 %264, %v227
  %v266 = vpop.permute.xlu0 %265
  %v268 = vadd.f32 %v212, %v231
  %v269 = vadd.f32 %v213, %v236
  %v270 = vadd.f32 %v214, %v241
  %v271 = vadd.f32 %v215, %v246
  %v272 = vadd.f32 %v216, %v251
  %v273 = vadd.f32 %v217, %v256
  %v274 = vadd.f32 %v218, %v261
  %v275 = vadd.f32 %v219, %v266
  %v276 = vmax.f32 %v268, 0.0
  %v277 = vmax.f32 %v269, 0.0
  %v278 = vmax.f32 %v270, 0.0
  %v279 = vmax.f32 %v271, 0.0
  %v280 = vmax.f32 %v272, 0.0
  %v281 = vmax.f32 %v273, 0.0
  %v282 = vmax.f32 %v274, 0.0
  %v283 = vmax.f32 %v275, 0.0
  %v284 = vpack.c.bf16 %v277, %v276
  %v285 = vpack.c.bf16 %v279, %v278
  %v286 = vpack.c.bf16 %v281, %v280
  %v287 = vpack.c.bf16 %v283, %v282
  %v292 = vunpack.c.l.b16 %v284
  %v293 = vunpack.c.h.b16 %v284
  %v294 = vunpack.c.l.b16 %v285
  %v295 = vunpack.c.h.b16 %v285
  %v296 = vunpack.c.l.b16 %v286
  %v297 = vunpack.c.h.b16 %v286
  %v298 = vunpack.c.l.b16 %v287
  %v299 = vunpack.c.h.b16 %v287
  %v300 = vpack.c.b16 %v292, %v292
  %v301 = vpack.c.b16 %v293, %v293
  %v302 = vpack.c.b16 %v294, %v294
  %v303 = vpack.c.b16 %v295, %v295
  %v304 = vpack.c.b16 %v296, %v296
  %v305 = vpack.c.b16 %v297, %v297
  %v306 = vpack.c.b16 %v298, %v298
  %v307 = vpack.c.b16 %v299, %v299
  %vm316 = vcmask 199680
  %317 = vst.msk [vmem:[%s5] sm:$0xf] %vm316, %v300
  %318 = vst.msk [vmem:[%s5 + $0x4] sm:$0xf] %vm316, %v301
  %319 = vst.msk [vmem:[%s5 + $0x8] sm:$0xf] %vm316, %v302
  %320 = vst.msk [vmem:[%s5 + $0xc] sm:$0xf] %vm316, %v303
  %321 = vst.msk [vmem:[%s5 + $0x10] sm:$0xf] %vm316, %v304
  %322 = vst.msk [vmem:[%s5 + $0x14] sm:$0xf] %vm316, %v305
  %323 = vst.msk [vmem:[%s5 + $0x18] sm:$0xf] %vm316, %v306
  %324 = vst.msk [vmem:[%s5 + $0x1c] sm:$0xf] %vm316, %v307
  // Predicated region
  $region22: #{s3kai_resnet_forward.29} parent=0 // pred_check
    _
  $region23: #{s3kai_resnet_forward.29} parent=0 // pred_check_branch
    %326 = sbr.rel (0) target = $region25
  $region24: #{s3kai_resnet_forward.29} parent=0 // pred_region
    _
  $region25: #{s3kai_resnet_forward.29} parent=0 // pred_fallthru
    _
  // Predicated region
  $region26: #{s3kai_resnet_forward.29} parent=0 // pred_check
    _
  $region27: #{s3kai_resnet_forward.29} parent=0 // pred_check_branch
    %328 = sbr.rel (0) target = $region29
  $region28: #{s3kai_resnet_forward.29} parent=0 // pred_region
    _
  $region29: #{s3kai_resnet_forward.29} parent=0 // pred_fallthru
    _

</llo_original>
